<compile_context>
chip_gen: v6e
topology: v6e:2x2x1
jax: 0.10.0
libtpu: 0.0.40
codegen_flags: <defaults>
</compile_context>

<pallas_src>
import functools

import jax
import jax.numpy as jnp
from jax import lax
from jax.experimental import pallas as pl
from jax.experimental.pallas import tpu as pltpu

# ----------------------------- config -------------------------------------
INP_SIZE = 4
HID_SIZE = 32
HID_LAYERS = 2
FC_EXTRA = 16
N_CLASSES = 5
SEQ = 8
BATCH = 2
BPAD = 8                            # batch padded to a full sublane group

AQI, AQF = 8, 8                     # activation quant after fc_extra (qa=1)
AQI_FC_FINAL, AQF_FC_FINAL = 8, 8   # final output quant (qa_fc_final path)


def _quantize(x, qi, qf):
    """util.quantize_tensor with enable=1 (round, saturate, fixed point)."""
    power = 2.0 ** qf
    clip = 2.0 ** (qi + qf - 1)
    v = jnp.round(x * power)
    v = jnp.clip(v, -clip, clip - 1.0)
    return v / power


# ----------------------------- fused kernel --------------------------------
def fused_model_kernel(xp_ref,
                       wih0_ref, bih0_ref, whh0_ref, bhh0_ref,
                       wih1_ref, bih1_ref, whh1_ref, bhh1_ref,
                       w1_ref, b1_ref, w2_ref, b2_ref,
                       out_ref, q_ref, hn_ref,
                       gi_s, y_s,
                       *, seq, batch):
    """Both GRU layers + fc_extra + fc_final in a single invocation.

    xp_ref  : (T*8, I)   time-major, batch zero-padded to 8 (row = t*8 + b)
    wih*    : (in, 3H)   fused input weights, lane blocks [r | z | n]
    bih*    : (1, 3H)    input bias with b_hh folded in for r, z
    whh*    : (H, 3H)    fused recurrent weights [r | z | n]
    bhh*    : (1, 3H)    [0 | 0 | b_hn]  (n-gate recurrent bias, cannot fold)
    out_ref : (B, T, H)  top GRU layer outputs, already batch-major
    q_ref   : (B, T, C)  quantized classifier outputs, batch-major
    hn_ref  : (L, B, H)  final hidden state per layer
    gi_s    : (T*8, 3H)  VMEM scratch: precomputed fused gate inputs
    y_s     : (T*8 + 8, H) VMEM scratch: per-layer hidden outputs (+pad rows)
    """
    T, B, BP = seq, batch, BPAD
    H = whh0_ref.shape[0]
    H2 = 2 * H

    def run_gru_layer(layer_in, wih_ref, bih_ref, whh_ref, bhh_ref):
        # Hoisted fused input projection: one matmul over all padded rows
        # (off the serial dependency chain).
        gi_s[...] = jnp.dot(layer_in, wih_ref[...],
                            preferred_element_type=jnp.float32) + bih_ref[...]

        # Loop-invariant recurrent weights: load from VMEM once.
        w_hh = whh_ref[...]            # (H, 3H)
        b_hh = bhh_ref[...]            # (1, 3H) = [0 | 0 | b_hn]

        def step(t, h):
            row = pl.multiple_of(t * BP, BP)
            # ONE fused recurrent matmul per step (the serial-latency path).
            gh = jnp.dot(h, w_hh, preferred_element_type=jnp.float32) + b_hh
            gi = gi_s[pl.ds(row, BP), :]                    # aligned (8, 3H) vld
            # r and z in a single 64-lane sigmoid; tanh(n) after (needs r).
            rz = jax.nn.sigmoid(gi[:, :H2] + gh[:, :H2])
            r = rz[:, :H]
            z = rz[:, H:]
            n = jnp.tanh(gi[:, H2:] + r * gh[:, H2:])
            h_new = (1.0 - z) * n + z * h
            y_s[pl.ds(row, BP), :] = h_new                  # aligned (8, H) vst
            return h_new

        return lax.fori_loop(0, T, step, jnp.zeros((BP, H), jnp.float32),
                             unroll=True)

    # ---------------- GRU layer 0 ----------------
    h_last0 = run_gru_layer(xp_ref[...], wih0_ref, bih0_ref, whh0_ref, bhh0_ref)
    hn_ref[0] = h_last0[:B, :]

    # ---------------- GRU layer 1 (input = layer-0 outputs, resident in VMEM)
    h_last1 = run_gru_layer(y_s[0:T * BP, :], wih1_ref, bih1_ref,
                            whh1_ref, bhh1_ref)
    hn_ref[1] = h_last1[:B, :]

    # ---------------- FC head + batch-major output emit ---------------------
    # Off the serial chain; B is tiny so a static per-batch loop is cheapest.
    w1 = w1_ref[...]
    b1 = b1_ref[...]
    w2 = w2_ref[...]
    b2 = b2_ref[...]
    for b in range(B):
        # rows t*8 + b for t = 0..T-1  -> (T, H) slab, already time-contiguous
        y_b = y_s[pl.ds(b, T, stride=BP), :]
        out_ref[b] = y_b
        f1 = jnp.dot(y_b, w1, preferred_element_type=jnp.float32) + b1
        f1 = _quantize(jnp.maximum(f1, 0.0), AQI, AQF)      # ReLU + qa=1 (eval)
        fo = jnp.dot(f1, w2, preferred_element_type=jnp.float32) + b2
        # out_fc / out_fc_acc only feed the torch debug dict -> dropped here.
        q_ref[b] = _quantize(fo, AQI_FC_FINAL, AQF_FC_FINAL)


# ----------------------------- wrapper -------------------------------------
def model_forward(x, packed):
    """x: (T, B, INP_SIZE).  Returns ((out_final, out), h_n, reg)."""
    (wih0, bih0, whh0, bhh0,
     wih1, bih1, whh1, bhh1,
     w1t, b1, w2t, b2) = packed
    T, B, I = x.shape
    H = HID_SIZE
    C = N_CLASSES

    # Zero-pad the batch (sublane) dim to 8 so every per-step slice inside the
    # kernel is (8, *)-aligned; padded rows compute harmless garbage that is
    # never read back.
    x_pad = jnp.concatenate(
        [x, jnp.zeros((T, BPAD - B, I), x.dtype)], axis=1).reshape(T * BPAD, I)

    kernel = functools.partial(fused_model_kernel, seq=T, batch=B)
    out, out_final, h_n = pl.pallas_call(
        kernel,
        out_shape=(
            jax.ShapeDtypeStruct((B, T, H), jnp.float32),            # GRU output (batch-major)
            jax.ShapeDtypeStruct((B, T, C), jnp.float32),            # quantized FC out
            jax.ShapeDtypeStruct((HID_LAYERS, B, H), jnp.float32),   # h_n
        ),
        scratch_shapes=[
            pltpu.VMEM((T * BPAD, 3 * H), jnp.float32),        # fused gate inputs
            pltpu.VMEM((T * BPAD + BPAD, H), jnp.float32),     # layer outputs (+pad rows)
        ],
    )(x_pad, wih0, bih0, whh0, bhh0, wih1, bih1, whh1, bhh1, w1t, b1, w2t, b2)

    return (out_final, out), h_n, None


# ----------------------------- params --------------------------------------
def init_params(key):
    """Raw PyTorch-layout parameters (as nn.GRU / nn.Linear hold them)."""
    params = {"gru": []}
    k = 1.0 / jnp.sqrt(HID_SIZE)
    keys = jax.random.split(key, 4 * HID_LAYERS + 4)
    ki = 0
    for l in range(HID_LAYERS):
        in_sz = INP_SIZE if l == 0 else HID_SIZE
        w_ih = jax.random.uniform(keys[ki], (3 * HID_SIZE, in_sz), jnp.float32, -k, k); ki += 1
        w_hh = jax.random.uniform(keys[ki], (3 * HID_SIZE, HID_SIZE), jnp.float32, -k, k); ki += 1
        b_ih = jax.random.uniform(keys[ki], (3 * HID_SIZE,), jnp.float32, -k, k); ki += 1
        b_hh = jax.random.uniform(keys[ki], (3 * HID_SIZE,), jnp.float32, -k, k); ki += 1
        params["gru"].append({"w_ih": w_ih, "w_hh": w_hh, "b_ih": b_ih, "b_hh": b_hh})
    k1 = 1.0 / jnp.sqrt(HID_SIZE)
    params["fc1_w"] = jax.random.uniform(keys[ki], (FC_EXTRA, HID_SIZE), jnp.float32, -k1, k1); ki += 1
    params["fc1_b"] = jax.random.uniform(keys[ki], (FC_EXTRA,), jnp.float32, -k1, k1); ki += 1
    k2 = 1.0 / jnp.sqrt(FC_EXTRA)
    params["fc2_w"] = jax.random.uniform(keys[ki], (N_CLASSES, FC_EXTRA), jnp.float32, -k2, k2); ki += 1
    params["fc2_b"] = jax.random.uniform(keys[ki], (N_CLASSES,), jnp.float32, -k2, k2); ki += 1
    return params


def prepare_params(params):
    """Pack PyTorch-layout weights into the kernel's fused-gate layout (one-time)."""
    H = HID_SIZE
    packed = []
    for l in range(HID_LAYERS):
        p = params["gru"][l]
        w_ih, w_hh, b_ih, b_hh = p["w_ih"], p["w_hh"], p["b_ih"], p["b_hh"]
        wih_cat = w_ih.T                                           # (in, 3H) [r|z|n]
        whh_cat = w_hh.T                                           # (H, 3H)  [r|z|n]
        # fold b_hh into the input bias for the r and z gates only
        bih_cat = (b_ih + jnp.concatenate(
            [b_hh[:2 * H], jnp.zeros((H,), b_hh.dtype)])).reshape(1, 3 * H)
        # recurrent bias: zeros for r/z, b_hn for n (must stay inside r*(...))
        bhh_cat = jnp.concatenate(
            [jnp.zeros((2 * H,), b_hh.dtype), b_hh[2 * H:]]).reshape(1, 3 * H)
        packed.extend([wih_cat, bih_cat, whh_cat, bhh_cat])
    packed.extend([params["fc1_w"].T, params["fc1_b"].reshape(1, -1),
                   params["fc2_w"].T, params["fc2_b"].reshape(1, -1)])
    return tuple(packed)


# ----------------------------- reference (pure JAX) -------------------------
def reference_forward(x, params):
    T, B, _ = x.shape
    layer_in = x
    h_finals = []
    for l in range(HID_LAYERS):
        p = params["gru"][l]
        h = jnp.zeros((B, HID_SIZE), jnp.float32)
        ys = []
        for t in range(T):
            gi = layer_in[t] @ p["w_ih"].T + p["b_ih"]
            gh = h @ p["w_hh"].T + p["b_hh"]
            i_r, i_z, i_n = jnp.split(gi, 3, axis=-1)
            h_r, h_z, h_nn = jnp.split(gh, 3, axis=-1)
            r = jax.nn.sigmoid(i_r + h_r)
            z = jax.nn.sigmoid(i_z + h_z)
            n = jnp.tanh(i_n + r * h_nn)
            h = (1.0 - z) * n + z * h
            ys.append(h)
        layer_in = jnp.stack(ys, axis=0)
        h_finals.append(h)
    out = jnp.transpose(layer_in, (1, 0, 2))
    h1 = jnp.maximum(out @ params["fc1_w"].T + params["fc1_b"], 0.0)
    h1 = _quantize(h1, AQI, AQF)
    out_fc = h1 @ params["fc2_w"].T + params["fc2_b"]
    out_final = _quantize(out_fc, AQI_FC_FINAL, AQF_FC_FINAL)
    return out_final, out, jnp.stack(h_finals, axis=0)


# ----------------------------- main ----------------------------------------
if __name__ == "__main__":
    key = jax.random.PRNGKey(0)
    kx, kp = jax.random.split(key)
    x = jax.random.normal(kx, (SEQ, BATCH, INP_SIZE), jnp.float32)  # (T, B, I)
    raw_params = init_params(kp)
    packed = prepare_params(raw_params)

    fwd = jax.jit(model_forward)
    (out_final, out), h_n, reg = jax.block_until_ready(fwd(x, packed))

    ref_final, ref_out, ref_hn = reference_forward(x, raw_params)
    assert out.shape == (BATCH, SEQ, HID_SIZE)
    assert out_final.shape == (BATCH, SEQ, N_CLASSES)
    assert h_n.shape == (HID_LAYERS, BATCH, HID_SIZE)
    assert jnp.allclose(out, ref_out, atol=1e-4, rtol=1e-4)
    assert jnp.allclose(h_n, ref_hn, atol=1e-4, rtol=1e-4)
    assert jnp.allclose(out_final, ref_final, atol=5e-3, rtol=1e-3)

    print("KERNEL_OK")
</pallas_src>

<mosaic_0001>
module attributes {stable_mosaic.version = 11 : i64} {
  func.func @fused_model_kernel(%arg0: memref<64x4xf32, #tpu.memory_space<vmem>>, %arg1: memref<4x96xf32, #tpu.memory_space<vmem>>, %arg2: memref<1x96xf32, #tpu.memory_space<vmem>>, %arg3: memref<32x96xf32, #tpu.memory_space<vmem>>, %arg4: memref<1x96xf32, #tpu.memory_space<vmem>>, %arg5: memref<32x96xf32, #tpu.memory_space<vmem>>, %arg6: memref<1x96xf32, #tpu.memory_space<vmem>>, %arg7: memref<32x96xf32, #tpu.memory_space<vmem>>, %arg8: memref<1x96xf32, #tpu.memory_space<vmem>>, %arg9: memref<32x16xf32, #tpu.memory_space<vmem>>, %arg10: memref<1x16xf32, #tpu.memory_space<vmem>>, %arg11: memref<16x5xf32, #tpu.memory_space<vmem>>, %arg12: memref<1x5xf32, #tpu.memory_space<vmem>>, %arg13: memref<2x8x32xf32, #tpu.memory_space<vmem>>, %arg14: memref<2x8x5xf32, #tpu.memory_space<vmem>>, %arg15: memref<2x2x32xf32, #tpu.memory_space<vmem>>, %arg16: memref<64x96xf32, #tpu.memory_space<vmem>>, %arg17: memref<72x32xf32, #tpu.memory_space<vmem>>) attributes {dimension_semantics = [], scalar_prefetch = 0 : i64, scratch_operands = 2 : i64, tpu.core_type = #tpu.core_type<tc>} {
    %c0 = arith.constant 0 : index
    %c0_0 = arith.constant 0 : index
    %0 = vector.load %arg0[%c0, %c0_0] : memref<64x4xf32, #tpu.memory_space<vmem>>, vector<64x4xf32>
    %c0_1 = arith.constant 0 : index
    %c0_2 = arith.constant 0 : index
    %1 = vector.load %arg1[%c0_1, %c0_2] : memref<4x96xf32, #tpu.memory_space<vmem>>, vector<4x96xf32>
    %cst = arith.constant dense<0.000000e+00> : vector<64x96xf32>
    %2 = tpu.matmul %0, %1, %cst {dimension_numbers = #tpu.dot_dimension_numbers<[1], [0], [0], [1], [0, 0, 1, 1], [], []>} : vector<64x4xf32>, vector<4x96xf32>, vector<64x96xf32> -> vector<64x96xf32>
    %c0_3 = arith.constant 0 : index
    %c0_4 = arith.constant 0 : index
    %3 = vector.load %arg2[%c0_3, %c0_4] : memref<1x96xf32, #tpu.memory_space<vmem>>, vector<1x96xf32>
    %4 = vector.broadcast %3 : vector<1x96xf32> to vector<64x96xf32>
    %5 = arith.addf %2, %4 : vector<64x96xf32>
    %c0_5 = arith.constant 0 : index
    %c0_6 = arith.constant 0 : index
    %6 = vector.load %arg16[%c0_5, %c0_6] : memref<64x96xf32, #tpu.memory_space<vmem>>, vector<64x96xf32>
    tpu.vector_store %arg16[%c0_5, %c0_6], %5 {strides = array<i32>} : memref<64x96xf32, #tpu.memory_space<vmem>>, vector<64x96xf32>,
    %c0_7 = arith.constant 0 : index
    %c0_8 = arith.constant 0 : index
    %7 = vector.load %arg3[%c0_7, %c0_8] : memref<32x96xf32, #tpu.memory_space<vmem>>, vector<32x96xf32>
    %c0_9 = arith.constant 0 : index
    %c0_10 = arith.constant 0 : index
    %8 = vector.load %arg4[%c0_9, %c0_10] : memref<1x96xf32, #tpu.memory_space<vmem>>, vector<1x96xf32>
    %cst_11 = arith.constant 0.000000e+00 : f32
    %9 = vector.broadcast %cst_11 : f32 to vector<8x32xf32>
    %c0_i32 = arith.constant 0 : i32
    %c8_i32 = arith.constant 8 : i32
    %10 = arith.muli %c0_i32, %c8_i32 : i32
    %11 = tpu.assume_multiple %10, 8 : i32
    %cst_12 = arith.constant dense<0.000000e+00> : vector<8x96xf32>
    %12 = tpu.matmul %9, %7, %cst_12 {dimension_numbers = #tpu.dot_dimension_numbers<[1], [0], [0], [1], [0, 0, 1, 1], [], []>} : vector<8x32xf32>, vector<32x96xf32>, vector<8x96xf32> -> vector<8x96xf32>
    %13 = vector.broadcast %8 : vector<1x96xf32> to vector<8x96xf32>
    %14 = arith.addf %12, %13 : vector<8x96xf32>
    %15 = arith.index_cast %11 : i32 to index
    %c0_13 = arith.constant 0 : index
    %16 = vector.load %arg16[%15, %c0_13] : memref<64x96xf32, #tpu.memory_space<vmem>>, vector<8x96xf32>
    %17 = vector.extract_strided_slice %16 {offsets = [0, 0], sizes = [8, 64], strides = [1, 1]} : vector<8x96xf32> to vector<8x64xf32>
    %18 = vector.extract_strided_slice %14 {offsets = [0, 0], sizes = [8, 64], strides = [1, 1]} : vector<8x96xf32> to vector<8x64xf32>
    %19 = arith.addf %17, %18 : vector<8x64xf32>
    %20 = arith.negf %19 : vector<8x64xf32>
    %21 = math.exp %20 : vector<8x64xf32>
    %cst_14 = arith.constant 1.000000e+00 : f32
    %22 = vector.broadcast %cst_14 : f32 to vector<8x64xf32>
    %23 = arith.addf %22, %21 : vector<8x64xf32>
    %24 = arith.divf %22, %23 : vector<8x64xf32>
    %25 = vector.extract_strided_slice %24 {offsets = [0, 0], sizes = [8, 32], strides = [1, 1]} : vector<8x64xf32> to vector<8x32xf32>
    %26 = vector.extract_strided_slice %24 {offsets = [0, 32], sizes = [8, 32], strides = [1, 1]} : vector<8x64xf32> to vector<8x32xf32>
    %27 = vector.extract_strided_slice %16 {offsets = [0, 64], sizes = [8, 32], strides = [1, 1]} : vector<8x96xf32> to vector<8x32xf32>
    %28 = vector.extract_strided_slice %14 {offsets = [0, 64], sizes = [8, 32], strides = [1, 1]} : vector<8x96xf32> to vector<8x32xf32>
    %29 = arith.mulf %25, %28 : vector<8x32xf32>
    %30 = arith.addf %27, %29 : vector<8x32xf32>
    %31 = math.tanh %30 : vector<8x32xf32>
    %cst_15 = arith.constant 1.000000e+00 : f32
    %32 = vector.broadcast %cst_15 : f32 to vector<8x32xf32>
    %33 = arith.subf %32, %26 : vector<8x32xf32>
    %34 = arith.mulf %33, %31 : vector<8x32xf32>
    %35 = arith.mulf %26, %9 : vector<8x32xf32>
    %36 = arith.addf %34, %35 : vector<8x32xf32>
    %37 = arith.index_cast %11 : i32 to index
    %c0_16 = arith.constant 0 : index
    %38 = vector.load %arg17[%37, %c0_16] : memref<72x32xf32, #tpu.memory_space<vmem>>, vector<8x32xf32>
    tpu.vector_store %arg17[%37, %c0_16], %36 {strides = array<i32>} : memref<72x32xf32, #tpu.memory_space<vmem>>, vector<8x32xf32>,
    %c1_i32 = arith.constant 1 : i32
    %c8_i32_17 = arith.constant 8 : i32
    %39 = arith.muli %c1_i32, %c8_i32_17 : i32
    %40 = tpu.assume_multiple %39, 8 : i32
    %cst_18 = arith.constant dense<0.000000e+00> : vector<8x96xf32>
    %41 = tpu.matmul %36, %7, %cst_18 {dimension_numbers = #tpu.dot_dimension_numbers<[1], [0], [0], [1], [0, 0, 1, 1], [], []>} : vector<8x32xf32>, vector<32x96xf32>, vector<8x96xf32> -> vector<8x96xf32>
    %42 = vector.broadcast %8 : vector<1x96xf32> to vector<8x96xf32>
    %43 = arith.addf %41, %42 : vector<8x96xf32>
    %44 = arith.index_cast %40 : i32 to index
    %c0_19 = arith.constant 0 : index
    %45 = vector.load %arg16[%44, %c0_19] : memref<64x96xf32, #tpu.memory_space<vmem>>, vector<8x96xf32>
    %46 = vector.extract_strided_slice %45 {offsets = [0, 0], sizes = [8, 64], strides = [1, 1]} : vector<8x96xf32> to vector<8x64xf32>
    %47 = vector.extract_strided_slice %43 {offsets = [0, 0], sizes = [8, 64], strides = [1, 1]} : vector<8x96xf32> to vector<8x64xf32>
    %48 = arith.addf %46, %47 : vector<8x64xf32>
    %49 = arith.negf %48 : vector<8x64xf32>
    %50 = math.exp %49 : vector<8x64xf32>
    %cst_20 = arith.constant 1.000000e+00 : f32
    %51 = vector.broadcast %cst_20 : f32 to vector<8x64xf32>
    %52 = arith.addf %51, %50 : vector<8x64xf32>
    %53 = arith.divf %51, %52 : vector<8x64xf32>
    %54 = vector.extract_strided_slice %53 {offsets = [0, 0], sizes = [8, 32], strides = [1, 1]} : vector<8x64xf32> to vector<8x32xf32>
    %55 = vector.extract_strided_slice %53 {offsets = [0, 32], sizes = [8, 32], strides = [1, 1]} : vector<8x64xf32> to vector<8x32xf32>
    %56 = vector.extract_strided_slice %45 {offsets = [0, 64], sizes = [8, 32], strides = [1, 1]} : vector<8x96xf32> to vector<8x32xf32>
    %57 = vector.extract_strided_slice %43 {offsets = [0, 64], sizes = [8, 32], strides = [1, 1]} : vector<8x96xf32> to vector<8x32xf32>
    %58 = arith.mulf %54, %57 : vector<8x32xf32>
    %59 = arith.addf %56, %58 : vector<8x32xf32>
    %60 = math.tanh %59 : vector<8x32xf32>
    %cst_21 = arith.constant 1.000000e+00 : f32
    %61 = vector.broadcast %cst_21 : f32 to vector<8x32xf32>
    %62 = arith.subf %61, %55 : vector<8x32xf32>
    %63 = arith.mulf %62, %60 : vector<8x32xf32>
    %64 = arith.mulf %55, %36 : vector<8x32xf32>
    %65 = arith.addf %63, %64 : vector<8x32xf32>
    %66 = arith.index_cast %40 : i32 to index
    %c0_22 = arith.constant 0 : index
    %67 = vector.load %arg17[%66, %c0_22] : memref<72x32xf32, #tpu.memory_space<vmem>>, vector<8x32xf32>
    tpu.vector_store %arg17[%66, %c0_22], %65 {strides = array<i32>} : memref<72x32xf32, #tpu.memory_space<vmem>>, vector<8x32xf32>,
    %c2_i32 = arith.constant 2 : i32
    %c8_i32_23 = arith.constant 8 : i32
    %68 = arith.muli %c2_i32, %c8_i32_23 : i32
    %69 = tpu.assume_multiple %68, 8 : i32
    %cst_24 = arith.constant dense<0.000000e+00> : vector<8x96xf32>
    %70 = tpu.matmul %65, %7, %cst_24 {dimension_numbers = #tpu.dot_dimension_numbers<[1], [0], [0], [1], [0, 0, 1, 1], [], []>} : vector<8x32xf32>, vector<32x96xf32>, vector<8x96xf32> -> vector<8x96xf32>
    %71 = vector.broadcast %8 : vector<1x96xf32> to vector<8x96xf32>
    %72 = arith.addf %70, %71 : vector<8x96xf32>
    %73 = arith.index_cast %69 : i32 to index
    %c0_25 = arith.constant 0 : index
    %74 = vector.load %arg16[%73, %c0_25] : memref<64x96xf32, #tpu.memory_space<vmem>>, vector<8x96xf32>
    %75 = vector.extract_strided_slice %74 {offsets = [0, 0], sizes = [8, 64], strides = [1, 1]} : vector<8x96xf32> to vector<8x64xf32>
    %76 = vector.extract_strided_slice %72 {offsets = [0, 0], sizes = [8, 64], strides = [1, 1]} : vector<8x96xf32> to vector<8x64xf32>
    %77 = arith.addf %75, %76 : vector<8x64xf32>
    %78 = arith.negf %77 : vector<8x64xf32>
    %79 = math.exp %78 : vector<8x64xf32>
    %cst_26 = arith.constant 1.000000e+00 : f32
    %80 = vector.broadcast %cst_26 : f32 to vector<8x64xf32>
    %81 = arith.addf %80, %79 : vector<8x64xf32>
    %82 = arith.divf %80, %81 : vector<8x64xf32>
    %83 = vector.extract_strided_slice %82 {offsets = [0, 0], sizes = [8, 32], strides = [1, 1]} : vector<8x64xf32> to vector<8x32xf32>
    %84 = vector.extract_strided_slice %82 {offsets = [0, 32], sizes = [8, 32], strides = [1, 1]} : vector<8x64xf32> to vector<8x32xf32>
    %85 = vector.extract_strided_slice %74 {offsets = [0, 64], sizes = [8, 32], strides = [1, 1]} : vector<8x96xf32> to vector<8x32xf32>
    %86 = vector.extract_strided_slice %72 {offsets = [0, 64], sizes = [8, 32], strides = [1, 1]} : vector<8x96xf32> to vector<8x32xf32>
    %87 = arith.mulf %83, %86 : vector<8x32xf32>
    %88 = arith.addf %85, %87 : vector<8x32xf32>
    %89 = math.tanh %88 : vector<8x32xf32>
    %cst_27 = arith.constant 1.000000e+00 : f32
    %90 = vector.broadcast %cst_27 : f32 to vector<8x32xf32>
    %91 = arith.subf %90, %84 : vector<8x32xf32>
    %92 = arith.mulf %91, %89 : vector<8x32xf32>
    %93 = arith.mulf %84, %65 : vector<8x32xf32>
    %94 = arith.addf %92, %93 : vector<8x32xf32>
    %95 = arith.index_cast %69 : i32 to index
    %c0_28 = arith.constant 0 : index
    %96 = vector.load %arg17[%95, %c0_28] : memref<72x32xf32, #tpu.memory_space<vmem>>, vector<8x32xf32>
    tpu.vector_store %arg17[%95, %c0_28], %94 {strides = array<i32>} : memref<72x32xf32, #tpu.memory_space<vmem>>, vector<8x32xf32>,
    %c3_i32 = arith.constant 3 : i32
    %c8_i32_29 = arith.constant 8 : i32
    %97 = arith.muli %c3_i32, %c8_i32_29 : i32
    %98 = tpu.assume_multiple %97, 8 : i32
    %cst_30 = arith.constant dense<0.000000e+00> : vector<8x96xf32>
    %99 = tpu.matmul %94, %7, %cst_30 {dimension_numbers = #tpu.dot_dimension_numbers<[1], [0], [0], [1], [0, 0, 1, 1], [], []>} : vector<8x32xf32>, vector<32x96xf32>, vector<8x96xf32> -> vector<8x96xf32>
    %100 = vector.broadcast %8 : vector<1x96xf32> to vector<8x96xf32>
    %101 = arith.addf %99, %100 : vector<8x96xf32>
    %102 = arith.index_cast %98 : i32 to index
    %c0_31 = arith.constant 0 : index
    %103 = vector.load %arg16[%102, %c0_31] : memref<64x96xf32, #tpu.memory_space<vmem>>, vector<8x96xf32>
    %104 = vector.extract_strided_slice %103 {offsets = [0, 0], sizes = [8, 64], strides = [1, 1]} : vector<8x96xf32> to vector<8x64xf32>
    %105 = vector.extract_strided_slice %101 {offsets = [0, 0], sizes = [8, 64], strides = [1, 1]} : vector<8x96xf32> to vector<8x64xf32>
    %106 = arith.addf %104, %105 : vector<8x64xf32>
    %107 = arith.negf %106 : vector<8x64xf32>
    %108 = math.exp %107 : vector<8x64xf32>
    %cst_32 = arith.constant 1.000000e+00 : f32
    %109 = vector.broadcast %cst_32 : f32 to vector<8x64xf32>
    %110 = arith.addf %109, %108 : vector<8x64xf32>
    %111 = arith.divf %109, %110 : vector<8x64xf32>
    %112 = vector.extract_strided_slice %111 {offsets = [0, 0], sizes = [8, 32], strides = [1, 1]} : vector<8x64xf32> to vector<8x32xf32>
    %113 = vector.extract_strided_slice %111 {offsets = [0, 32], sizes = [8, 32], strides = [1, 1]} : vector<8x64xf32> to vector<8x32xf32>
    %114 = vector.extract_strided_slice %103 {offsets = [0, 64], sizes = [8, 32], strides = [1, 1]} : vector<8x96xf32> to vector<8x32xf32>
    %115 = vector.extract_strided_slice %101 {offsets = [0, 64], sizes = [8, 32], strides = [1, 1]} : vector<8x96xf32> to vector<8x32xf32>
    %116 = arith.mulf %112, %115 : vector<8x32xf32>
    %117 = arith.addf %114, %116 : vector<8x32xf32>
    %118 = math.tanh %117 : vector<8x32xf32>
    %cst_33 = arith.constant 1.000000e+00 : f32
    %119 = vector.broadcast %cst_33 : f32 to vector<8x32xf32>
    %120 = arith.subf %119, %113 : vector<8x32xf32>
    %121 = arith.mulf %120, %118 : vector<8x32xf32>
    %122 = arith.mulf %113, %94 : vector<8x32xf32>
    %123 = arith.addf %121, %122 : vector<8x32xf32>
    %124 = arith.index_cast %98 : i32 to index
    %c0_34 = arith.constant 0 : index
    %125 = vector.load %arg17[%124, %c0_34] : memref<72x32xf32, #tpu.memory_space<vmem>>, vector<8x32xf32>
    tpu.vector_store %arg17[%124, %c0_34], %123 {strides = array<i32>} : memref<72x32xf32, #tpu.memory_space<vmem>>, vector<8x32xf32>,
    %c4_i32 = arith.constant 4 : i32
    %c8_i32_35 = arith.constant 8 : i32
    %126 = arith.muli %c4_i32, %c8_i32_35 : i32
    %127 = tpu.assume_multiple %126, 8 : i32
    %cst_36 = arith.constant dense<0.000000e+00> : vector<8x96xf32>
    %128 = tpu.matmul %123, %7, %cst_36 {dimension_numbers = #tpu.dot_dimension_numbers<[1], [0], [0], [1], [0, 0, 1, 1], [], []>} : vector<8x32xf32>, vector<32x96xf32>, vector<8x96xf32> -> vector<8x96xf32>
    %129 = vector.broadcast %8 : vector<1x96xf32> to vector<8x96xf32>
    %130 = arith.addf %128, %129 : vector<8x96xf32>
    %131 = arith.index_cast %127 : i32 to index
    %c0_37 = arith.constant 0 : index
    %132 = vector.load %arg16[%131, %c0_37] : memref<64x96xf32, #tpu.memory_space<vmem>>, vector<8x96xf32>
    %133 = vector.extract_strided_slice %132 {offsets = [0, 0], sizes = [8, 64], strides = [1, 1]} : vector<8x96xf32> to vector<8x64xf32>
    %134 = vector.extract_strided_slice %130 {offsets = [0, 0], sizes = [8, 64], strides = [1, 1]} : vector<8x96xf32> to vector<8x64xf32>
    %135 = arith.addf %133, %134 : vector<8x64xf32>
    %136 = arith.negf %135 : vector<8x64xf32>
    %137 = math.exp %136 : vector<8x64xf32>
    %cst_38 = arith.constant 1.000000e+00 : f32
    %138 = vector.broadcast %cst_38 : f32 to vector<8x64xf32>
    %139 = arith.addf %138, %137 : vector<8x64xf32>
    %140 = arith.divf %138, %139 : vector<8x64xf32>
    %141 = vector.extract_strided_slice %140 {offsets = [0, 0], sizes = [8, 32], strides = [1, 1]} : vector<8x64xf32> to vector<8x32xf32>
    %142 = vector.extract_strided_slice %140 {offsets = [0, 32], sizes = [8, 32], strides = [1, 1]} : vector<8x64xf32> to vector<8x32xf32>
    %143 = vector.extract_strided_slice %132 {offsets = [0, 64], sizes = [8, 32], strides = [1, 1]} : vector<8x96xf32> to vector<8x32xf32>
    %144 = vector.extract_strided_slice %130 {offsets = [0, 64], sizes = [8, 32], strides = [1, 1]} : vector<8x96xf32> to vector<8x32xf32>
    %145 = arith.mulf %141, %144 : vector<8x32xf32>
    %146 = arith.addf %143, %145 : vector<8x32xf32>
    %147 = math.tanh %146 : vector<8x32xf32>
    %cst_39 = arith.constant 1.000000e+00 : f32
    %148 = vector.broadcast %cst_39 : f32 to vector<8x32xf32>
    %149 = arith.subf %148, %142 : vector<8x32xf32>
    %150 = arith.mulf %149, %147 : vector<8x32xf32>
    %151 = arith.mulf %142, %123 : vector<8x32xf32>
    %152 = arith.addf %150, %151 : vector<8x32xf32>
    %153 = arith.index_cast %127 : i32 to index
    %c0_40 = arith.constant 0 : index
    %154 = vector.load %arg17[%153, %c0_40] : memref<72x32xf32, #tpu.memory_space<vmem>>, vector<8x32xf32>
    tpu.vector_store %arg17[%153, %c0_40], %152 {strides = array<i32>} : memref<72x32xf32, #tpu.memory_space<vmem>>, vector<8x32xf32>,
    %c5_i32 = arith.constant 5 : i32
    %c8_i32_41 = arith.constant 8 : i32
    %155 = arith.muli %c5_i32, %c8_i32_41 : i32
    %156 = tpu.assume_multiple %155, 8 : i32
    %cst_42 = arith.constant dense<0.000000e+00> : vector<8x96xf32>
    %157 = tpu.matmul %152, %7, %cst_42 {dimension_numbers = #tpu.dot_dimension_numbers<[1], [0], [0], [1], [0, 0, 1, 1], [], []>} : vector<8x32xf32>, vector<32x96xf32>, vector<8x96xf32> -> vector<8x96xf32>
    %158 = vector.broadcast %8 : vector<1x96xf32> to vector<8x96xf32>
    %159 = arith.addf %157, %158 : vector<8x96xf32>
    %160 = arith.index_cast %156 : i32 to index
    %c0_43 = arith.constant 0 : index
    %161 = vector.load %arg16[%160, %c0_43] : memref<64x96xf32, #tpu.memory_space<vmem>>, vector<8x96xf32>
    %162 = vector.extract_strided_slice %161 {offsets = [0, 0], sizes = [8, 64], strides = [1, 1]} : vector<8x96xf32> to vector<8x64xf32>
    %163 = vector.extract_strided_slice %159 {offsets = [0, 0], sizes = [8, 64], strides = [1, 1]} : vector<8x96xf32> to vector<8x64xf32>
    %164 = arith.addf %162, %163 : vector<8x64xf32>
    %165 = arith.negf %164 : vector<8x64xf32>
    %166 = math.exp %165 : vector<8x64xf32>
    %cst_44 = arith.constant 1.000000e+00 : f32
    %167 = vector.broadcast %cst_44 : f32 to vector<8x64xf32>
    %168 = arith.addf %167, %166 : vector<8x64xf32>
    %169 = arith.divf %167, %168 : vector<8x64xf32>
    %170 = vector.extract_strided_slice %169 {offsets = [0, 0], sizes = [8, 32], strides = [1, 1]} : vector<8x64xf32> to vector<8x32xf32>
    %171 = vector.extract_strided_slice %169 {offsets = [0, 32], sizes = [8, 32], strides = [1, 1]} : vector<8x64xf32> to vector<8x32xf32>
    %172 = vector.extract_strided_slice %161 {offsets = [0, 64], sizes = [8, 32], strides = [1, 1]} : vector<8x96xf32> to vector<8x32xf32>
    %173 = vector.extract_strided_slice %159 {offsets = [0, 64], sizes = [8, 32], strides = [1, 1]} : vector<8x96xf32> to vector<8x32xf32>
    %174 = arith.mulf %170, %173 : vector<8x32xf32>
    %175 = arith.addf %172, %174 : vector<8x32xf32>
    %176 = math.tanh %175 : vector<8x32xf32>
    %cst_45 = arith.constant 1.000000e+00 : f32
    %177 = vector.broadcast %cst_45 : f32 to vector<8x32xf32>
    %178 = arith.subf %177, %171 : vector<8x32xf32>
    %179 = arith.mulf %178, %176 : vector<8x32xf32>
    %180 = arith.mulf %171, %152 : vector<8x32xf32>
    %181 = arith.addf %179, %180 : vector<8x32xf32>
    %182 = arith.index_cast %156 : i32 to index
    %c0_46 = arith.constant 0 : index
    %183 = vector.load %arg17[%182, %c0_46] : memref<72x32xf32, #tpu.memory_space<vmem>>, vector<8x32xf32>
    tpu.vector_store %arg17[%182, %c0_46], %181 {strides = array<i32>} : memref<72x32xf32, #tpu.memory_space<vmem>>, vector<8x32xf32>,
    %c6_i32 = arith.constant 6 : i32
    %c8_i32_47 = arith.constant 8 : i32
    %184 = arith.muli %c6_i32, %c8_i32_47 : i32
    %185 = tpu.assume_multiple %184, 8 : i32
    %cst_48 = arith.constant dense<0.000000e+00> : vector<8x96xf32>
    %186 = tpu.matmul %181, %7, %cst_48 {dimension_numbers = #tpu.dot_dimension_numbers<[1], [0], [0], [1], [0, 0, 1, 1], [], []>} : vector<8x32xf32>, vector<32x96xf32>, vector<8x96xf32> -> vector<8x96xf32>
    %187 = vector.broadcast %8 : vector<1x96xf32> to vector<8x96xf32>
    %188 = arith.addf %186, %187 : vector<8x96xf32>
    %189 = arith.index_cast %185 : i32 to index
    %c0_49 = arith.constant 0 : index
    %190 = vector.load %arg16[%189, %c0_49] : memref<64x96xf32, #tpu.memory_space<vmem>>, vector<8x96xf32>
    %191 = vector.extract_strided_slice %190 {offsets = [0, 0], sizes = [8, 64], strides = [1, 1]} : vector<8x96xf32> to vector<8x64xf32>
    %192 = vector.extract_strided_slice %188 {offsets = [0, 0], sizes = [8, 64], strides = [1, 1]} : vector<8x96xf32> to vector<8x64xf32>
    %193 = arith.addf %191, %192 : vector<8x64xf32>
    %194 = arith.negf %193 : vector<8x64xf32>
    %195 = math.exp %194 : vector<8x64xf32>
    %cst_50 = arith.constant 1.000000e+00 : f32
    %196 = vector.broadcast %cst_50 : f32 to vector<8x64xf32>
    %197 = arith.addf %196, %195 : vector<8x64xf32>
    %198 = arith.divf %196, %197 : vector<8x64xf32>
    %199 = vector.extract_strided_slice %198 {offsets = [0, 0], sizes = [8, 32], strides = [1, 1]} : vector<8x64xf32> to vector<8x32xf32>
    %200 = vector.extract_strided_slice %198 {offsets = [0, 32], sizes = [8, 32], strides = [1, 1]} : vector<8x64xf32> to vector<8x32xf32>
    %201 = vector.extract_strided_slice %190 {offsets = [0, 64], sizes = [8, 32], strides = [1, 1]} : vector<8x96xf32> to vector<8x32xf32>
    %202 = vector.extract_strided_slice %188 {offsets = [0, 64], sizes = [8, 32], strides = [1, 1]} : vector<8x96xf32> to vector<8x32xf32>
    %203 = arith.mulf %199, %202 : vector<8x32xf32>
    %204 = arith.addf %201, %203 : vector<8x32xf32>
    %205 = math.tanh %204 : vector<8x32xf32>
    %cst_51 = arith.constant 1.000000e+00 : f32
    %206 = vector.broadcast %cst_51 : f32 to vector<8x32xf32>
    %207 = arith.subf %206, %200 : vector<8x32xf32>
    %208 = arith.mulf %207, %205 : vector<8x32xf32>
    %209 = arith.mulf %200, %181 : vector<8x32xf32>
    %210 = arith.addf %208, %209 : vector<8x32xf32>
    %211 = arith.index_cast %185 : i32 to index
    %c0_52 = arith.constant 0 : index
    %212 = vector.load %arg17[%211, %c0_52] : memref<72x32xf32, #tpu.memory_space<vmem>>, vector<8x32xf32>
    tpu.vector_store %arg17[%211, %c0_52], %210 {strides = array<i32>} : memref<72x32xf32, #tpu.memory_space<vmem>>, vector<8x32xf32>,
    %c7_i32 = arith.constant 7 : i32
    %c8_i32_53 = arith.constant 8 : i32
    %213 = arith.muli %c7_i32, %c8_i32_53 : i32
    %214 = tpu.assume_multiple %213, 8 : i32
    %cst_54 = arith.constant dense<0.000000e+00> : vector<8x96xf32>
    %215 = tpu.matmul %210, %7, %cst_54 {dimension_numbers = #tpu.dot_dimension_numbers<[1], [0], [0], [1], [0, 0, 1, 1], [], []>} : vector<8x32xf32>, vector<32x96xf32>, vector<8x96xf32> -> vector<8x96xf32>
    %216 = vector.broadcast %8 : vector<1x96xf32> to vector<8x96xf32>
    %217 = arith.addf %215, %216 : vector<8x96xf32>
    %218 = arith.index_cast %214 : i32 to index
    %c0_55 = arith.constant 0 : index
    %219 = vector.load %arg16[%218, %c0_55] : memref<64x96xf32, #tpu.memory_space<vmem>>, vector<8x96xf32>
    %220 = vector.extract_strided_slice %219 {offsets = [0, 0], sizes = [8, 64], strides = [1, 1]} : vector<8x96xf32> to vector<8x64xf32>
    %221 = vector.extract_strided_slice %217 {offsets = [0, 0], sizes = [8, 64], strides = [1, 1]} : vector<8x96xf32> to vector<8x64xf32>
    %222 = arith.addf %220, %221 : vector<8x64xf32>
    %223 = arith.negf %222 : vector<8x64xf32>
    %224 = math.exp %223 : vector<8x64xf32>
    %cst_56 = arith.constant 1.000000e+00 : f32
    %225 = vector.broadcast %cst_56 : f32 to vector<8x64xf32>
    %226 = arith.addf %225, %224 : vector<8x64xf32>
    %227 = arith.divf %225, %226 : vector<8x64xf32>
    %228 = vector.extract_strided_slice %227 {offsets = [0, 0], sizes = [8, 32], strides = [1, 1]} : vector<8x64xf32> to vector<8x32xf32>
    %229 = vector.extract_strided_slice %227 {offsets = [0, 32], sizes = [8, 32], strides = [1, 1]} : vector<8x64xf32> to vector<8x32xf32>
    %230 = vector.extract_strided_slice %219 {offsets = [0, 64], sizes = [8, 32], strides = [1, 1]} : vector<8x96xf32> to vector<8x32xf32>
    %231 = vector.extract_strided_slice %217 {offsets = [0, 64], sizes = [8, 32], strides = [1, 1]} : vector<8x96xf32> to vector<8x32xf32>
    %232 = arith.mulf %228, %231 : vector<8x32xf32>
    %233 = arith.addf %230, %232 : vector<8x32xf32>
    %234 = math.tanh %233 : vector<8x32xf32>
    %cst_57 = arith.constant 1.000000e+00 : f32
    %235 = vector.broadcast %cst_57 : f32 to vector<8x32xf32>
    %236 = arith.subf %235, %229 : vector<8x32xf32>
    %237 = arith.mulf %236, %234 : vector<8x32xf32>
    %238 = arith.mulf %229, %210 : vector<8x32xf32>
    %239 = arith.addf %237, %238 : vector<8x32xf32>
    %240 = arith.index_cast %214 : i32 to index
    %c0_58 = arith.constant 0 : index
    %241 = vector.load %arg17[%240, %c0_58] : memref<72x32xf32, #tpu.memory_space<vmem>>, vector<8x32xf32>
    tpu.vector_store %arg17[%240, %c0_58], %239 {strides = array<i32>} : memref<72x32xf32, #tpu.memory_space<vmem>>, vector<8x32xf32>,
    %c8_i32_59 = arith.constant 8 : i32
    %242 = vector.extract_strided_slice %239 {offsets = [0, 0], sizes = [2, 32], strides = [1, 1]} : vector<8x32xf32> to vector<2x32xf32>
    %c0_60 = arith.constant 0 : index
    %c0_61 = arith.constant 0 : index
    %c0_62 = arith.constant 0 : index
    %243 = vector.load %arg15[%c0_60, %c0_61, %c0_62] : memref<2x2x32xf32, #tpu.memory_space<vmem>>, vector<1x2x32xf32>
    %244 = vector.shape_cast %243 : vector<1x2x32xf32> to vector<2x32xf32>
    %245 = vector.shape_cast %242 : vector<2x32xf32> to vector<1x2x32xf32>
    tpu.vector_store %arg15[%c0_60, %c0_61, %c0_62], %245 {strides = array<i32>} : memref<2x2x32xf32, #tpu.memory_space<vmem>>, vector<1x2x32xf32>,
    %c0_63 = arith.constant 0 : index
    %c0_64 = arith.constant 0 : index
    %246 = vector.load %arg17[%c0_63, %c0_64] : memref<72x32xf32, #tpu.memory_space<vmem>>, vector<64x32xf32>
    %c0_65 = arith.constant 0 : index
    %c0_66 = arith.constant 0 : index
    %247 = vector.load %arg5[%c0_65, %c0_66] : memref<32x96xf32, #tpu.memory_space<vmem>>, vector<32x96xf32>
    %cst_67 = arith.constant dense<0.000000e+00> : vector<64x96xf32>
    %248 = tpu.matmul %246, %247, %cst_67 {dimension_numbers = #tpu.dot_dimension_numbers<[1], [0], [0], [1], [0, 0, 1, 1], [], []>} : vector<64x32xf32>, vector<32x96xf32>, vector<64x96xf32> -> vector<64x96xf32>
    %c0_68 = arith.constant 0 : index
    %c0_69 = arith.constant 0 : index
    %249 = vector.load %arg6[%c0_68, %c0_69] : memref<1x96xf32, #tpu.memory_space<vmem>>, vector<1x96xf32>
    %250 = vector.broadcast %249 : vector<1x96xf32> to vector<64x96xf32>
    %251 = arith.addf %248, %250 : vector<64x96xf32>
    %c0_70 = arith.constant 0 : index
    %c0_71 = arith.constant 0 : index
    %252 = vector.load %arg16[%c0_70, %c0_71] : memref<64x96xf32, #tpu.memory_space<vmem>>, vector<64x96xf32>
    tpu.vector_store %arg16[%c0_70, %c0_71], %251 {strides = array<i32>} : memref<64x96xf32, #tpu.memory_space<vmem>>, vector<64x96xf32>,
    %c0_72 = arith.constant 0 : index
    %c0_73 = arith.constant 0 : index
    %253 = vector.load %arg7[%c0_72, %c0_73] : memref<32x96xf32, #tpu.memory_space<vmem>>, vector<32x96xf32>
    %c0_74 = arith.constant 0 : index
    %c0_75 = arith.constant 0 : index
    %254 = vector.load %arg8[%c0_74, %c0_75] : memref<1x96xf32, #tpu.memory_space<vmem>>, vector<1x96xf32>
    %cst_76 = arith.constant 0.000000e+00 : f32
    %255 = vector.broadcast %cst_76 : f32 to vector<8x32xf32>
    %c0_i32_77 = arith.constant 0 : i32
    %c8_i32_78 = arith.constant 8 : i32
    %256 = arith.muli %c0_i32_77, %c8_i32_78 : i32
    %257 = tpu.assume_multiple %256, 8 : i32
    %cst_79 = arith.constant dense<0.000000e+00> : vector<8x96xf32>
    %258 = tpu.matmul %255, %253, %cst_79 {dimension_numbers = #tpu.dot_dimension_numbers<[1], [0], [0], [1], [0, 0, 1, 1], [], []>} : vector<8x32xf32>, vector<32x96xf32>, vector<8x96xf32> -> vector<8x96xf32>
    %259 = vector.broadcast %254 : vector<1x96xf32> to vector<8x96xf32>
    %260 = arith.addf %258, %259 : vector<8x96xf32>
    %261 = arith.index_cast %257 : i32 to index
    %c0_80 = arith.constant 0 : index
    %262 = vector.load %arg16[%261, %c0_80] : memref<64x96xf32, #tpu.memory_space<vmem>>, vector<8x96xf32>
    %263 = vector.extract_strided_slice %262 {offsets = [0, 0], sizes = [8, 64], strides = [1, 1]} : vector<8x96xf32> to vector<8x64xf32>
    %264 = vector.extract_strided_slice %260 {offsets = [0, 0], sizes = [8, 64], strides = [1, 1]} : vector<8x96xf32> to vector<8x64xf32>
    %265 = arith.addf %263, %264 : vector<8x64xf32>
    %266 = arith.negf %265 : vector<8x64xf32>
    %267 = math.exp %266 : vector<8x64xf32>
    %cst_81 = arith.constant 1.000000e+00 : f32
    %268 = vector.broadcast %cst_81 : f32 to vector<8x64xf32>
    %269 = arith.addf %268, %267 : vector<8x64xf32>
    %270 = arith.divf %268, %269 : vector<8x64xf32>
    %271 = vector.extract_strided_slice %270 {offsets = [0, 0], sizes = [8, 32], strides = [1, 1]} : vector<8x64xf32> to vector<8x32xf32>
    %272 = vector.extract_strided_slice %270 {offsets = [0, 32], sizes = [8, 32], strides = [1, 1]} : vector<8x64xf32> to vector<8x32xf32>
    %273 = vector.extract_strided_slice %262 {offsets = [0, 64], sizes = [8, 32], strides = [1, 1]} : vector<8x96xf32> to vector<8x32xf32>
    %274 = vector.extract_strided_slice %260 {offsets = [0, 64], sizes = [8, 32], strides = [1, 1]} : vector<8x96xf32> to vector<8x32xf32>
    %275 = arith.mulf %271, %274 : vector<8x32xf32>
    %276 = arith.addf %273, %275 : vector<8x32xf32>
    %277 = math.tanh %276 : vector<8x32xf32>
    %cst_82 = arith.constant 1.000000e+00 : f32
    %278 = vector.broadcast %cst_82 : f32 to vector<8x32xf32>
    %279 = arith.subf %278, %272 : vector<8x32xf32>
    %280 = arith.mulf %279, %277 : vector<8x32xf32>
    %281 = arith.mulf %272, %255 : vector<8x32xf32>
    %282 = arith.addf %280, %281 : vector<8x32xf32>
    %283 = arith.index_cast %257 : i32 to index
    %c0_83 = arith.constant 0 : index
    %284 = vector.load %arg17[%283, %c0_83] : memref<72x32xf32, #tpu.memory_space<vmem>>, vector<8x32xf32>
    tpu.vector_store %arg17[%283, %c0_83], %282 {strides = array<i32>} : memref<72x32xf32, #tpu.memory_space<vmem>>, vector<8x32xf32>,
    %c1_i32_84 = arith.constant 1 : i32
    %c8_i32_85 = arith.constant 8 : i32
    %285 = arith.muli %c1_i32_84, %c8_i32_85 : i32
    %286 = tpu.assume_multiple %285, 8 : i32
    %cst_86 = arith.constant dense<0.000000e+00> : vector<8x96xf32>
    %287 = tpu.matmul %282, %253, %cst_86 {dimension_numbers = #tpu.dot_dimension_numbers<[1], [0], [0], [1], [0, 0, 1, 1], [], []>} : vector<8x32xf32>, vector<32x96xf32>, vector<8x96xf32> -> vector<8x96xf32>
    %288 = vector.broadcast %254 : vector<1x96xf32> to vector<8x96xf32>
    %289 = arith.addf %287, %288 : vector<8x96xf32>
    %290 = arith.index_cast %286 : i32 to index
    %c0_87 = arith.constant 0 : index
    %291 = vector.load %arg16[%290, %c0_87] : memref<64x96xf32, #tpu.memory_space<vmem>>, vector<8x96xf32>
    %292 = vector.extract_strided_slice %291 {offsets = [0, 0], sizes = [8, 64], strides = [1, 1]} : vector<8x96xf32> to vector<8x64xf32>
    %293 = vector.extract_strided_slice %289 {offsets = [0, 0], sizes = [8, 64], strides = [1, 1]} : vector<8x96xf32> to vector<8x64xf32>
    %294 = arith.addf %292, %293 : vector<8x64xf32>
    %295 = arith.negf %294 : vector<8x64xf32>
    %296 = math.exp %295 : vector<8x64xf32>
    %cst_88 = arith.constant 1.000000e+00 : f32
    %297 = vector.broadcast %cst_88 : f32 to vector<8x64xf32>
    %298 = arith.addf %297, %296 : vector<8x64xf32>
    %299 = arith.divf %297, %298 : vector<8x64xf32>
    %300 = vector.extract_strided_slice %299 {offsets = [0, 0], sizes = [8, 32], strides = [1, 1]} : vector<8x64xf32> to vector<8x32xf32>
    %301 = vector.extract_strided_slice %299 {offsets = [0, 32], sizes = [8, 32], strides = [1, 1]} : vector<8x64xf32> to vector<8x32xf32>
    %302 = vector.extract_strided_slice %291 {offsets = [0, 64], sizes = [8, 32], strides = [1, 1]} : vector<8x96xf32> to vector<8x32xf32>
    %303 = vector.extract_strided_slice %289 {offsets = [0, 64], sizes = [8, 32], strides = [1, 1]} : vector<8x96xf32> to vector<8x32xf32>
    %304 = arith.mulf %300, %303 : vector<8x32xf32>
    %305 = arith.addf %302, %304 : vector<8x32xf32>
    %306 = math.tanh %305 : vector<8x32xf32>
    %cst_89 = arith.constant 1.000000e+00 : f32
    %307 = vector.broadcast %cst_89 : f32 to vector<8x32xf32>
    %308 = arith.subf %307, %301 : vector<8x32xf32>
    %309 = arith.mulf %308, %306 : vector<8x32xf32>
    %310 = arith.mulf %301, %282 : vector<8x32xf32>
    %311 = arith.addf %309, %310 : vector<8x32xf32>
    %312 = arith.index_cast %286 : i32 to index
    %c0_90 = arith.constant 0 : index
    %313 = vector.load %arg17[%312, %c0_90] : memref<72x32xf32, #tpu.memory_space<vmem>>, vector<8x32xf32>
    tpu.vector_store %arg17[%312, %c0_90], %311 {strides = array<i32>} : memref<72x32xf32, #tpu.memory_space<vmem>>, vector<8x32xf32>,
    %c2_i32_91 = arith.constant 2 : i32
    %c8_i32_92 = arith.constant 8 : i32
    %314 = arith.muli %c2_i32_91, %c8_i32_92 : i32
    %315 = tpu.assume_multiple %314, 8 : i32
    %cst_93 = arith.constant dense<0.000000e+00> : vector<8x96xf32>
    %316 = tpu.matmul %311, %253, %cst_93 {dimension_numbers = #tpu.dot_dimension_numbers<[1], [0], [0], [1], [0, 0, 1, 1], [], []>} : vector<8x32xf32>, vector<32x96xf32>, vector<8x96xf32> -> vector<8x96xf32>
    %317 = vector.broadcast %254 : vector<1x96xf32> to vector<8x96xf32>
    %318 = arith.addf %316, %317 : vector<8x96xf32>
    %319 = arith.index_cast %315 : i32 to index
    %c0_94 = arith.constant 0 : index
    %320 = vector.load %arg16[%319, %c0_94] : memref<64x96xf32, #tpu.memory_space<vmem>>, vector<8x96xf32>
    %321 = vector.extract_strided_slice %320 {offsets = [0, 0], sizes = [8, 64], strides = [1, 1]} : vector<8x96xf32> to vector<8x64xf32>
    %322 = vector.extract_strided_slice %318 {offsets = [0, 0], sizes = [8, 64], strides = [1, 1]} : vector<8x96xf32> to vector<8x64xf32>
    %323 = arith.addf %321, %322 : vector<8x64xf32>
    %324 = arith.negf %323 : vector<8x64xf32>
    %325 = math.exp %324 : vector<8x64xf32>
    %cst_95 = arith.constant 1.000000e+00 : f32
    %326 = vector.broadcast %cst_95 : f32 to vector<8x64xf32>
    %327 = arith.addf %326, %325 : vector<8x64xf32>
    %328 = arith.divf %326, %327 : vector<8x64xf32>
    %329 = vector.extract_strided_slice %328 {offsets = [0, 0], sizes = [8, 32], strides = [1, 1]} : vector<8x64xf32> to vector<8x32xf32>
    %330 = vector.extract_strided_slice %328 {offsets = [0, 32], sizes = [8, 32], strides = [1, 1]} : vector<8x64xf32> to vector<8x32xf32>
    %331 = vector.extract_strided_slice %320 {offsets = [0, 64], sizes = [8, 32], strides = [1, 1]} : vector<8x96xf32> to vector<8x32xf32>
    %332 = vector.extract_strided_slice %318 {offsets = [0, 64], sizes = [8, 32], strides = [1, 1]} : vector<8x96xf32> to vector<8x32xf32>
    %333 = arith.mulf %329, %332 : vector<8x32xf32>
    %334 = arith.addf %331, %333 : vector<8x32xf32>
    %335 = math.tanh %334 : vector<8x32xf32>
    %cst_96 = arith.constant 1.000000e+00 : f32
    %336 = vector.broadcast %cst_96 : f32 to vector<8x32xf32>
    %337 = arith.subf %336, %330 : vector<8x32xf32>
    %338 = arith.mulf %337, %335 : vector<8x32xf32>
    %339 = arith.mulf %330, %311 : vector<8x32xf32>
    %340 = arith.addf %338, %339 : vector<8x32xf32>
    %341 = arith.index_cast %315 : i32 to index
    %c0_97 = arith.constant 0 : index
    %342 = vector.load %arg17[%341, %c0_97] : memref<72x32xf32, #tpu.memory_space<vmem>>, vector<8x32xf32>
    tpu.vector_store %arg17[%341, %c0_97], %340 {strides = array<i32>} : memref<72x32xf32, #tpu.memory_space<vmem>>, vector<8x32xf32>,
    %c3_i32_98 = arith.constant 3 : i32
    %c8_i32_99 = arith.constant 8 : i32
    %343 = arith.muli %c3_i32_98, %c8_i32_99 : i32
    %344 = tpu.assume_multiple %343, 8 : i32
    %cst_100 = arith.constant dense<0.000000e+00> : vector<8x96xf32>
    %345 = tpu.matmul %340, %253, %cst_100 {dimension_numbers = #tpu.dot_dimension_numbers<[1], [0], [0], [1], [0, 0, 1, 1], [], []>} : vector<8x32xf32>, vector<32x96xf32>, vector<8x96xf32> -> vector<8x96xf32>
    %346 = vector.broadcast %254 : vector<1x96xf32> to vector<8x96xf32>
    %347 = arith.addf %345, %346 : vector<8x96xf32>
    %348 = arith.index_cast %344 : i32 to index
    %c0_101 = arith.constant 0 : index
    %349 = vector.load %arg16[%348, %c0_101] : memref<64x96xf32, #tpu.memory_space<vmem>>, vector<8x96xf32>
    %350 = vector.extract_strided_slice %349 {offsets = [0, 0], sizes = [8, 64], strides = [1, 1]} : vector<8x96xf32> to vector<8x64xf32>
    %351 = vector.extract_strided_slice %347 {offsets = [0, 0], sizes = [8, 64], strides = [1, 1]} : vector<8x96xf32> to vector<8x64xf32>
    %352 = arith.addf %350, %351 : vector<8x64xf32>
    %353 = arith.negf %352 : vector<8x64xf32>
    %354 = math.exp %353 : vector<8x64xf32>
    %cst_102 = arith.constant 1.000000e+00 : f32
    %355 = vector.broadcast %cst_102 : f32 to vector<8x64xf32>
    %356 = arith.addf %355, %354 : vector<8x64xf32>
    %357 = arith.divf %355, %356 : vector<8x64xf32>
    %358 = vector.extract_strided_slice %357 {offsets = [0, 0], sizes = [8, 32], strides = [1, 1]} : vector<8x64xf32> to vector<8x32xf32>
    %359 = vector.extract_strided_slice %357 {offsets = [0, 32], sizes = [8, 32], strides = [1, 1]} : vector<8x64xf32> to vector<8x32xf32>
    %360 = vector.extract_strided_slice %349 {offsets = [0, 64], sizes = [8, 32], strides = [1, 1]} : vector<8x96xf32> to vector<8x32xf32>
    %361 = vector.extract_strided_slice %347 {offsets = [0, 64], sizes = [8, 32], strides = [1, 1]} : vector<8x96xf32> to vector<8x32xf32>
    %362 = arith.mulf %358, %361 : vector<8x32xf32>
    %363 = arith.addf %360, %362 : vector<8x32xf32>
    %364 = math.tanh %363 : vector<8x32xf32>
    %cst_103 = arith.constant 1.000000e+00 : f32
    %365 = vector.broadcast %cst_103 : f32 to vector<8x32xf32>
    %366 = arith.subf %365, %359 : vector<8x32xf32>
    %367 = arith.mulf %366, %364 : vector<8x32xf32>
    %368 = arith.mulf %359, %340 : vector<8x32xf32>
    %369 = arith.addf %367, %368 : vector<8x32xf32>
    %370 = arith.index_cast %344 : i32 to index
    %c0_104 = arith.constant 0 : index
    %371 = vector.load %arg17[%370, %c0_104] : memref<72x32xf32, #tpu.memory_space<vmem>>, vector<8x32xf32>
    tpu.vector_store %arg17[%370, %c0_104], %369 {strides = array<i32>} : memref<72x32xf32, #tpu.memory_space<vmem>>, vector<8x32xf32>,
    %c4_i32_105 = arith.constant 4 : i32
    %c8_i32_106 = arith.constant 8 : i32
    %372 = arith.muli %c4_i32_105, %c8_i32_106 : i32
    %373 = tpu.assume_multiple %372, 8 : i32
    %cst_107 = arith.constant dense<0.000000e+00> : vector<8x96xf32>
    %374 = tpu.matmul %369, %253, %cst_107 {dimension_numbers = #tpu.dot_dimension_numbers<[1], [0], [0], [1], [0, 0, 1, 1], [], []>} : vector<8x32xf32>, vector<32x96xf32>, vector<8x96xf32> -> vector<8x96xf32>
    %375 = vector.broadcast %254 : vector<1x96xf32> to vector<8x96xf32>
    %376 = arith.addf %374, %375 : vector<8x96xf32>
    %377 = arith.index_cast %373 : i32 to index
    %c0_108 = arith.constant 0 : index
    %378 = vector.load %arg16[%377, %c0_108] : memref<64x96xf32, #tpu.memory_space<vmem>>, vector<8x96xf32>
    %379 = vector.extract_strided_slice %378 {offsets = [0, 0], sizes = [8, 64], strides = [1, 1]} : vector<8x96xf32> to vector<8x64xf32>
    %380 = vector.extract_strided_slice %376 {offsets = [0, 0], sizes = [8, 64], strides = [1, 1]} : vector<8x96xf32> to vector<8x64xf32>
    %381 = arith.addf %379, %380 : vector<8x64xf32>
    %382 = arith.negf %381 : vector<8x64xf32>
    %383 = math.exp %382 : vector<8x64xf32>
    %cst_109 = arith.constant 1.000000e+00 : f32
    %384 = vector.broadcast %cst_109 : f32 to vector<8x64xf32>
    %385 = arith.addf %384, %383 : vector<8x64xf32>
    %386 = arith.divf %384, %385 : vector<8x64xf32>
    %387 = vector.extract_strided_slice %386 {offsets = [0, 0], sizes = [8, 32], strides = [1, 1]} : vector<8x64xf32> to vector<8x32xf32>
    %388 = vector.extract_strided_slice %386 {offsets = [0, 32], sizes = [8, 32], strides = [1, 1]} : vector<8x64xf32> to vector<8x32xf32>
    %389 = vector.extract_strided_slice %378 {offsets = [0, 64], sizes = [8, 32], strides = [1, 1]} : vector<8x96xf32> to vector<8x32xf32>
    %390 = vector.extract_strided_slice %376 {offsets = [0, 64], sizes = [8, 32], strides = [1, 1]} : vector<8x96xf32> to vector<8x32xf32>
    %391 = arith.mulf %387, %390 : vector<8x32xf32>
    %392 = arith.addf %389, %391 : vector<8x32xf32>
    %393 = math.tanh %392 : vector<8x32xf32>
    %cst_110 = arith.constant 1.000000e+00 : f32
    %394 = vector.broadcast %cst_110 : f32 to vector<8x32xf32>
    %395 = arith.subf %394, %388 : vector<8x32xf32>
    %396 = arith.mulf %395, %393 : vector<8x32xf32>
    %397 = arith.mulf %388, %369 : vector<8x32xf32>
    %398 = arith.addf %396, %397 : vector<8x32xf32>
    %399 = arith.index_cast %373 : i32 to index
    %c0_111 = arith.constant 0 : index
    %400 = vector.load %arg17[%399, %c0_111] : memref<72x32xf32, #tpu.memory_space<vmem>>, vector<8x32xf32>
    tpu.vector_store %arg17[%399, %c0_111], %398 {strides = array<i32>} : memref<72x32xf32, #tpu.memory_space<vmem>>, vector<8x32xf32>,
    %c5_i32_112 = arith.constant 5 : i32
    %c8_i32_113 = arith.constant 8 : i32
    %401 = arith.muli %c5_i32_112, %c8_i32_113 : i32
    %402 = tpu.assume_multiple %401, 8 : i32
    %cst_114 = arith.constant dense<0.000000e+00> : vector<8x96xf32>
    %403 = tpu.matmul %398, %253, %cst_114 {dimension_numbers = #tpu.dot_dimension_numbers<[1], [0], [0], [1], [0, 0, 1, 1], [], []>} : vector<8x32xf32>, vector<32x96xf32>, vector<8x96xf32> -> vector<8x96xf32>
    %404 = vector.broadcast %254 : vector<1x96xf32> to vector<8x96xf32>
    %405 = arith.addf %403, %404 : vector<8x96xf32>
    %406 = arith.index_cast %402 : i32 to index
    %c0_115 = arith.constant 0 : index
    %407 = vector.load %arg16[%406, %c0_115] : memref<64x96xf32, #tpu.memory_space<vmem>>, vector<8x96xf32>
    %408 = vector.extract_strided_slice %407 {offsets = [0, 0], sizes = [8, 64], strides = [1, 1]} : vector<8x96xf32> to vector<8x64xf32>
    %409 = vector.extract_strided_slice %405 {offsets = [0, 0], sizes = [8, 64], strides = [1, 1]} : vector<8x96xf32> to vector<8x64xf32>
    %410 = arith.addf %408, %409 : vector<8x64xf32>
    %411 = arith.negf %410 : vector<8x64xf32>
    %412 = math.exp %411 : vector<8x64xf32>
    %cst_116 = arith.constant 1.000000e+00 : f32
    %413 = vector.broadcast %cst_116 : f32 to vector<8x64xf32>
    %414 = arith.addf %413, %412 : vector<8x64xf32>
    %415 = arith.divf %413, %414 : vector<8x64xf32>
    %416 = vector.extract_strided_slice %415 {offsets = [0, 0], sizes = [8, 32], strides = [1, 1]} : vector<8x64xf32> to vector<8x32xf32>
    %417 = vector.extract_strided_slice %415 {offsets = [0, 32], sizes = [8, 32], strides = [1, 1]} : vector<8x64xf32> to vector<8x32xf32>
    %418 = vector.extract_strided_slice %407 {offsets = [0, 64], sizes = [8, 32], strides = [1, 1]} : vector<8x96xf32> to vector<8x32xf32>
    %419 = vector.extract_strided_slice %405 {offsets = [0, 64], sizes = [8, 32], strides = [1, 1]} : vector<8x96xf32> to vector<8x32xf32>
    %420 = arith.mulf %416, %419 : vector<8x32xf32>
    %421 = arith.addf %418, %420 : vector<8x32xf32>
    %422 = math.tanh %421 : vector<8x32xf32>
    %cst_117 = arith.constant 1.000000e+00 : f32
    %423 = vector.broadcast %cst_117 : f32 to vector<8x32xf32>
    %424 = arith.subf %423, %417 : vector<8x32xf32>
    %425 = arith.mulf %424, %422 : vector<8x32xf32>
    %426 = arith.mulf %417, %398 : vector<8x32xf32>
    %427 = arith.addf %425, %426 : vector<8x32xf32>
    %428 = arith.index_cast %402 : i32 to index
    %c0_118 = arith.constant 0 : index
    %429 = vector.load %arg17[%428, %c0_118] : memref<72x32xf32, #tpu.memory_space<vmem>>, vector<8x32xf32>
    tpu.vector_store %arg17[%428, %c0_118], %427 {strides = array<i32>} : memref<72x32xf32, #tpu.memory_space<vmem>>, vector<8x32xf32>,
    %c6_i32_119 = arith.constant 6 : i32
    %c8_i32_120 = arith.constant 8 : i32
    %430 = arith.muli %c6_i32_119, %c8_i32_120 : i32
    %431 = tpu.assume_multiple %430, 8 : i32
    %cst_121 = arith.constant dense<0.000000e+00> : vector<8x96xf32>
    %432 = tpu.matmul %427, %253, %cst_121 {dimension_numbers = #tpu.dot_dimension_numbers<[1], [0], [0], [1], [0, 0, 1, 1], [], []>} : vector<8x32xf32>, vector<32x96xf32>, vector<8x96xf32> -> vector<8x96xf32>
    %433 = vector.broadcast %254 : vector<1x96xf32> to vector<8x96xf32>
    %434 = arith.addf %432, %433 : vector<8x96xf32>
    %435 = arith.index_cast %431 : i32 to index
    %c0_122 = arith.constant 0 : index
    %436 = vector.load %arg16[%435, %c0_122] : memref<64x96xf32, #tpu.memory_space<vmem>>, vector<8x96xf32>
    %437 = vector.extract_strided_slice %436 {offsets = [0, 0], sizes = [8, 64], strides = [1, 1]} : vector<8x96xf32> to vector<8x64xf32>
    %438 = vector.extract_strided_slice %434 {offsets = [0, 0], sizes = [8, 64], strides = [1, 1]} : vector<8x96xf32> to vector<8x64xf32>
    %439 = arith.addf %437, %438 : vector<8x64xf32>
    %440 = arith.negf %439 : vector<8x64xf32>
    %441 = math.exp %440 : vector<8x64xf32>
    %cst_123 = arith.constant 1.000000e+00 : f32
    %442 = vector.broadcast %cst_123 : f32 to vector<8x64xf32>
    %443 = arith.addf %442, %441 : vector<8x64xf32>
    %444 = arith.divf %442, %443 : vector<8x64xf32>
    %445 = vector.extract_strided_slice %444 {offsets = [0, 0], sizes = [8, 32], strides = [1, 1]} : vector<8x64xf32> to vector<8x32xf32>
    %446 = vector.extract_strided_slice %444 {offsets = [0, 32], sizes = [8, 32], strides = [1, 1]} : vector<8x64xf32> to vector<8x32xf32>
    %447 = vector.extract_strided_slice %436 {offsets = [0, 64], sizes = [8, 32], strides = [1, 1]} : vector<8x96xf32> to vector<8x32xf32>
    %448 = vector.extract_strided_slice %434 {offsets = [0, 64], sizes = [8, 32], strides = [1, 1]} : vector<8x96xf32> to vector<8x32xf32>
    %449 = arith.mulf %445, %448 : vector<8x32xf32>
    %450 = arith.addf %447, %449 : vector<8x32xf32>
    %451 = math.tanh %450 : vector<8x32xf32>
    %cst_124 = arith.constant 1.000000e+00 : f32
    %452 = vector.broadcast %cst_124 : f32 to vector<8x32xf32>
    %453 = arith.subf %452, %446 : vector<8x32xf32>
    %454 = arith.mulf %453, %451 : vector<8x32xf32>
    %455 = arith.mulf %446, %427 : vector<8x32xf32>
    %456 = arith.addf %454, %455 : vector<8x32xf32>
    %457 = arith.index_cast %431 : i32 to index
    %c0_125 = arith.constant 0 : index
    %458 = vector.load %arg17[%457, %c0_125] : memref<72x32xf32, #tpu.memory_space<vmem>>, vector<8x32xf32>
    tpu.vector_store %arg17[%457, %c0_125], %456 {strides = array<i32>} : memref<72x32xf32, #tpu.memory_space<vmem>>, vector<8x32xf32>,
    %c7_i32_126 = arith.constant 7 : i32
    %c8_i32_127 = arith.constant 8 : i32
    %459 = arith.muli %c7_i32_126, %c8_i32_127 : i32
    %460 = tpu.assume_multiple %459, 8 : i32
    %cst_128 = arith.constant dense<0.000000e+00> : vector<8x96xf32>
    %461 = tpu.matmul %456, %253, %cst_128 {dimension_numbers = #tpu.dot_dimension_numbers<[1], [0], [0], [1], [0, 0, 1, 1], [], []>} : vector<8x32xf32>, vector<32x96xf32>, vector<8x96xf32> -> vector<8x96xf32>
    %462 = vector.broadcast %254 : vector<1x96xf32> to vector<8x96xf32>
    %463 = arith.addf %461, %462 : vector<8x96xf32>
    %464 = arith.index_cast %460 : i32 to index
    %c0_129 = arith.constant 0 : index
    %465 = vector.load %arg16[%464, %c0_129] : memref<64x96xf32, #tpu.memory_space<vmem>>, vector<8x96xf32>
    %466 = vector.extract_strided_slice %465 {offsets = [0, 0], sizes = [8, 64], strides = [1, 1]} : vector<8x96xf32> to vector<8x64xf32>
    %467 = vector.extract_strided_slice %463 {offsets = [0, 0], sizes = [8, 64], strides = [1, 1]} : vector<8x96xf32> to vector<8x64xf32>
    %468 = arith.addf %466, %467 : vector<8x64xf32>
    %469 = arith.negf %468 : vector<8x64xf32>
    %470 = math.exp %469 : vector<8x64xf32>
    %cst_130 = arith.constant 1.000000e+00 : f32
    %471 = vector.broadcast %cst_130 : f32 to vector<8x64xf32>
    %472 = arith.addf %471, %470 : vector<8x64xf32>
    %473 = arith.divf %471, %472 : vector<8x64xf32>
    %474 = vector.extract_strided_slice %473 {offsets = [0, 0], sizes = [8, 32], strides = [1, 1]} : vector<8x64xf32> to vector<8x32xf32>
    %475 = vector.extract_strided_slice %473 {offsets = [0, 32], sizes = [8, 32], strides = [1, 1]} : vector<8x64xf32> to vector<8x32xf32>
    %476 = vector.extract_strided_slice %465 {offsets = [0, 64], sizes = [8, 32], strides = [1, 1]} : vector<8x96xf32> to vector<8x32xf32>
    %477 = vector.extract_strided_slice %463 {offsets = [0, 64], sizes = [8, 32], strides = [1, 1]} : vector<8x96xf32> to vector<8x32xf32>
    %478 = arith.mulf %474, %477 : vector<8x32xf32>
    %479 = arith.addf %476, %478 : vector<8x32xf32>
    %480 = math.tanh %479 : vector<8x32xf32>
    %cst_131 = arith.constant 1.000000e+00 : f32
    %481 = vector.broadcast %cst_131 : f32 to vector<8x32xf32>
    %482 = arith.subf %481, %475 : vector<8x32xf32>
    %483 = arith.mulf %482, %480 : vector<8x32xf32>
    %484 = arith.mulf %475, %456 : vector<8x32xf32>
    %485 = arith.addf %483, %484 : vector<8x32xf32>
    %486 = arith.index_cast %460 : i32 to index
    %c0_132 = arith.constant 0 : index
    %487 = vector.load %arg17[%486, %c0_132] : memref<72x32xf32, #tpu.memory_space<vmem>>, vector<8x32xf32>
    tpu.vector_store %arg17[%486, %c0_132], %485 {strides = array<i32>} : memref<72x32xf32, #tpu.memory_space<vmem>>, vector<8x32xf32>,
    %c8_i32_133 = arith.constant 8 : i32
    %488 = vector.extract_strided_slice %485 {offsets = [0, 0], sizes = [2, 32], strides = [1, 1]} : vector<8x32xf32> to vector<2x32xf32>
    %c1 = arith.constant 1 : index
    %c0_134 = arith.constant 0 : index
    %c0_135 = arith.constant 0 : index
    %489 = vector.load %arg15[%c1, %c0_134, %c0_135] : memref<2x2x32xf32, #tpu.memory_space<vmem>>, vector<1x2x32xf32>
    %490 = vector.shape_cast %489 : vector<1x2x32xf32> to vector<2x32xf32>
    %491 = vector.shape_cast %488 : vector<2x32xf32> to vector<1x2x32xf32>
    tpu.vector_store %arg15[%c1, %c0_134, %c0_135], %491 {strides = array<i32>} : memref<2x2x32xf32, #tpu.memory_space<vmem>>, vector<1x2x32xf32>,
    %c0_136 = arith.constant 0 : index
    %c0_137 = arith.constant 0 : index
    %492 = vector.load %arg9[%c0_136, %c0_137] : memref<32x16xf32, #tpu.memory_space<vmem>>, vector<32x16xf32>
    %c0_138 = arith.constant 0 : index
    %c0_139 = arith.constant 0 : index
    %493 = vector.load %arg10[%c0_138, %c0_139] : memref<1x16xf32, #tpu.memory_space<vmem>>, vector<1x16xf32>
    %c0_140 = arith.constant 0 : index
    %c0_141 = arith.constant 0 : index
    %494 = vector.load %arg11[%c0_140, %c0_141] : memref<16x5xf32, #tpu.memory_space<vmem>>, vector<16x5xf32>
    %c0_142 = arith.constant 0 : index
    %c0_143 = arith.constant 0 : index
    %495 = vector.load %arg12[%c0_142, %c0_143] : memref<1x5xf32, #tpu.memory_space<vmem>>, vector<1x5xf32>
    %c0_144 = arith.constant 0 : index
    %c0_145 = arith.constant 0 : index
    %496 = tpu.strided_load %arg17[%c0_144, %c0_145] {strides = array<i32: 8, 1>} : memref<72x32xf32, #tpu.memory_space<vmem>>, vector<8x32xf32>
    %c0_146 = arith.constant 0 : index
    %c0_147 = arith.constant 0 : index
    %c0_148 = arith.constant 0 : index
    %497 = vector.load %arg13[%c0_146, %c0_147, %c0_148] : memref<2x8x32xf32, #tpu.memory_space<vmem>>, vector<1x8x32xf32>
    %498 = vector.shape_cast %497 : vector<1x8x32xf32> to vector<8x32xf32>
    %499 = vector.shape_cast %496 : vector<8x32xf32> to vector<1x8x32xf32>
    tpu.vector_store %arg13[%c0_146, %c0_147, %c0_148], %499 {strides = array<i32>} : memref<2x8x32xf32, #tpu.memory_space<vmem>>, vector<1x8x32xf32>,
    %cst_149 = arith.constant dense<0.000000e+00> : vector<8x16xf32>
    %500 = tpu.matmul %496, %492, %cst_149 {dimension_numbers = #tpu.dot_dimension_numbers<[1], [0], [0], [1], [0, 0, 1, 1], [], []>} : vector<8x32xf32>, vector<32x16xf32>, vector<8x16xf32> -> vector<8x16xf32>
    %501 = vector.broadcast %493 : vector<1x16xf32> to vector<8x16xf32>
    %502 = arith.addf %500, %501 : vector<8x16xf32>
    %cst_150 = arith.constant 0.000000e+00 : f32
    %503 = vector.broadcast %cst_150 : f32 to vector<8x16xf32>
    %504 = arith.maximumf %502, %503 : vector<8x16xf32>
    %cst_151 = arith.constant 2.560000e+02 : f32
    %505 = vector.broadcast %cst_151 : f32 to vector<8x16xf32>
    %506 = arith.mulf %504, %505 : vector<8x16xf32>
    %507 = math.roundeven %506 : vector<8x16xf32>
    %cst_152 = arith.constant -3.276800e+04 : f32
    %cst_153 = arith.constant 3.276700e+04 : f32
    %508 = vector.broadcast %cst_152 : f32 to vector<8x16xf32>
    %509 = arith.maximumf %508, %507 : vector<8x16xf32>
    %510 = vector.broadcast %cst_153 : f32 to vector<8x16xf32>
    %511 = arith.minimumf %510, %509 : vector<8x16xf32>
    %cst_154 = arith.constant 2.560000e+02 : f32
    %512 = vector.broadcast %cst_154 : f32 to vector<8x16xf32>
    %513 = arith.divf %511, %512 : vector<8x16xf32>
    %cst_155 = arith.constant dense<0.000000e+00> : vector<8x5xf32>
    %514 = tpu.matmul %513, %494, %cst_155 {dimension_numbers = #tpu.dot_dimension_numbers<[1], [0], [0], [1], [0, 0, 1, 1], [], []>} : vector<8x16xf32>, vector<16x5xf32>, vector<8x5xf32> -> vector<8x5xf32>
    %515 = vector.broadcast %495 : vector<1x5xf32> to vector<8x5xf32>
    %516 = arith.addf %514, %515 : vector<8x5xf32>
    %cst_156 = arith.constant 2.560000e+02 : f32
    %517 = vector.broadcast %cst_156 : f32 to vector<8x5xf32>
    %518 = arith.mulf %516, %517 : vector<8x5xf32>
    %519 = math.roundeven %518 : vector<8x5xf32>
    %cst_157 = arith.constant -3.276800e+04 : f32
    %cst_158 = arith.constant 3.276700e+04 : f32
    %520 = vector.broadcast %cst_157 : f32 to vector<8x5xf32>
    %521 = arith.maximumf %520, %519 : vector<8x5xf32>
    %522 = vector.broadcast %cst_158 : f32 to vector<8x5xf32>
    %523 = arith.minimumf %522, %521 : vector<8x5xf32>
    %cst_159 = arith.constant 2.560000e+02 : f32
    %524 = vector.broadcast %cst_159 : f32 to vector<8x5xf32>
    %525 = arith.divf %523, %524 : vector<8x5xf32>
    %c0_160 = arith.constant 0 : index
    %c0_161 = arith.constant 0 : index
    %c0_162 = arith.constant 0 : index
    %526 = vector.load %arg14[%c0_160, %c0_161, %c0_162] : memref<2x8x5xf32, #tpu.memory_space<vmem>>, vector<1x8x5xf32>
    %527 = vector.shape_cast %526 : vector<1x8x5xf32> to vector<8x5xf32>
    %528 = vector.shape_cast %525 : vector<8x5xf32> to vector<1x8x5xf32>
    tpu.vector_store %arg14[%c0_160, %c0_161, %c0_162], %528 {strides = array<i32>} : memref<2x8x5xf32, #tpu.memory_space<vmem>>, vector<1x8x5xf32>,
    %c1_163 = arith.constant 1 : index
    %c0_164 = arith.constant 0 : index
    %529 = tpu.strided_load %arg17[%c1_163, %c0_164] {strides = array<i32: 8, 1>} : memref<72x32xf32, #tpu.memory_space<vmem>>, vector<8x32xf32>
    %c1_165 = arith.constant 1 : index
    %c0_166 = arith.constant 0 : index
    %c0_167 = arith.constant 0 : index
    %530 = vector.load %arg13[%c1_165, %c0_166, %c0_167] : memref<2x8x32xf32, #tpu.memory_space<vmem>>, vector<1x8x32xf32>
    %531 = vector.shape_cast %530 : vector<1x8x32xf32> to vector<8x32xf32>
    %532 = vector.shape_cast %529 : vector<8x32xf32> to vector<1x8x32xf32>
    tpu.vector_store %arg13[%c1_165, %c0_166, %c0_167], %532 {strides = array<i32>} : memref<2x8x32xf32, #tpu.memory_space<vmem>>, vector<1x8x32xf32>,
    %cst_168 = arith.constant dense<0.000000e+00> : vector<8x16xf32>
    %533 = tpu.matmul %529, %492, %cst_168 {dimension_numbers = #tpu.dot_dimension_numbers<[1], [0], [0], [1], [0, 0, 1, 1], [], []>} : vector<8x32xf32>, vector<32x16xf32>, vector<8x16xf32> -> vector<8x16xf32>
    %534 = vector.broadcast %493 : vector<1x16xf32> to vector<8x16xf32>
    %535 = arith.addf %533, %534 : vector<8x16xf32>
    %cst_169 = arith.constant 0.000000e+00 : f32
    %536 = vector.broadcast %cst_169 : f32 to vector<8x16xf32>
    %537 = arith.maximumf %535, %536 : vector<8x16xf32>
    %cst_170 = arith.constant 2.560000e+02 : f32
    %538 = vector.broadcast %cst_170 : f32 to vector<8x16xf32>
    %539 = arith.mulf %537, %538 : vector<8x16xf32>
    %540 = math.roundeven %539 : vector<8x16xf32>
    %cst_171 = arith.constant -3.276800e+04 : f32
    %cst_172 = arith.constant 3.276700e+04 : f32
    %541 = vector.broadcast %cst_171 : f32 to vector<8x16xf32>
    %542 = arith.maximumf %541, %540 : vector<8x16xf32>
    %543 = vector.broadcast %cst_172 : f32 to vector<8x16xf32>
    %544 = arith.minimumf %543, %542 : vector<8x16xf32>
    %cst_173 = arith.constant 2.560000e+02 : f32
    %545 = vector.broadcast %cst_173 : f32 to vector<8x16xf32>
    %546 = arith.divf %544, %545 : vector<8x16xf32>
    %cst_174 = arith.constant dense<0.000000e+00> : vector<8x5xf32>
    %547 = tpu.matmul %546, %494, %cst_174 {dimension_numbers = #tpu.dot_dimension_numbers<[1], [0], [0], [1], [0, 0, 1, 1], [], []>} : vector<8x16xf32>, vector<16x5xf32>, vector<8x5xf32> -> vector<8x5xf32>
    %548 = vector.broadcast %495 : vector<1x5xf32> to vector<8x5xf32>
    %549 = arith.addf %547, %548 : vector<8x5xf32>
    %cst_175 = arith.constant 2.560000e+02 : f32
    %550 = vector.broadcast %cst_175 : f32 to vector<8x5xf32>
    %551 = arith.mulf %549, %550 : vector<8x5xf32>
    %552 = math.roundeven %551 : vector<8x5xf32>
    %cst_176 = arith.constant -3.276800e+04 : f32
    %cst_177 = arith.constant 3.276700e+04 : f32
    %553 = vector.broadcast %cst_176 : f32 to vector<8x5xf32>
    %554 = arith.maximumf %553, %552 : vector<8x5xf32>
    %555 = vector.broadcast %cst_177 : f32 to vector<8x5xf32>
    %556 = arith.minimumf %555, %554 : vector<8x5xf32>
    %cst_178 = arith.constant 2.560000e+02 : f32
    %557 = vector.broadcast %cst_178 : f32 to vector<8x5xf32>
    %558 = arith.divf %556, %557 : vector<8x5xf32>
    %c1_179 = arith.constant 1 : index
    %c0_180 = arith.constant 0 : index
    %c0_181 = arith.constant 0 : index
    %559 = vector.load %arg14[%c1_179, %c0_180, %c0_181] : memref<2x8x5xf32, #tpu.memory_space<vmem>>, vector<1x8x5xf32>
    %560 = vector.shape_cast %559 : vector<1x8x5xf32> to vector<8x5xf32>
    %561 = vector.shape_cast %558 : vector<8x5xf32> to vector<1x8x5xf32>
    tpu.vector_store %arg14[%c1_179, %c0_180, %c0_181], %561 {strides = array<i32>} : memref<2x8x5xf32, #tpu.memory_space<vmem>>, vector<1x8x5xf32>,
    return
  }
}

</mosaic_0001>

<llo_original>
// kernel: model_forward.1
$region0: #{model_forward.1}
  #allocation0 [shape = 'u32[]', space=smem, size = 0x4, offset = 0x4, fixed_abs, tag = 'smem constant byte address 0x4 - core index']
  #allocation1 [shape = 'u32[144,128]{1,0:T(1,128)}', space=vmem, size = 0x12000, scoped, tag = 'internal scratch']
  #allocation2 [shape = 'f32[64,96]{1,0:T(8,128)}', space=vmem, size = 0x8000, scoped, tag = 'scratch operand']
  #allocation3 [shape = 'f32[72,32]{1,0:T(8,128)}', space=vmem, size = 0x9000, scoped, tag = 'scratch operand']
  %s0 = inlined_call_operand.vmem [shape: f32[64,4], index: 0, kind: input, shape index: {}]
  %s1 = inlined_call_operand.vmem [shape: f32[4,96], index: 1, kind: input, shape index: {}]
  %s2 = inlined_call_operand.vmem [shape: f32[1,96], index: 2, kind: input, shape index: {}]
  %s3 = inlined_call_operand.vmem [shape: f32[32,96], index: 3, kind: input, shape index: {}]
  %s4 = inlined_call_operand.vmem [shape: f32[1,96], index: 4, kind: input, shape index: {}]
  %s5 = inlined_call_operand.vmem [shape: f32[32,96], index: 5, kind: input, shape index: {}]
  %s6 = inlined_call_operand.vmem [shape: f32[1,96], index: 6, kind: input, shape index: {}]
  %s7 = inlined_call_operand.vmem [shape: f32[32,96], index: 7, kind: input, shape index: {}]
  %s8 = inlined_call_operand.vmem [shape: f32[1,96], index: 8, kind: input, shape index: {}]
  %s9 = inlined_call_operand.vmem [shape: f32[32,16], index: 9, kind: input, shape index: {}]
  %s10 = inlined_call_operand.vmem [shape: f32[1,16], index: 10, kind: input, shape index: {}]
  %s11 = inlined_call_operand.vmem [shape: f32[16,5], index: 11, kind: input, shape index: {}]
  %s12 = inlined_call_operand.vmem [shape: f32[1,5], index: 12, kind: input, shape index: {}]
  %s13 = inlined_call_operand.hbm [shape: f32[2,8,32], index: 13, kind: output, shape index: {0}]
  %s14 = inlined_call_operand.vmem [shape: f32[2,8,5], index: 14, kind: output, shape index: {1}]
  %s15 = inlined_call_operand.hbm [shape: f32[2,2,32], index: 15, kind: output, shape index: {2}]
  %16 = xla_tuple %s13, %s14, %s15
  %s17 = sld [smem:[#allocation0]]
  $region78: #{model_forward.1} parent=0
    _
  %s19 = ssub.s32 1, %s17
  %s20 = scalar_select 0, %s19, %s17
  $region1: #{model_forward.1} parent=0
    #allocation4 [shape = 'u8[8192]{0}', space=vmem, size = 0x2000, scoped, tag = 'output window, operand 0, single buffered']
    #allocation5 [shape = 's32[1]{0}', space=sflag, size = 0x4, scoped, tag = 'scoped memory for model_forward.1']
    #allocation6 [shape = 'u8[2048]{0}', space=vmem, size = 0x800, scoped, tag = 'output window, operand 2, single buffered']
    #allocation7 [shape = 's32[1]{0}', space=sflag, size = 0x4, scoped, tag = 'scoped memory for model_forward.1']
    %21 = vsyncpa [#allocation5], 0
    %22 = vsyncpa [#allocation7], 0
    // Predicated region
    $region2: #{model_forward.1} parent=1 // pred_check
      _
    $region3: #{model_forward.1} parent=1 // pred_check_branch
      %24 = sbr.rel (0) target = $region5
    $region4: #{model_forward.1} parent=1 // pred_region
      _
    $region5: #{model_forward.1} parent=1 // pred_fallthru
      _
    // Predicated region
    $region6: #{model_forward.1} parent=1 // pred_check
      _
    $region7: #{model_forward.1} parent=1 // pred_check_branch
      %26 = sbr.rel (0) target = $region9
    $region8: #{model_forward.1} parent=1 // pred_region
      _
    $region9: #{model_forward.1} parent=1 // pred_fallthru
      _
    // Predicated region
    $region10: #{model_forward.1} parent=1 // pred_check
      _
    $region11: #{model_forward.1} parent=1 // pred_check_branch
      %28 = sbr.rel (0) target = $region13
    $region12: #{model_forward.1} parent=1 // pred_region
      _
    $region13: #{model_forward.1} parent=1 // pred_fallthru
      _
    // Predicated region
    $region14: #{model_forward.1} parent=1 // pred_check
      _
    $region15: #{model_forward.1} parent=1 // pred_check_branch
      %30 = sbr.rel (0) target = $region17
    $region16: #{model_forward.1} parent=1 // pred_region
      _
    $region17: #{model_forward.1} parent=1 // pred_fallthru
      _
    // Predicated region
    $region18: #{model_forward.1} parent=1 // pred_check
      _
    $region19: #{model_forward.1} parent=1 // pred_check_branch
      %32 = sbr.rel (0) target = $region21
    $region20: #{model_forward.1} parent=1 // pred_region
      _
    $region21: #{model_forward.1} parent=1 // pred_fallthru
      _
    // Predicated region
    $region22: #{model_forward.1} parent=1 // pred_check
      _
    $region23: #{model_forward.1} parent=1 // pred_check_branch
      %34 = sbr.rel (0) target = $region25
    $region24: #{model_forward.1} parent=1 // pred_region
      _
    $region25: #{model_forward.1} parent=1 // pred_fallthru
      _
    // Predicated region
    $region26: #{model_forward.1} parent=1 // pred_check
      _
    $region27: #{model_forward.1} parent=1 // pred_check_branch
      %36 = sbr.rel (0) target = $region29
    $region28: #{model_forward.1} parent=1 // pred_region
      _
    $region29: #{model_forward.1} parent=1 // pred_fallthru
      _
    // Predicated region
    $region30: #{model_forward.1} parent=1 // pred_check
      _
    $region31: #{model_forward.1} parent=1 // pred_check_branch
      %38 = sbr.rel (0) target = $region33
    $region32: #{model_forward.1} parent=1 // pred_region
      _
    $region33: #{model_forward.1} parent=1 // pred_fallthru
      _
    // Predicated region
    $region34: #{model_forward.1} parent=1 // pred_check
      _
    $region35: #{model_forward.1} parent=1 // pred_check_branch
      %40 = sbr.rel (0) target = $region37
    $region36: #{model_forward.1} parent=1 // pred_region
      _
    $region37: #{model_forward.1} parent=1 // pred_fallthru
      _
    // Predicated region
    $region38: #{model_forward.1} parent=1 // pred_check
      _
    $region39: #{model_forward.1} parent=1 // pred_check_branch
      %42 = sbr.rel (0) target = $region41
    $region40: #{model_forward.1} parent=1 // pred_region
      _
    $region41: #{model_forward.1} parent=1 // pred_fallthru
      _
    // Predicated region
    $region42: #{model_forward.1} parent=1 // pred_check
      _
    $region43: #{model_forward.1} parent=1 // pred_check_branch
      %44 = sbr.rel (0) target = $region45
    $region44: #{model_forward.1} parent=1 // pred_region
      _
    $region45: #{model_forward.1} parent=1 // pred_fallthru
      _
    // Predicated region
    $region46: #{model_forward.1} parent=1 // pred_check
      _
    $region47: #{model_forward.1} parent=1 // pred_check_branch
      %46 = sbr.rel (0) target = $region49
    $region48: #{model_forward.1} parent=1 // pred_region
      _
    $region49: #{model_forward.1} parent=1 // pred_fallthru
      _
    // Predicated region
    $region50: #{model_forward.1} parent=1 // pred_check
      _
    $region51: #{model_forward.1} parent=1 // pred_check_branch
      %48 = sbr.rel (0) target = $region53
    $region52: #{model_forward.1} parent=1 // pred_region
      _
    $region53: #{model_forward.1} parent=1 // pred_fallthru
      _
    %v49 = vld [vmem:[%s0] sm:$0xff]
    %v50 = vld [vmem:[%s0 + $0x8] sm:$0xff]
    %v51 = vld [vmem:[%s0 + $0x10] sm:$0xff]
    %v52 = vld [vmem:[%s0 + $0x18] sm:$0xff]
    %v53 = vld [vmem:[%s0 + $0x20] sm:$0xff]
    %v54 = vld [vmem:[%s0 + $0x28] sm:$0xff]
    %v55 = vld [vmem:[%s0 + $0x30] sm:$0xff]
    %v56 = vld [vmem:[%s0 + $0x38] sm:$0xff]
    %v57 = vld [vmem:[%s1] sm:$0xf]
    %v58 = vld [vmem:[%s2] sm:$0x1]
    %v60 = vlaneseq
    %v61 = vshrl.u32 %v60, 7
    %v62 = vsub.s32 0, %v61
    %v63 = vrot.slane %v58, %v62
    %vm65 = vcmask 31744
    %v67 = vsel %vm65, %v49, 0
    %v70 = vsel %vm65, %v50, 0
    %v73 = vsel %vm65, %v51, 0
    %v76 = vsel %vm65, %v52, 0
    %v79 = vsel %vm65, %v53, 0
    %v82 = vsel %vm65, %v54, 0
    %v85 = vsel %vm65, %v55, 0
    %v88 = vsel %vm65, %v56, 0
    %vm90 = vcmask 1043456
    %v92 = vsel %vm90, %v57, 0
    %94 = vmatprep.subr.mxu0 0.0
    %95 = vmatpush1.msra.mxu0 0.0
    %96 = vmatprep.subr.mxu0 0.0
    %97 = vmatpush1.msra.mxu0 0.0
    %98 = vmatprep.subr.mxu0 0.0
    %99 = vmatpush1.msra.mxu0 0.0
    %100 = vmatprep.subr.mxu0 0.0
    %101 = vmatpush1.msra.mxu0 0.0
    %102 = vmatprep.subr.mxu0 0.0
    %103 = vmatpush1.msra.mxu0 0.0
    %104 = vmatprep.subr.mxu0 0.0
    %105 = vmatpush1.msra.mxu0 0.0
    %106 = vmatprep.subr.mxu0 0.0
    %107 = vmatpush1.msra.mxu0 0.0
    %108 = vmatprep.subr.mxu0 0.0
    %109 = vmatpush1.msra.mxu0 0.0
    %110 = vmatprep.subr.mxu0 0.0
    %111 = vmatpush1.msra.mxu0 0.0
    %112 = vmatprep.subr.mxu0 0.0
    %113 = vmatpush1.msra.mxu0 0.0
    %114 = vmatprep.subr.mxu0 0.0
    %115 = vmatpush1.msra.mxu0 0.0
    %116 = vmatprep.subr.mxu0 0.0
    %117 = vmatpush1.msra.mxu0 0.0
    %118 = vmatprep.subr.mxu0 0.0
    %119 = vmatpush1.msra.mxu0 0.0
    %120 = vmatprep.subr.mxu0 0.0
    %121 = vmatpush1.msra.mxu0 0.0
    %122 = vmatprep.subr.mxu0 0.0
    %123 = vmatpush1.msra.mxu0 0.0
    %124 = vmatprep.subr.mxu0 0.0
    %125 = vmatpush1.msra.mxu0 %v92
    %126 = vmatprep.subr.mxu0 0.0
    %127 = vmatpush2.msra.mxu0 0.0
    %128 = vmatprep.subr.mxu0 0.0
    %129 = vmatpush2.msra.mxu0 0.0
    %130 = vmatprep.subr.mxu0 0.0
    %131 = vmatpush2.msra.mxu0 0.0
    %132 = vmatprep.subr.mxu0 0.0
    %133 = vmatpush2.msra.mxu0 0.0
    %134 = vmatprep.subr.mxu0 0.0
    %135 = vmatpush2.msra.mxu0 0.0
    %136 = vmatprep.subr.mxu0 0.0
    %137 = vmatpush2.msra.mxu0 0.0
    %138 = vmatprep.subr.mxu0 0.0
    %139 = vmatpush2.msra.mxu0 0.0
    %140 = vmatprep.subr.mxu0 0.0
    %141 = vmatpush2.msra.mxu0 0.0
    %142 = vmatprep.subr.mxu0 0.0
    %143 = vmatpush2.msra.mxu0 0.0
    %144 = vmatprep.subr.mxu0 0.0
    %145 = vmatpush2.msra.mxu0 0.0
    %146 = vmatprep.subr.mxu0 0.0
    %147 = vmatpush2.msra.mxu0 0.0
    %148 = vmatprep.subr.mxu0 0.0
    %149 = vmatpush2.msra.mxu0 0.0
    %150 = vmatprep.subr.mxu0 0.0
    %151 = vmatpush2.msra.mxu0 0.0
    %152 = vmatprep.subr.mxu0 0.0
    %153 = vmatpush2.msra.mxu0 0.0
    %154 = vmatprep.subr.mxu0 0.0
    %155 = vmatpush2.msra.mxu0 0.0
    %156 = vmatprep.subr.mxu0 0.0
    %157 = vmatpush2.msra.mxu0 0.0
    %158 = vmatprep.mubr.f32.mxu0 0.0
    %159 = vmatmul.mubr.f32.gmra.mxu0 %v67
    %v160 = vpop.f32.mrf.mxu0
    %v161 = vadd.f32 %v63, %v160
    %v162 = vpop.f32.mrf.mxu0
    %163 = vmatprep.mubr.f32.mxu0 0.0
    %164 = vmatmul.mubr.f32.gmra.mxu0 %v70
    %v165 = vpop.f32.mrf.mxu0
    %v166 = vadd.f32 %v63, %v165
    %v167 = vpop.f32.mrf.mxu0
    %168 = vmatprep.mubr.f32.mxu0 0.0
    %169 = vmatmul.mubr.f32.gmra.mxu0 %v73
    %v170 = vpop.f32.mrf.mxu0
    %v171 = vadd.f32 %v63, %v170
    %v172 = vpop.f32.mrf.mxu0
    %173 = vmatprep.mubr.f32.mxu0 0.0
    %174 = vmatmul.mubr.f32.gmra.mxu0 %v76
    %v175 = vpop.f32.mrf.mxu0
    %v176 = vadd.f32 %v63, %v175
    %v177 = vpop.f32.mrf.mxu0
    %178 = vmatprep.mubr.f32.mxu0 0.0
    %179 = vmatmul.mubr.f32.gmra.mxu0 %v79
    %v180 = vpop.f32.mrf.mxu0
    %v181 = vadd.f32 %v63, %v180
    %v182 = vpop.f32.mrf.mxu0
    %183 = vmatprep.mubr.f32.mxu0 0.0
    %184 = vmatmul.mubr.f32.gmra.mxu0 %v82
    %v185 = vpop.f32.mrf.mxu0
    %v186 = vadd.f32 %v63, %v185
    %v187 = vpop.f32.mrf.mxu0
    %188 = vmatprep.mubr.f32.mxu0 0.0
    %189 = vmatmul.mubr.f32.gmra.mxu0 %v85
    %v190 = vpop.f32.mrf.mxu0
    %v191 = vadd.f32 %v63, %v190
    %v192 = vpop.f32.mrf.mxu0
    %193 = vmatprep.mubr.f32.mxu0 0.0
    %194 = vmatmul.mubr.f32.gmra.mxu0 %v88
    %v195 = vpop.f32.mrf.mxu0
    %v196 = vadd.f32 %v63, %v195
    %v197 = vpop.f32.mrf.mxu0
    %198 = vdwg.mxu0
    %vm199 = vcmask 785408
    %200 = vst.msk [vmem:[#allocation2] sm:$0xff] %vm199, %v161
    %201 = vst.msk [vmem:[#allocation2 + $0x8] sm:$0xff] %vm199, %v166
    %202 = vst.msk [vmem:[#allocation2 + $0x10] sm:$0xff] %vm199, %v171
    %203 = vst.msk [vmem:[#allocation2 + $0x18] sm:$0xff] %vm199, %v176
    %204 = vst.msk [vmem:[#allocation2 + $0x20] sm:$0xff] %vm199, %v181
    %205 = vst.msk [vmem:[#allocation2 + $0x28] sm:$0xff] %vm199, %v186
    %206 = vst.msk [vmem:[#allocation2 + $0x30] sm:$0xff] %vm199, %v191
    %207 = vst.msk [vmem:[#allocation2 + $0x38] sm:$0xff] %vm199, %v196
    %v208 = vld [vmem:[%s3] sm:$0xff]
    %v209 = vld [vmem:[%s3 + $0x8] sm:$0xff]
    %v210 = vld [vmem:[%s3 + $0x10] sm:$0xff]
    %v211 = vld [vmem:[%s3 + $0x18] sm:$0xff]
    %v212 = vld [vmem:[%s4] sm:$0x1]
    %v214 = vlaneseq
    %v215 = vshrl.u32 %v214, 7
    %v216 = vsub.s32 0, %v215
    %v217 = vrot.slane %v212, %v216
    %vm219 = vcmask 261120
    %v221 = vsel %vm219, 0.0, 0
    %223 = vmatprep.subr.mxu0 0.0
    %224 = vmatpush1.msra.mxu0 0.0
    %225 = vmatprep.subr.mxu0 0.0
    %226 = vmatpush1.msra.mxu0 0.0
    %227 = vmatprep.subr.mxu0 0.0
    %228 = vmatpush1.msra.mxu0 0.0
    %229 = vmatprep.subr.mxu0 0.0
    %230 = vmatpush1.msra.mxu0 0.0
    %231 = vmatprep.subr.mxu0 0.0
    %232 = vmatpush1.msra.mxu0 0.0
    %233 = vmatprep.subr.mxu0 0.0
    %234 = vmatpush1.msra.mxu0 0.0
    %235 = vmatprep.subr.mxu0 0.0
    %236 = vmatpush1.msra.mxu0 0.0
    %237 = vmatprep.subr.mxu0 0.0
    %238 = vmatpush1.msra.mxu0 0.0
    %239 = vmatprep.subr.mxu0 0.0
    %240 = vmatpush1.msra.mxu0 0.0
    %241 = vmatprep.subr.mxu0 0.0
    %242 = vmatpush1.msra.mxu0 0.0
    %243 = vmatprep.subr.mxu0 0.0
    %244 = vmatpush1.msra.mxu0 0.0
    %245 = vmatprep.subr.mxu0 0.0
    %246 = vmatpush1.msra.mxu0 0.0
    %247 = vmatprep.subr.mxu0 0.0
    %248 = vmatpush1.msra.mxu0 %v211
    %249 = vmatprep.subr.mxu0 0.0
    %250 = vmatpush1.msra.mxu0 %v210
    %251 = vmatprep.subr.mxu0 0.0
    %252 = vmatpush1.msra.mxu0 %v209
    %253 = vmatprep.subr.mxu0 0.0
    %254 = vmatpush1.msra.mxu0 %v208
    %255 = vmatprep.subr.mxu0 0.0
    %256 = vmatpush2.msra.mxu0 0.0
    %257 = vmatprep.subr.mxu0 0.0
    %258 = vmatpush2.msra.mxu0 0.0
    %259 = vmatprep.subr.mxu0 0.0
    %260 = vmatpush2.msra.mxu0 0.0
    %261 = vmatprep.subr.mxu0 0.0
    %262 = vmatpush2.msra.mxu0 0.0
    %263 = vmatprep.subr.mxu0 0.0
    %264 = vmatpush2.msra.mxu0 0.0
    %265 = vmatprep.subr.mxu0 0.0
    %266 = vmatpush2.msra.mxu0 0.0
    %267 = vmatprep.subr.mxu0 0.0
    %268 = vmatpush2.msra.mxu0 0.0
    %269 = vmatprep.subr.mxu0 0.0
    %270 = vmatpush2.msra.mxu0 0.0
    %271 = vmatprep.subr.mxu0 0.0
    %272 = vmatpush2.msra.mxu0 0.0
    %273 = vmatprep.subr.mxu0 0.0
    %274 = vmatpush2.msra.mxu0 0.0
    %275 = vmatprep.subr.mxu0 0.0
    %276 = vmatpush2.msra.mxu0 0.0
    %277 = vmatprep.subr.mxu0 0.0
    %278 = vmatpush2.msra.mxu0 0.0
    %279 = vmatprep.subr.mxu0 0.0
    %280 = vmatpush2.msra.mxu0 0.0
    %281 = vmatprep.subr.mxu0 0.0
    %282 = vmatpush2.msra.mxu0 0.0
    %283 = vmatprep.subr.mxu0 0.0
    %284 = vmatpush2.msra.mxu0 0.0
    %285 = vmatprep.subr.mxu0 0.0
    %286 = vmatpush2.msra.mxu0 0.0
    %287 = vmatprep.mubr.f32.mxu0 0.0
    %288 = vmatmul.mubr.f32.gmra.mxu0 %v221
    %v289 = vpop.f32.mrf.mxu0
    %v290 = vadd.f32 %v217, %v289
    %v291 = vpop.f32.mrf.mxu0
    %292 = vdwg.mxu0
    %v293 = vld [vmem:[#allocation2] sm:$0xff]
    %v294 = vadd.f32 %v293, %v290
    %v295 = vxor.u32 %v294, 2147483648
    %v296 = vmul.f32 %v295, 1.442695
    %v297 = vpow.pop %v296
    %v298 = vadd.f32 %v297, 1.0
    %v299 = vrcp.pop %v298
    %v300 = vmul.f32 1.0, %v299
    %302 = vrot.lane.b32.xlu0 %v290, 64
    %v303 = vpop.permute.xlu0 %302
    %v305 = vmul.f32 %v300, %v303
    %307 = vrot.lane.b32.xlu0 %v305, 64
    %v308 = vpop.permute.xlu0 %307
    %v310 = vadd.f32 %v293, %v308
    %v311 = vtanh.pop %v310
    %v312 = vsub.f32 1.0, %v300
    %314 = vrot.lane.b32.xlu0 %v311, 96
    %v315 = vpop.permute.xlu0 %314
    %v317 = vmul.f32 %v312, %v315
    %v318 = vmul.f32 %v300, 0.0
    %v319 = vadd.f32 %v317, %v318
    %321 = vrot.lane.b32.xlu0 %v319, 96
    %v322 = vpop.permute.xlu0 %321
    %324 = vst.msk [vmem:[#allocation3] sm:$0xff] %vm219, %v322
    %v325 = vsel %vm219, %v322, 0
    %327 = vmatprep.subr.mxu0 0.0
    %328 = vmatpush1.msra.mxu0 0.0
    %329 = vmatprep.subr.mxu0 0.0
    %330 = vmatpush1.msra.mxu0 0.0
    %331 = vmatprep.subr.mxu0 0.0
    %332 = vmatpush1.msra.mxu0 0.0
    %333 = vmatprep.subr.mxu0 0.0
    %334 = vmatpush1.msra.mxu0 0.0
    %335 = vmatprep.subr.mxu0 0.0
    %336 = vmatpush1.msra.mxu0 0.0
    %337 = vmatprep.subr.mxu0 0.0
    %338 = vmatpush1.msra.mxu0 0.0
    %339 = vmatprep.subr.mxu0 0.0
    %340 = vmatpush1.msra.mxu0 0.0
    %341 = vmatprep.subr.mxu0 0.0
    %342 = vmatpush1.msra.mxu0 0.0
    %343 = vmatprep.subr.mxu0 0.0
    %344 = vmatpush1.msra.mxu0 0.0
    %345 = vmatprep.subr.mxu0 0.0
    %346 = vmatpush1.msra.mxu0 0.0
    %347 = vmatprep.subr.mxu0 0.0
    %348 = vmatpush1.msra.mxu0 0.0
    %349 = vmatprep.subr.mxu0 0.0
    %350 = vmatpush1.msra.mxu0 0.0
    %351 = vmatprep.subr.mxu0 0.0
    %352 = vmatpush1.msra.mxu0 %v211
    %353 = vmatprep.subr.mxu0 0.0
    %354 = vmatpush1.msra.mxu0 %v210
    %355 = vmatprep.subr.mxu0 0.0
    %356 = vmatpush1.msra.mxu0 %v209
    %357 = vmatprep.subr.mxu0 0.0
    %358 = vmatpush1.msra.mxu0 %v208
    %359 = vmatprep.subr.mxu0 0.0
    %360 = vmatpush2.msra.mxu0 0.0
    %361 = vmatprep.subr.mxu0 0.0
    %362 = vmatpush2.msra.mxu0 0.0
    %363 = vmatprep.subr.mxu0 0.0
    %364 = vmatpush2.msra.mxu0 0.0
    %365 = vmatprep.subr.mxu0 0.0
    %366 = vmatpush2.msra.mxu0 0.0
    %367 = vmatprep.subr.mxu0 0.0
    %368 = vmatpush2.msra.mxu0 0.0
    %369 = vmatprep.subr.mxu0 0.0
    %370 = vmatpush2.msra.mxu0 0.0
    %371 = vmatprep.subr.mxu0 0.0
    %372 = vmatpush2.msra.mxu0 0.0
    %373 = vmatprep.subr.mxu0 0.0
    %374 = vmatpush2.msra.mxu0 0.0
    %375 = vmatprep.subr.mxu0 0.0
    %376 = vmatpush2.msra.mxu0 0.0
    %377 = vmatprep.subr.mxu0 0.0
    %378 = vmatpush2.msra.mxu0 0.0
    %379 = vmatprep.subr.mxu0 0.0
    %380 = vmatpush2.msra.mxu0 0.0
    %381 = vmatprep.subr.mxu0 0.0
    %382 = vmatpush2.msra.mxu0 0.0
    %383 = vmatprep.subr.mxu0 0.0
    %384 = vmatpush2.msra.mxu0 0.0
    %385 = vmatprep.subr.mxu0 0.0
    %386 = vmatpush2.msra.mxu0 0.0
    %387 = vmatprep.subr.mxu0 0.0
    %388 = vmatpush2.msra.mxu0 0.0
    %389 = vmatprep.subr.mxu0 0.0
    %390 = vmatpush2.msra.mxu0 0.0
    %391 = vmatprep.mubr.f32.mxu0 0.0
    %392 = vmatmul.mubr.f32.gmra.mxu0 %v325
    %v393 = vpop.f32.mrf.mxu0
    %v394 = vadd.f32 %v217, %v393
    %v395 = vpop.f32.mrf.mxu0
    %396 = vdwg.mxu0
    %s397 = scalar_lea.vmem [#allocation2], 8
    %v398 = vld [vmem:[%s397] sm:$0xff]
    %v399 = vadd.f32 %v398, %v394
    %v400 = vxor.u32 %v399, 2147483648
    %v401 = vmul.f32 %v400, 1.442695
    %v402 = vpow.pop %v401
    %v403 = vadd.f32 %v402, 1.0
    %v404 = vrcp.pop %v403
    %v405 = vmul.f32 1.0, %v404
    %407 = vrot.lane.b32.xlu0 %v394, 64
    %v408 = vpop.permute.xlu0 %407
    %v410 = vmul.f32 %v405, %v408
    %412 = vrot.lane.b32.xlu0 %v410, 64
    %v413 = vpop.permute.xlu0 %412
    %v415 = vadd.f32 %v398, %v413
    %v416 = vtanh.pop %v415
    %v417 = vsub.f32 1.0, %v405
    %419 = vrot.lane.b32.xlu0 %v416, 96
    %v420 = vpop.permute.xlu0 %419
    %v422 = vmul.f32 %v417, %v420
    %v423 = vmul.f32 %v405, %v319
    %v424 = vadd.f32 %v422, %v423
    %426 = vrot.lane.b32.xlu0 %v424, 96
    %v427 = vpop.permute.xlu0 %426
    %s429 = scalar_lea.vmem [#allocation3], 8
    %430 = vst.msk [vmem:[%s429] sm:$0xff] %vm219, %v427
    %v431 = vsel %vm219, %v427, 0
    %433 = vmatprep.subr.mxu0 0.0
    %434 = vmatpush1.msra.mxu0 0.0
    %435 = vmatprep.subr.mxu0 0.0
    %436 = vmatpush1.msra.mxu0 0.0
    %437 = vmatprep.subr.mxu0 0.0
    %438 = vmatpush1.msra.mxu0 0.0
    %439 = vmatprep.subr.mxu0 0.0
    %440 = vmatpush1.msra.mxu0 0.0
    %441 = vmatprep.subr.mxu0 0.0
    %442 = vmatpush1.msra.mxu0 0.0
    %443 = vmatprep.subr.mxu0 0.0
    %444 = vmatpush1.msra.mxu0 0.0
    %445 = vmatprep.subr.mxu0 0.0
    %446 = vmatpush1.msra.mxu0 0.0
    %447 = vmatprep.subr.mxu0 0.0
    %448 = vmatpush1.msra.mxu0 0.0
    %449 = vmatprep.subr.mxu0 0.0
    %450 = vmatpush1.msra.mxu0 0.0
    %451 = vmatprep.subr.mxu0 0.0
    %452 = vmatpush1.msra.mxu0 0.0
    %453 = vmatprep.subr.mxu0 0.0
    %454 = vmatpush1.msra.mxu0 0.0
    %455 = vmatprep.subr.mxu0 0.0
    %456 = vmatpush1.msra.mxu0 0.0
    %457 = vmatprep.subr.mxu0 0.0
    %458 = vmatpush1.msra.mxu0 %v211
    %459 = vmatprep.subr.mxu0 0.0
    %460 = vmatpush1.msra.mxu0 %v210
    %461 = vmatprep.subr.mxu0 0.0
    %462 = vmatpush1.msra.mxu0 %v209
    %463 = vmatprep.subr.mxu0 0.0
    %464 = vmatpush1.msra.mxu0 %v208
    %465 = vmatprep.subr.mxu0 0.0
    %466 = vmatpush2.msra.mxu0 0.0
    %467 = vmatprep.subr.mxu0 0.0
    %468 = vmatpush2.msra.mxu0 0.0
    %469 = vmatprep.subr.mxu0 0.0
    %470 = vmatpush2.msra.mxu0 0.0
    %471 = vmatprep.subr.mxu0 0.0
    %472 = vmatpush2.msra.mxu0 0.0
    %473 = vmatprep.subr.mxu0 0.0
    %474 = vmatpush2.msra.mxu0 0.0
    %475 = vmatprep.subr.mxu0 0.0
    %476 = vmatpush2.msra.mxu0 0.0
    %477 = vmatprep.subr.mxu0 0.0
    %478 = vmatpush2.msra.mxu0 0.0
    %479 = vmatprep.subr.mxu0 0.0
    %480 = vmatpush2.msra.mxu0 0.0
    %481 = vmatprep.subr.mxu0 0.0
    %482 = vmatpush2.msra.mxu0 0.0
    %483 = vmatprep.subr.mxu0 0.0
    %484 = vmatpush2.msra.mxu0 0.0
    %485 = vmatprep.subr.mxu0 0.0
    %486 = vmatpush2.msra.mxu0 0.0
    %487 = vmatprep.subr.mxu0 0.0
    %488 = vmatpush2.msra.mxu0 0.0
    %489 = vmatprep.subr.mxu0 0.0
    %490 = vmatpush2.msra.mxu0 0.0
    %491 = vmatprep.subr.mxu0 0.0
    %492 = vmatpush2.msra.mxu0 0.0
    %493 = vmatprep.subr.mxu0 0.0
    %494 = vmatpush2.msra.mxu0 0.0
    %495 = vmatprep.subr.mxu0 0.0
    %496 = vmatpush2.msra.mxu0 0.0
    %497 = vmatprep.mubr.f32.mxu0 0.0
    %498 = vmatmul.mubr.f32.gmra.mxu0 %v431
    %v499 = vpop.f32.mrf.mxu0
    %v500 = vadd.f32 %v217, %v499
    %v501 = vpop.f32.mrf.mxu0
    %502 = vdwg.mxu0
    %s503 = scalar_lea.vmem [#allocation2], 16
    %v504 = vld [vmem:[%s503] sm:$0xff]
    %v505 = vadd.f32 %v504, %v500
    %v506 = vxor.u32 %v505, 2147483648
    %v507 = vmul.f32 %v506, 1.442695
    %v508 = vpow.pop %v507
    %v509 = vadd.f32 %v508, 1.0
    %v510 = vrcp.pop %v509
    %v511 = vmul.f32 1.0, %v510
    %513 = vrot.lane.b32.xlu0 %v500, 64
    %v514 = vpop.permute.xlu0 %513
    %v516 = vmul.f32 %v511, %v514
    %518 = vrot.lane.b32.xlu0 %v516, 64
    %v519 = vpop.permute.xlu0 %518
    %v521 = vadd.f32 %v504, %v519
    %v522 = vtanh.pop %v521
    %v523 = vsub.f32 1.0, %v511
    %525 = vrot.lane.b32.xlu0 %v522, 96
    %v526 = vpop.permute.xlu0 %525
    %v528 = vmul.f32 %v523, %v526
    %v529 = vmul.f32 %v511, %v424
    %v530 = vadd.f32 %v528, %v529
    %532 = vrot.lane.b32.xlu0 %v530, 96
    %v533 = vpop.permute.xlu0 %532
    %s535 = scalar_lea.vmem [#allocation3], 16
    %536 = vst.msk [vmem:[%s535] sm:$0xff] %vm219, %v533
    %v537 = vsel %vm219, %v533, 0
    %539 = vmatprep.subr.mxu0 0.0
    %540 = vmatpush1.msra.mxu0 0.0
    %541 = vmatprep.subr.mxu0 0.0
    %542 = vmatpush1.msra.mxu0 0.0
    %543 = vmatprep.subr.mxu0 0.0
    %544 = vmatpush1.msra.mxu0 0.0
    %545 = vmatprep.subr.mxu0 0.0
    %546 = vmatpush1.msra.mxu0 0.0
    %547 = vmatprep.subr.mxu0 0.0
    %548 = vmatpush1.msra.mxu0 0.0
    %549 = vmatprep.subr.mxu0 0.0
    %550 = vmatpush1.msra.mxu0 0.0
    %551 = vmatprep.subr.mxu0 0.0
    %552 = vmatpush1.msra.mxu0 0.0
    %553 = vmatprep.subr.mxu0 0.0
    %554 = vmatpush1.msra.mxu0 0.0
    %555 = vmatprep.subr.mxu0 0.0
    %556 = vmatpush1.msra.mxu0 0.0
    %557 = vmatprep.subr.mxu0 0.0
    %558 = vmatpush1.msra.mxu0 0.0
    %559 = vmatprep.subr.mxu0 0.0
    %560 = vmatpush1.msra.mxu0 0.0
    %561 = vmatprep.subr.mxu0 0.0
    %562 = vmatpush1.msra.mxu0 0.0
    %563 = vmatprep.subr.mxu0 0.0
    %564 = vmatpush1.msra.mxu0 %v211
    %565 = vmatprep.subr.mxu0 0.0
    %566 = vmatpush1.msra.mxu0 %v210
    %567 = vmatprep.subr.mxu0 0.0
    %568 = vmatpush1.msra.mxu0 %v209
    %569 = vmatprep.subr.mxu0 0.0
    %570 = vmatpush1.msra.mxu0 %v208
    %571 = vmatprep.subr.mxu0 0.0
    %572 = vmatpush2.msra.mxu0 0.0
    %573 = vmatprep.subr.mxu0 0.0
    %574 = vmatpush2.msra.mxu0 0.0
    %575 = vmatprep.subr.mxu0 0.0
    %576 = vmatpush2.msra.mxu0 0.0
    %577 = vmatprep.subr.mxu0 0.0
    %578 = vmatpush2.msra.mxu0 0.0
    %579 = vmatprep.subr.mxu0 0.0
    %580 = vmatpush2.msra.mxu0 0.0
    %581 = vmatprep.subr.mxu0 0.0
    %582 = vmatpush2.msra.mxu0 0.0
    %583 = vmatprep.subr.mxu0 0.0
    %584 = vmatpush2.msra.mxu0 0.0
    %585 = vmatprep.subr.mxu0 0.0
    %586 = vmatpush2.msra.mxu0 0.0
    %587 = vmatprep.subr.mxu0 0.0
    %588 = vmatpush2.msra.mxu0 0.0
    %589 = vmatprep.subr.mxu0 0.0
    %590 = vmatpush2.msra.mxu0 0.0
    %591 = vmatprep.subr.mxu0 0.0
    %592 = vmatpush2.msra.mxu0 0.0
    %593 = vmatprep.subr.mxu0 0.0
    %594 = vmatpush2.msra.mxu0 0.0
    %595 = vmatprep.subr.mxu0 0.0
    %596 = vmatpush2.msra.mxu0 0.0
    %597 = vmatprep.subr.mxu0 0.0
    %598 = vmatpush2.msra.mxu0 0.0
    %599 = vmatprep.subr.mxu0 0.0
    %600 = vmatpush2.msra.mxu0 0.0
    %601 = vmatprep.subr.mxu0 0.0
    %602 = vmatpush2.msra.mxu0 0.0
    %603 = vmatprep.mubr.f32.mxu0 0.0
    %604 = vmatmul.mubr.f32.gmra.mxu0 %v537
    %v605 = vpop.f32.mrf.mxu0
    %v606 = vadd.f32 %v217, %v605
    %v607 = vpop.f32.mrf.mxu0
    %608 = vdwg.mxu0
    %s609 = scalar_lea.vmem [#allocation2], 24
    %v610 = vld [vmem:[%s609] sm:$0xff]
    %v611 = vadd.f32 %v610, %v606
    %v612 = vxor.u32 %v611, 2147483648
    %v613 = vmul.f32 %v612, 1.442695
    %v614 = vpow.pop %v613
    %v615 = vadd.f32 %v614, 1.0
    %v616 = vrcp.pop %v615
    %v617 = vmul.f32 1.0, %v616
    %619 = vrot.lane.b32.xlu0 %v606, 64
    %v620 = vpop.permute.xlu0 %619
    %v622 = vmul.f32 %v617, %v620
    %624 = vrot.lane.b32.xlu0 %v622, 64
    %v625 = vpop.permute.xlu0 %624
    %v627 = vadd.f32 %v610, %v625
    %v628 = vtanh.pop %v627
    %v629 = vsub.f32 1.0, %v617
    %631 = vrot.lane.b32.xlu0 %v628, 96
    %v632 = vpop.permute.xlu0 %631
    %v634 = vmul.f32 %v629, %v632
    %v635 = vmul.f32 %v617, %v530
    %v636 = vadd.f32 %v634, %v635
    %638 = vrot.lane.b32.xlu0 %v636, 96
    %v639 = vpop.permute.xlu0 %638
    %s641 = scalar_lea.vmem [#allocation3], 24
    %642 = vst.msk [vmem:[%s641] sm:$0xff] %vm219, %v639
    %v643 = vsel %vm219, %v639, 0
    %645 = vmatprep.subr.mxu0 0.0
    %646 = vmatpush1.msra.mxu0 0.0
    %647 = vmatprep.subr.mxu0 0.0
    %648 = vmatpush1.msra.mxu0 0.0
    %649 = vmatprep.subr.mxu0 0.0
    %650 = vmatpush1.msra.mxu0 0.0
    %651 = vmatprep.subr.mxu0 0.0
    %652 = vmatpush1.msra.mxu0 0.0
    %653 = vmatprep.subr.mxu0 0.0
    %654 = vmatpush1.msra.mxu0 0.0
    %655 = vmatprep.subr.mxu0 0.0
    %656 = vmatpush1.msra.mxu0 0.0
    %657 = vmatprep.subr.mxu0 0.0
    %658 = vmatpush1.msra.mxu0 0.0
    %659 = vmatprep.subr.mxu0 0.0
    %660 = vmatpush1.msra.mxu0 0.0
    %661 = vmatprep.subr.mxu0 0.0
    %662 = vmatpush1.msra.mxu0 0.0
    %663 = vmatprep.subr.mxu0 0.0
    %664 = vmatpush1.msra.mxu0 0.0
    %665 = vmatprep.subr.mxu0 0.0
    %666 = vmatpush1.msra.mxu0 0.0
    %667 = vmatprep.subr.mxu0 0.0
    %668 = vmatpush1.msra.mxu0 0.0
    %669 = vmatprep.subr.mxu0 0.0
    %670 = vmatpush1.msra.mxu0 %v211
    %671 = vmatprep.subr.mxu0 0.0
    %672 = vmatpush1.msra.mxu0 %v210
    %673 = vmatprep.subr.mxu0 0.0
    %674 = vmatpush1.msra.mxu0 %v209
    %675 = vmatprep.subr.mxu0 0.0
    %676 = vmatpush1.msra.mxu0 %v208
    %677 = vmatprep.subr.mxu0 0.0
    %678 = vmatpush2.msra.mxu0 0.0
    %679 = vmatprep.subr.mxu0 0.0
    %680 = vmatpush2.msra.mxu0 0.0
    %681 = vmatprep.subr.mxu0 0.0
    %682 = vmatpush2.msra.mxu0 0.0
    %683 = vmatprep.subr.mxu0 0.0
    %684 = vmatpush2.msra.mxu0 0.0
    %685 = vmatprep.subr.mxu0 0.0
    %686 = vmatpush2.msra.mxu0 0.0
    %687 = vmatprep.subr.mxu0 0.0
    %688 = vmatpush2.msra.mxu0 0.0
    %689 = vmatprep.subr.mxu0 0.0
    %690 = vmatpush2.msra.mxu0 0.0
    %691 = vmatprep.subr.mxu0 0.0
    %692 = vmatpush2.msra.mxu0 0.0
    %693 = vmatprep.subr.mxu0 0.0
    %694 = vmatpush2.msra.mxu0 0.0
    %695 = vmatprep.subr.mxu0 0.0
    %696 = vmatpush2.msra.mxu0 0.0
    %697 = vmatprep.subr.mxu0 0.0
    %698 = vmatpush2.msra.mxu0 0.0
    %699 = vmatprep.subr.mxu0 0.0
    %700 = vmatpush2.msra.mxu0 0.0
    %701 = vmatprep.subr.mxu0 0.0
    %702 = vmatpush2.msra.mxu0 0.0
    %703 = vmatprep.subr.mxu0 0.0
    %704 = vmatpush2.msra.mxu0 0.0
    %705 = vmatprep.subr.mxu0 0.0
    %706 = vmatpush2.msra.mxu0 0.0
    %707 = vmatprep.subr.mxu0 0.0
    %708 = vmatpush2.msra.mxu0 0.0
    %709 = vmatprep.mubr.f32.mxu0 0.0
    %710 = vmatmul.mubr.f32.gmra.mxu0 %v643
    %v711 = vpop.f32.mrf.mxu0
    %v712 = vadd.f32 %v217, %v711
    %v713 = vpop.f32.mrf.mxu0
    %714 = vdwg.mxu0
    %s715 = scalar_lea.vmem [#allocation2], 32
    %v716 = vld [vmem:[%s715] sm:$0xff]
    %v717 = vadd.f32 %v716, %v712
    %v718 = vxor.u32 %v717, 2147483648
    %v719 = vmul.f32 %v718, 1.442695
    %v720 = vpow.pop %v719
    %v721 = vadd.f32 %v720, 1.0
    %v722 = vrcp.pop %v721
    %v723 = vmul.f32 1.0, %v722
    %725 = vrot.lane.b32.xlu0 %v712, 64
    %v726 = vpop.permute.xlu0 %725
    %v728 = vmul.f32 %v723, %v726
    %730 = vrot.lane.b32.xlu0 %v728, 64
    %v731 = vpop.permute.xlu0 %730
    %v733 = vadd.f32 %v716, %v731
    %v734 = vtanh.pop %v733
    %v735 = vsub.f32 1.0, %v723
    %737 = vrot.lane.b32.xlu0 %v734, 96
    %v738 = vpop.permute.xlu0 %737
    %v740 = vmul.f32 %v735, %v738
    %v741 = vmul.f32 %v723, %v636
    %v742 = vadd.f32 %v740, %v741
    %744 = vrot.lane.b32.xlu0 %v742, 96
    %v745 = vpop.permute.xlu0 %744
    %s747 = scalar_lea.vmem [#allocation3], 32
    %748 = vst.msk [vmem:[%s747] sm:$0xff] %vm219, %v745
    %v749 = vsel %vm219, %v745, 0
    %751 = vmatprep.subr.mxu0 0.0
    %752 = vmatpush1.msra.mxu0 0.0
    %753 = vmatprep.subr.mxu0 0.0
    %754 = vmatpush1.msra.mxu0 0.0
    %755 = vmatprep.subr.mxu0 0.0
    %756 = vmatpush1.msra.mxu0 0.0
    %757 = vmatprep.subr.mxu0 0.0
    %758 = vmatpush1.msra.mxu0 0.0
    %759 = vmatprep.subr.mxu0 0.0
    %760 = vmatpush1.msra.mxu0 0.0
    %761 = vmatprep.subr.mxu0 0.0
    %762 = vmatpush1.msra.mxu0 0.0
    %763 = vmatprep.subr.mxu0 0.0
    %764 = vmatpush1.msra.mxu0 0.0
    %765 = vmatprep.subr.mxu0 0.0
    %766 = vmatpush1.msra.mxu0 0.0
    %767 = vmatprep.subr.mxu0 0.0
    %768 = vmatpush1.msra.mxu0 0.0
    %769 = vmatprep.subr.mxu0 0.0
    %770 = vmatpush1.msra.mxu0 0.0
    %771 = vmatprep.subr.mxu0 0.0
    %772 = vmatpush1.msra.mxu0 0.0
    %773 = vmatprep.subr.mxu0 0.0
    %774 = vmatpush1.msra.mxu0 0.0
    %775 = vmatprep.subr.mxu0 0.0
    %776 = vmatpush1.msra.mxu0 %v211
    %777 = vmatprep.subr.mxu0 0.0
    %778 = vmatpush1.msra.mxu0 %v210
    %779 = vmatprep.subr.mxu0 0.0
    %780 = vmatpush1.msra.mxu0 %v209
    %781 = vmatprep.subr.mxu0 0.0
    %782 = vmatpush1.msra.mxu0 %v208
    %783 = vmatprep.subr.mxu0 0.0
    %784 = vmatpush2.msra.mxu0 0.0
    %785 = vmatprep.subr.mxu0 0.0
    %786 = vmatpush2.msra.mxu0 0.0
    %787 = vmatprep.subr.mxu0 0.0
    %788 = vmatpush2.msra.mxu0 0.0
    %789 = vmatprep.subr.mxu0 0.0
    %790 = vmatpush2.msra.mxu0 0.0
    %791 = vmatprep.subr.mxu0 0.0
    %792 = vmatpush2.msra.mxu0 0.0
    %793 = vmatprep.subr.mxu0 0.0
    %794 = vmatpush2.msra.mxu0 0.0
    %795 = vmatprep.subr.mxu0 0.0
    %796 = vmatpush2.msra.mxu0 0.0
    %797 = vmatprep.subr.mxu0 0.0
    %798 = vmatpush2.msra.mxu0 0.0
    %799 = vmatprep.subr.mxu0 0.0
    %800 = vmatpush2.msra.mxu0 0.0
    %801 = vmatprep.subr.mxu0 0.0
    %802 = vmatpush2.msra.mxu0 0.0
    %803 = vmatprep.subr.mxu0 0.0
    %804 = vmatpush2.msra.mxu0 0.0
    %805 = vmatprep.subr.mxu0 0.0
    %806 = vmatpush2.msra.mxu0 0.0
    %807 = vmatprep.subr.mxu0 0.0
    %808 = vmatpush2.msra.mxu0 0.0
    %809 = vmatprep.subr.mxu0 0.0
    %810 = vmatpush2.msra.mxu0 0.0
    %811 = vmatprep.subr.mxu0 0.0
    %812 = vmatpush2.msra.mxu0 0.0
    %813 = vmatprep.subr.mxu0 0.0
    %814 = vmatpush2.msra.mxu0 0.0
    %815 = vmatprep.mubr.f32.mxu0 0.0
    %816 = vmatmul.mubr.f32.gmra.mxu0 %v749
    %v817 = vpop.f32.mrf.mxu0
    %v818 = vadd.f32 %v217, %v817
    %v819 = vpop.f32.mrf.mxu0
    %820 = vdwg.mxu0
    %s821 = scalar_lea.vmem [#allocation2], 40
    %v822 = vld [vmem:[%s821] sm:$0xff]
    %v823 = vadd.f32 %v822, %v818
    %v824 = vxor.u32 %v823, 2147483648
    %v825 = vmul.f32 %v824, 1.442695
    %v826 = vpow.pop %v825
    %v827 = vadd.f32 %v826, 1.0
    %v828 = vrcp.pop %v827
    %v829 = vmul.f32 1.0, %v828
    %831 = vrot.lane.b32.xlu0 %v818, 64
    %v832 = vpop.permute.xlu0 %831
    %v834 = vmul.f32 %v829, %v832
    %836 = vrot.lane.b32.xlu0 %v834, 64
    %v837 = vpop.permute.xlu0 %836
    %v839 = vadd.f32 %v822, %v837
    %v840 = vtanh.pop %v839
    %v841 = vsub.f32 1.0, %v829
    %843 = vrot.lane.b32.xlu0 %v840, 96
    %v844 = vpop.permute.xlu0 %843
    %v846 = vmul.f32 %v841, %v844
    %v847 = vmul.f32 %v829, %v742
    %v848 = vadd.f32 %v846, %v847
    %850 = vrot.lane.b32.xlu0 %v848, 96
    %v851 = vpop.permute.xlu0 %850
    %s853 = scalar_lea.vmem [#allocation3], 40
    %854 = vst.msk [vmem:[%s853] sm:$0xff] %vm219, %v851
    %v855 = vsel %vm219, %v851, 0
    %857 = vmatprep.subr.mxu0 0.0
    %858 = vmatpush1.msra.mxu0 0.0
    %859 = vmatprep.subr.mxu0 0.0
    %860 = vmatpush1.msra.mxu0 0.0
    %861 = vmatprep.subr.mxu0 0.0
    %862 = vmatpush1.msra.mxu0 0.0
    %863 = vmatprep.subr.mxu0 0.0
    %864 = vmatpush1.msra.mxu0 0.0
    %865 = vmatprep.subr.mxu0 0.0
    %866 = vmatpush1.msra.mxu0 0.0
    %867 = vmatprep.subr.mxu0 0.0
    %868 = vmatpush1.msra.mxu0 0.0
    %869 = vmatprep.subr.mxu0 0.0
    %870 = vmatpush1.msra.mxu0 0.0
    %871 = vmatprep.subr.mxu0 0.0
    %872 = vmatpush1.msra.mxu0 0.0
    %873 = vmatprep.subr.mxu0 0.0
    %874 = vmatpush1.msra.mxu0 0.0
    %875 = vmatprep.subr.mxu0 0.0
    %876 = vmatpush1.msra.mxu0 0.0
    %877 = vmatprep.subr.mxu0 0.0
    %878 = vmatpush1.msra.mxu0 0.0
    %879 = vmatprep.subr.mxu0 0.0
    %880 = vmatpush1.msra.mxu0 0.0
    %881 = vmatprep.subr.mxu0 0.0
    %882 = vmatpush1.msra.mxu0 %v211
    %883 = vmatprep.subr.mxu0 0.0
    %884 = vmatpush1.msra.mxu0 %v210
    %885 = vmatprep.subr.mxu0 0.0
    %886 = vmatpush1.msra.mxu0 %v209
    %887 = vmatprep.subr.mxu0 0.0
    %888 = vmatpush1.msra.mxu0 %v208
    %889 = vmatprep.subr.mxu0 0.0
    %890 = vmatpush2.msra.mxu0 0.0
    %891 = vmatprep.subr.mxu0 0.0
    %892 = vmatpush2.msra.mxu0 0.0
    %893 = vmatprep.subr.mxu0 0.0
    %894 = vmatpush2.msra.mxu0 0.0
    %895 = vmatprep.subr.mxu0 0.0
    %896 = vmatpush2.msra.mxu0 0.0
    %897 = vmatprep.subr.mxu0 0.0
    %898 = vmatpush2.msra.mxu0 0.0
    %899 = vmatprep.subr.mxu0 0.0
    %900 = vmatpush2.msra.mxu0 0.0
    %901 = vmatprep.subr.mxu0 0.0
    %902 = vmatpush2.msra.mxu0 0.0
    %903 = vmatprep.subr.mxu0 0.0
    %904 = vmatpush2.msra.mxu0 0.0
    %905 = vmatprep.subr.mxu0 0.0
    %906 = vmatpush2.msra.mxu0 0.0
    %907 = vmatprep.subr.mxu0 0.0
    %908 = vmatpush2.msra.mxu0 0.0
    %909 = vmatprep.subr.mxu0 0.0
    %910 = vmatpush2.msra.mxu0 0.0
    %911 = vmatprep.subr.mxu0 0.0
    %912 = vmatpush2.msra.mxu0 0.0
    %913 = vmatprep.subr.mxu0 0.0
    %914 = vmatpush2.msra.mxu0 0.0
    %915 = vmatprep.subr.mxu0 0.0
    %916 = vmatpush2.msra.mxu0 0.0
    %917 = vmatprep.subr.mxu0 0.0
    %918 = vmatpush2.msra.mxu0 0.0
    %919 = vmatprep.subr.mxu0 0.0
    %920 = vmatpush2.msra.mxu0 0.0
    %921 = vmatprep.mubr.f32.mxu0 0.0
    %922 = vmatmul.mubr.f32.gmra.mxu0 %v855
    %v923 = vpop.f32.mrf.mxu0
    %v924 = vadd.f32 %v217, %v923
    %v925 = vpop.f32.mrf.mxu0
    %926 = vdwg.mxu0
    %s927 = scalar_lea.vmem [#allocation2], 48
    %v928 = vld [vmem:[%s927] sm:$0xff]
    %v929 = vadd.f32 %v928, %v924
    %v930 = vxor.u32 %v929, 2147483648
    %v931 = vmul.f32 %v930, 1.442695
    %v932 = vpow.pop %v931
    %v933 = vadd.f32 %v932, 1.0
    %v934 = vrcp.pop %v933
    %v935 = vmul.f32 1.0, %v934
    %937 = vrot.lane.b32.xlu0 %v924, 64
    %v938 = vpop.permute.xlu0 %937
    %v940 = vmul.f32 %v935, %v938
    %942 = vrot.lane.b32.xlu0 %v940, 64
    %v943 = vpop.permute.xlu0 %942
    %v945 = vadd.f32 %v928, %v943
    %v946 = vtanh.pop %v945
    %v947 = vsub.f32 1.0, %v935
    %949 = vrot.lane.b32.xlu0 %v946, 96
    %v950 = vpop.permute.xlu0 %949
    %v952 = vmul.f32 %v947, %v950
    %v953 = vmul.f32 %v935, %v848
    %v954 = vadd.f32 %v952, %v953
    %956 = vrot.lane.b32.xlu0 %v954, 96
    %v957 = vpop.permute.xlu0 %956
    %s959 = scalar_lea.vmem [#allocation3], 48
    %960 = vst.msk [vmem:[%s959] sm:$0xff] %vm219, %v957
    %v961 = vsel %vm219, %v957, 0
    %963 = vmatprep.subr.mxu0 0.0
    %964 = vmatpush1.msra.mxu0 0.0
    %965 = vmatprep.subr.mxu0 0.0
    %966 = vmatpush1.msra.mxu0 0.0
    %967 = vmatprep.subr.mxu0 0.0
    %968 = vmatpush1.msra.mxu0 0.0
    %969 = vmatprep.subr.mxu0 0.0
    %970 = vmatpush1.msra.mxu0 0.0
    %971 = vmatprep.subr.mxu0 0.0
    %972 = vmatpush1.msra.mxu0 0.0
    %973 = vmatprep.subr.mxu0 0.0
    %974 = vmatpush1.msra.mxu0 0.0
    %975 = vmatprep.subr.mxu0 0.0
    %976 = vmatpush1.msra.mxu0 0.0
    %977 = vmatprep.subr.mxu0 0.0
    %978 = vmatpush1.msra.mxu0 0.0
    %979 = vmatprep.subr.mxu0 0.0
    %980 = vmatpush1.msra.mxu0 0.0
    %981 = vmatprep.subr.mxu0 0.0
    %982 = vmatpush1.msra.mxu0 0.0
    %983 = vmatprep.subr.mxu0 0.0
    %984 = vmatpush1.msra.mxu0 0.0
    %985 = vmatprep.subr.mxu0 0.0
    %986 = vmatpush1.msra.mxu0 0.0
    %987 = vmatprep.subr.mxu0 0.0
    %988 = vmatpush1.msra.mxu0 %v211
    %989 = vmatprep.subr.mxu0 0.0
    %990 = vmatpush1.msra.mxu0 %v210
    %991 = vmatprep.subr.mxu0 0.0
    %992 = vmatpush1.msra.mxu0 %v209
    %993 = vmatprep.subr.mxu0 0.0
    %994 = vmatpush1.msra.mxu0 %v208
    %995 = vmatprep.subr.mxu0 0.0
    %996 = vmatpush2.msra.mxu0 0.0
    %997 = vmatprep.subr.mxu0 0.0
    %998 = vmatpush2.msra.mxu0 0.0
    %999 = vmatprep.subr.mxu0 0.0
    %1000 = vmatpush2.msra.mxu0 0.0
    %1001 = vmatprep.subr.mxu0 0.0
    %1002 = vmatpush2.msra.mxu0 0.0
    %1003 = vmatprep.subr.mxu0 0.0
    %1004 = vmatpush2.msra.mxu0 0.0
    %1005 = vmatprep.subr.mxu0 0.0
    %1006 = vmatpush2.msra.mxu0 0.0
    %1007 = vmatprep.subr.mxu0 0.0
    %1008 = vmatpush2.msra.mxu0 0.0
    %1009 = vmatprep.subr.mxu0 0.0
    %1010 = vmatpush2.msra.mxu0 0.0
    %1011 = vmatprep.subr.mxu0 0.0
    %1012 = vmatpush2.msra.mxu0 0.0
    %1013 = vmatprep.subr.mxu0 0.0
    %1014 = vmatpush2.msra.mxu0 0.0
    %1015 = vmatprep.subr.mxu0 0.0
    %1016 = vmatpush2.msra.mxu0 0.0
    %1017 = vmatprep.subr.mxu0 0.0
    %1018 = vmatpush2.msra.mxu0 0.0
    %1019 = vmatprep.subr.mxu0 0.0
    %1020 = vmatpush2.msra.mxu0 0.0
    %1021 = vmatprep.subr.mxu0 0.0
    %1022 = vmatpush2.msra.mxu0 0.0
    %1023 = vmatprep.subr.mxu0 0.0
    %1024 = vmatpush2.msra.mxu0 0.0
    %1025 = vmatprep.subr.mxu0 0.0
    %1026 = vmatpush2.msra.mxu0 0.0
    %1027 = vmatprep.mubr.f32.mxu0 0.0
    %1028 = vmatmul.mubr.f32.gmra.mxu0 %v961
    %v1029 = vpop.f32.mrf.mxu0
    %v1030 = vadd.f32 %v217, %v1029
    %v1031 = vpop.f32.mrf.mxu0
    %1032 = vdwg.mxu0
    %s1033 = scalar_lea.vmem [#allocation2], 56
    %v1034 = vld [vmem:[%s1033] sm:$0xff]
    %v1035 = vadd.f32 %v1034, %v1030
    %v1036 = vxor.u32 %v1035, 2147483648
    %v1037 = vmul.f32 %v1036, 1.442695
    %v1038 = vpow.pop %v1037
    %v1039 = vadd.f32 %v1038, 1.0
    %v1040 = vrcp.pop %v1039
    %v1041 = vmul.f32 1.0, %v1040
    %1043 = vrot.lane.b32.xlu0 %v1030, 64
    %v1044 = vpop.permute.xlu0 %1043
    %v1046 = vmul.f32 %v1041, %v1044
    %1048 = vrot.lane.b32.xlu0 %v1046, 64
    %v1049 = vpop.permute.xlu0 %1048
    %v1051 = vadd.f32 %v1034, %v1049
    %v1052 = vtanh.pop %v1051
    %v1053 = vsub.f32 1.0, %v1041
    %1055 = vrot.lane.b32.xlu0 %v1052, 96
    %v1056 = vpop.permute.xlu0 %1055
    %v1058 = vmul.f32 %v1053, %v1056
    %v1059 = vmul.f32 %v1041, %v954
    %v1060 = vadd.f32 %v1058, %v1059
    %1062 = vrot.lane.b32.xlu0 %v1060, 96
    %v1063 = vpop.permute.xlu0 %1062
    %s1065 = scalar_lea.vmem [#allocation3], 56
    %1066 = vst.msk [vmem:[%s1065] sm:$0xff] %vm219, %v1063
    %vm1067 = vcmask 254976
    %1068 = vst.msk [vmem:[#allocation6] sm:$0x3] %vm1067, %v1063
    %v1069 = vld [vmem:[#allocation3] sm:$0xff]
    %v1070 = vld [vmem:[#allocation3 + $0x8] sm:$0xff]
    %v1071 = vld [vmem:[#allocation3 + $0x10] sm:$0xff]
    %v1072 = vld [vmem:[#allocation3 + $0x18] sm:$0xff]
    %v1073 = vld [vmem:[#allocation3 + $0x20] sm:$0xff]
    %v1074 = vld [vmem:[#allocation3 + $0x28] sm:$0xff]
    %v1075 = vld [vmem:[#allocation3 + $0x30] sm:$0xff]
    %v1076 = vld [vmem:[#allocation3 + $0x38] sm:$0xff]
    %v1077 = vld [vmem:[%s5] sm:$0xff]
    %v1078 = vld [vmem:[%s5 + $0x8] sm:$0xff]
    %v1079 = vld [vmem:[%s5 + $0x10] sm:$0xff]
    %v1080 = vld [vmem:[%s5 + $0x18] sm:$0xff]
    %v1081 = vld [vmem:[%s6] sm:$0x1]
    %v1083 = vlaneseq
    %v1084 = vshrl.u32 %v1083, 7
    %v1085 = vsub.s32 0, %v1084
    %v1086 = vrot.slane %v1081, %v1085
    %v1089 = vsel %vm219, %v1069, 0
    %v1092 = vsel %vm219, %v1070, 0
    %v1095 = vsel %vm219, %v1071, 0
    %v1098 = vsel %vm219, %v1072, 0
    %v1101 = vsel %vm219, %v1073, 0
    %v1104 = vsel %vm219, %v1074, 0
    %v1107 = vsel %vm219, %v1075, 0
    %v1110 = vsel %vm219, %v1076, 0
    %1112 = vmatprep.subr.mxu0 0.0
    %1113 = vmatpush1.msra.mxu0 0.0
    %1114 = vmatprep.subr.mxu0 0.0
    %1115 = vmatpush1.msra.mxu0 0.0
    %1116 = vmatprep.subr.mxu0 0.0
    %1117 = vmatpush1.msra.mxu0 0.0
    %1118 = vmatprep.subr.mxu0 0.0
    %1119 = vmatpush1.msra.mxu0 0.0
    %1120 = vmatprep.subr.mxu0 0.0
    %1121 = vmatpush1.msra.mxu0 0.0
    %1122 = vmatprep.subr.mxu0 0.0
    %1123 = vmatpush1.msra.mxu0 0.0
    %1124 = vmatprep.subr.mxu0 0.0
    %1125 = vmatpush1.msra.mxu0 0.0
    %1126 = vmatprep.subr.mxu0 0.0
    %1127 = vmatpush1.msra.mxu0 0.0
    %1128 = vmatprep.subr.mxu0 0.0
    %1129 = vmatpush1.msra.mxu0 0.0
    %1130 = vmatprep.subr.mxu0 0.0
    %1131 = vmatpush1.msra.mxu0 0.0
    %1132 = vmatprep.subr.mxu0 0.0
    %1133 = vmatpush1.msra.mxu0 0.0
    %1134 = vmatprep.subr.mxu0 0.0
    %1135 = vmatpush1.msra.mxu0 0.0
    %1136 = vmatprep.subr.mxu0 0.0
    %1137 = vmatpush1.msra.mxu0 %v1080
    %1138 = vmatprep.subr.mxu0 0.0
    %1139 = vmatpush1.msra.mxu0 %v1079
    %1140 = vmatprep.subr.mxu0 0.0
    %1141 = vmatpush1.msra.mxu0 %v1078
    %1142 = vmatprep.subr.mxu0 0.0
    %1143 = vmatpush1.msra.mxu0 %v1077
    %1144 = vmatprep.subr.mxu0 0.0
    %1145 = vmatpush2.msra.mxu0 0.0
    %1146 = vmatprep.subr.mxu0 0.0
    %1147 = vmatpush2.msra.mxu0 0.0
    %1148 = vmatprep.subr.mxu0 0.0
    %1149 = vmatpush2.msra.mxu0 0.0
    %1150 = vmatprep.subr.mxu0 0.0
    %1151 = vmatpush2.msra.mxu0 0.0
    %1152 = vmatprep.subr.mxu0 0.0
    %1153 = vmatpush2.msra.mxu0 0.0
    %1154 = vmatprep.subr.mxu0 0.0
    %1155 = vmatpush2.msra.mxu0 0.0
    %1156 = vmatprep.subr.mxu0 0.0
    %1157 = vmatpush2.msra.mxu0 0.0
    %1158 = vmatprep.subr.mxu0 0.0
    %1159 = vmatpush2.msra.mxu0 0.0
    %1160 = vmatprep.subr.mxu0 0.0
    %1161 = vmatpush2.msra.mxu0 0.0
    %1162 = vmatprep.subr.mxu0 0.0
    %1163 = vmatpush2.msra.mxu0 0.0
    %1164 = vmatprep.subr.mxu0 0.0
    %1165 = vmatpush2.msra.mxu0 0.0
    %1166 = vmatprep.subr.mxu0 0.0
    %1167 = vmatpush2.msra.mxu0 0.0
    %1168 = vmatprep.subr.mxu0 0.0
    %1169 = vmatpush2.msra.mxu0 0.0
    %1170 = vmatprep.subr.mxu0 0.0
    %1171 = vmatpush2.msra.mxu0 0.0
    %1172 = vmatprep.subr.mxu0 0.0
    %1173 = vmatpush2.msra.mxu0 0.0
    %1174 = vmatprep.subr.mxu0 0.0
    %1175 = vmatpush2.msra.mxu0 0.0
    %1176 = vmatprep.mubr.f32.mxu0 0.0
    %1177 = vmatmul.mubr.f32.gmra.mxu0 %v1089
    %v1178 = vpop.f32.mrf.mxu0
    %v1179 = vadd.f32 %v1086, %v1178
    %v1180 = vpop.f32.mrf.mxu0
    %1181 = vmatprep.mubr.f32.mxu0 0.0
    %1182 = vmatmul.mubr.f32.gmra.mxu0 %v1092
    %v1183 = vpop.f32.mrf.mxu0
    %v1184 = vadd.f32 %v1086, %v1183
    %v1185 = vpop.f32.mrf.mxu0
    %1186 = vmatprep.mubr.f32.mxu0 0.0
    %1187 = vmatmul.mubr.f32.gmra.mxu0 %v1095
    %v1188 = vpop.f32.mrf.mxu0
    %v1189 = vadd.f32 %v1086, %v1188
    %v1190 = vpop.f32.mrf.mxu0
    %1191 = vmatprep.mubr.f32.mxu0 0.0
    %1192 = vmatmul.mubr.f32.gmra.mxu0 %v1098
    %v1193 = vpop.f32.mrf.mxu0
    %v1194 = vadd.f32 %v1086, %v1193
    %v1195 = vpop.f32.mrf.mxu0
    %1196 = vmatprep.mubr.f32.mxu0 0.0
    %1197 = vmatmul.mubr.f32.gmra.mxu0 %v1101
    %v1198 = vpop.f32.mrf.mxu0
    %v1199 = vadd.f32 %v1086, %v1198
    %v1200 = vpop.f32.mrf.mxu0
    %1201 = vmatprep.mubr.f32.mxu0 0.0
    %1202 = vmatmul.mubr.f32.gmra.mxu0 %v1104
    %v1203 = vpop.f32.mrf.mxu0
    %v1204 = vadd.f32 %v1086, %v1203
    %v1205 = vpop.f32.mrf.mxu0
    %1206 = vmatprep.mubr.f32.mxu0 0.0
    %1207 = vmatmul.mubr.f32.gmra.mxu0 %v1107
    %v1208 = vpop.f32.mrf.mxu0
    %v1209 = vadd.f32 %v1086, %v1208
    %v1210 = vpop.f32.mrf.mxu0
    %1211 = vmatprep.mubr.f32.mxu0 0.0
    %1212 = vmatmul.mubr.f32.gmra.mxu0 %v1110
    %v1213 = vpop.f32.mrf.mxu0
    %v1214 = vadd.f32 %v1086, %v1213
    %v1215 = vpop.f32.mrf.mxu0
    %1216 = vdwg.mxu0
    %1217 = vst.msk [vmem:[#allocation2] sm:$0xff] %vm199, %v1179
    %1218 = vst.msk [vmem:[#allocation2 + $0x8] sm:$0xff] %vm199, %v1184
    %1219 = vst.msk [vmem:[#allocation2 + $0x10] sm:$0xff] %vm199, %v1189
    %1220 = vst.msk [vmem:[#allocation2 + $0x18] sm:$0xff] %vm199, %v1194
    %1221 = vst.msk [vmem:[#allocation2 + $0x20] sm:$0xff] %vm199, %v1199
    %1222 = vst.msk [vmem:[#allocation2 + $0x28] sm:$0xff] %vm199, %v1204
    %1223 = vst.msk [vmem:[#allocation2 + $0x30] sm:$0xff] %vm199, %v1209
    %1224 = vst.msk [vmem:[#allocation2 + $0x38] sm:$0xff] %vm199, %v1214
    %v1225 = vld [vmem:[%s7] sm:$0xff]
    %v1226 = vld [vmem:[%s7 + $0x8] sm:$0xff]
    %v1227 = vld [vmem:[%s7 + $0x10] sm:$0xff]
    %v1228 = vld [vmem:[%s7 + $0x18] sm:$0xff]
    %v1229 = vld [vmem:[%s8] sm:$0x1]
    %v1231 = vlaneseq
    %v1232 = vshrl.u32 %v1231, 7
    %v1233 = vsub.s32 0, %v1232
    %v1234 = vrot.slane %v1229, %v1233
    %1236 = vmatprep.subr.mxu0 0.0
    %1237 = vmatpush1.msra.mxu0 0.0
    %1238 = vmatprep.subr.mxu0 0.0
    %1239 = vmatpush1.msra.mxu0 0.0
    %1240 = vmatprep.subr.mxu0 0.0
    %1241 = vmatpush1.msra.mxu0 0.0
    %1242 = vmatprep.subr.mxu0 0.0
    %1243 = vmatpush1.msra.mxu0 0.0
    %1244 = vmatprep.subr.mxu0 0.0
    %1245 = vmatpush1.msra.mxu0 0.0
    %1246 = vmatprep.subr.mxu0 0.0
    %1247 = vmatpush1.msra.mxu0 0.0
    %1248 = vmatprep.subr.mxu0 0.0
    %1249 = vmatpush1.msra.mxu0 0.0
    %1250 = vmatprep.subr.mxu0 0.0
    %1251 = vmatpush1.msra.mxu0 0.0
    %1252 = vmatprep.subr.mxu0 0.0
    %1253 = vmatpush1.msra.mxu0 0.0
    %1254 = vmatprep.subr.mxu0 0.0
    %1255 = vmatpush1.msra.mxu0 0.0
    %1256 = vmatprep.subr.mxu0 0.0
    %1257 = vmatpush1.msra.mxu0 0.0
    %1258 = vmatprep.subr.mxu0 0.0
    %1259 = vmatpush1.msra.mxu0 0.0
    %1260 = vmatprep.subr.mxu0 0.0
    %1261 = vmatpush1.msra.mxu0 %v1228
    %1262 = vmatprep.subr.mxu0 0.0
    %1263 = vmatpush1.msra.mxu0 %v1227
    %1264 = vmatprep.subr.mxu0 0.0
    %1265 = vmatpush1.msra.mxu0 %v1226
    %1266 = vmatprep.subr.mxu0 0.0
    %1267 = vmatpush1.msra.mxu0 %v1225
    %1268 = vmatprep.subr.mxu0 0.0
    %1269 = vmatpush2.msra.mxu0 0.0
    %1270 = vmatprep.subr.mxu0 0.0
    %1271 = vmatpush2.msra.mxu0 0.0
    %1272 = vmatprep.subr.mxu0 0.0
    %1273 = vmatpush2.msra.mxu0 0.0
    %1274 = vmatprep.subr.mxu0 0.0
    %1275 = vmatpush2.msra.mxu0 0.0
    %1276 = vmatprep.subr.mxu0 0.0
    %1277 = vmatpush2.msra.mxu0 0.0
    %1278 = vmatprep.subr.mxu0 0.0
    %1279 = vmatpush2.msra.mxu0 0.0
    %1280 = vmatprep.subr.mxu0 0.0
    %1281 = vmatpush2.msra.mxu0 0.0
    %1282 = vmatprep.subr.mxu0 0.0
    %1283 = vmatpush2.msra.mxu0 0.0
    %1284 = vmatprep.subr.mxu0 0.0
    %1285 = vmatpush2.msra.mxu0 0.0
    %1286 = vmatprep.subr.mxu0 0.0
    %1287 = vmatpush2.msra.mxu0 0.0
    %1288 = vmatprep.subr.mxu0 0.0
    %1289 = vmatpush2.msra.mxu0 0.0
    %1290 = vmatprep.subr.mxu0 0.0
    %1291 = vmatpush2.msra.mxu0 0.0
    %1292 = vmatprep.subr.mxu0 0.0
    %1293 = vmatpush2.msra.mxu0 0.0
    %1294 = vmatprep.subr.mxu0 0.0
    %1295 = vmatpush2.msra.mxu0 0.0
    %1296 = vmatprep.subr.mxu0 0.0
    %1297 = vmatpush2.msra.mxu0 0.0
    %1298 = vmatprep.subr.mxu0 0.0
    %1299 = vmatpush2.msra.mxu0 0.0
    %1300 = vmatprep.mubr.f32.mxu0 0.0
    %1301 = vmatmul.mubr.f32.gmra.mxu0 %v221
    %v1302 = vpop.f32.mrf.mxu0
    %v1303 = vadd.f32 %v1234, %v1302
    %v1304 = vpop.f32.mrf.mxu0
    %1305 = vdwg.mxu0
    %v1306 = vld [vmem:[#allocation2] sm:$0xff]
    %v1307 = vadd.f32 %v1306, %v1303
    %v1308 = vxor.u32 %v1307, 2147483648
    %v1309 = vmul.f32 %v1308, 1.442695
    %v1310 = vpow.pop %v1309
    %v1311 = vadd.f32 %v1310, 1.0
    %v1312 = vrcp.pop %v1311
    %v1313 = vmul.f32 1.0, %v1312
    %1315 = vrot.lane.b32.xlu0 %v1303, 64
    %v1316 = vpop.permute.xlu0 %1315
    %v1318 = vmul.f32 %v1313, %v1316
    %1320 = vrot.lane.b32.xlu0 %v1318, 64
    %v1321 = vpop.permute.xlu0 %1320
    %v1323 = vadd.f32 %v1306, %v1321
    %v1324 = vtanh.pop %v1323
    %v1325 = vsub.f32 1.0, %v1313
    %1327 = vrot.lane.b32.xlu0 %v1324, 96
    %v1328 = vpop.permute.xlu0 %1327
    %v1330 = vmul.f32 %v1325, %v1328
    %v1331 = vmul.f32 %v1313, 0.0
    %v1332 = vadd.f32 %v1330, %v1331
    %1334 = vrot.lane.b32.xlu0 %v1332, 96
    %v1335 = vpop.permute.xlu0 %1334
    %1337 = vst.msk [vmem:[#allocation3] sm:$0xff] %vm219, %v1335
    %v1338 = vsel %vm219, %v1335, 0
    %1340 = vmatprep.subr.mxu0 0.0
    %1341 = vmatpush1.msra.mxu0 0.0
    %1342 = vmatprep.subr.mxu0 0.0
    %1343 = vmatpush1.msra.mxu0 0.0
    %1344 = vmatprep.subr.mxu0 0.0
    %1345 = vmatpush1.msra.mxu0 0.0
    %1346 = vmatprep.subr.mxu0 0.0
    %1347 = vmatpush1.msra.mxu0 0.0
    %1348 = vmatprep.subr.mxu0 0.0
    %1349 = vmatpush1.msra.mxu0 0.0
    %1350 = vmatprep.subr.mxu0 0.0
    %1351 = vmatpush1.msra.mxu0 0.0
    %1352 = vmatprep.subr.mxu0 0.0
    %1353 = vmatpush1.msra.mxu0 0.0
    %1354 = vmatprep.subr.mxu0 0.0
    %1355 = vmatpush1.msra.mxu0 0.0
    %1356 = vmatprep.subr.mxu0 0.0
    %1357 = vmatpush1.msra.mxu0 0.0
    %1358 = vmatprep.subr.mxu0 0.0
    %1359 = vmatpush1.msra.mxu0 0.0
    %1360 = vmatprep.subr.mxu0 0.0
    %1361 = vmatpush1.msra.mxu0 0.0
    %1362 = vmatprep.subr.mxu0 0.0
    %1363 = vmatpush1.msra.mxu0 0.0
    %1364 = vmatprep.subr.mxu0 0.0
    %1365 = vmatpush1.msra.mxu0 %v1228
    %1366 = vmatprep.subr.mxu0 0.0
    %1367 = vmatpush1.msra.mxu0 %v1227
    %1368 = vmatprep.subr.mxu0 0.0
    %1369 = vmatpush1.msra.mxu0 %v1226
    %1370 = vmatprep.subr.mxu0 0.0
    %1371 = vmatpush1.msra.mxu0 %v1225
    %1372 = vmatprep.subr.mxu0 0.0
    %1373 = vmatpush2.msra.mxu0 0.0
    %1374 = vmatprep.subr.mxu0 0.0
    %1375 = vmatpush2.msra.mxu0 0.0
    %1376 = vmatprep.subr.mxu0 0.0
    %1377 = vmatpush2.msra.mxu0 0.0
    %1378 = vmatprep.subr.mxu0 0.0
    %1379 = vmatpush2.msra.mxu0 0.0
    %1380 = vmatprep.subr.mxu0 0.0
    %1381 = vmatpush2.msra.mxu0 0.0
    %1382 = vmatprep.subr.mxu0 0.0
    %1383 = vmatpush2.msra.mxu0 0.0
    %1384 = vmatprep.subr.mxu0 0.0
    %1385 = vmatpush2.msra.mxu0 0.0
    %1386 = vmatprep.subr.mxu0 0.0
    %1387 = vmatpush2.msra.mxu0 0.0
    %1388 = vmatprep.subr.mxu0 0.0
    %1389 = vmatpush2.msra.mxu0 0.0
    %1390 = vmatprep.subr.mxu0 0.0
    %1391 = vmatpush2.msra.mxu0 0.0
    %1392 = vmatprep.subr.mxu0 0.0
    %1393 = vmatpush2.msra.mxu0 0.0
    %1394 = vmatprep.subr.mxu0 0.0
    %1395 = vmatpush2.msra.mxu0 0.0
    %1396 = vmatprep.subr.mxu0 0.0
    %1397 = vmatpush2.msra.mxu0 0.0
    %1398 = vmatprep.subr.mxu0 0.0
    %1399 = vmatpush2.msra.mxu0 0.0
    %1400 = vmatprep.subr.mxu0 0.0
    %1401 = vmatpush2.msra.mxu0 0.0
    %1402 = vmatprep.subr.mxu0 0.0
    %1403 = vmatpush2.msra.mxu0 0.0
    %1404 = vmatprep.mubr.f32.mxu0 0.0
    %1405 = vmatmul.mubr.f32.gmra.mxu0 %v1338
    %v1406 = vpop.f32.mrf.mxu0
    %v1407 = vadd.f32 %v1234, %v1406
    %v1408 = vpop.f32.mrf.mxu0
    %1409 = vdwg.mxu0
    %v1410 = vld [vmem:[%s397] sm:$0xff]
    %v1411 = vadd.f32 %v1410, %v1407
    %v1412 = vxor.u32 %v1411, 2147483648
    %v1413 = vmul.f32 %v1412, 1.442695
    %v1414 = vpow.pop %v1413
    %v1415 = vadd.f32 %v1414, 1.0
    %v1416 = vrcp.pop %v1415
    %v1417 = vmul.f32 1.0, %v1416
    %1419 = vrot.lane.b32.xlu0 %v1407, 64
    %v1420 = vpop.permute.xlu0 %1419
    %v1422 = vmul.f32 %v1417, %v1420
    %1424 = vrot.lane.b32.xlu0 %v1422, 64
    %v1425 = vpop.permute.xlu0 %1424
    %v1427 = vadd.f32 %v1410, %v1425
    %v1428 = vtanh.pop %v1427
    %v1429 = vsub.f32 1.0, %v1417
    %1431 = vrot.lane.b32.xlu0 %v1428, 96
    %v1432 = vpop.permute.xlu0 %1431
    %v1434 = vmul.f32 %v1429, %v1432
    %v1435 = vmul.f32 %v1417, %v1332
    %v1436 = vadd.f32 %v1434, %v1435
    %1438 = vrot.lane.b32.xlu0 %v1436, 96
    %v1439 = vpop.permute.xlu0 %1438
    %1441 = vst.msk [vmem:[%s429] sm:$0xff] %vm219, %v1439
    %v1442 = vsel %vm219, %v1439, 0
    %1444 = vmatprep.subr.mxu0 0.0
    %1445 = vmatpush1.msra.mxu0 0.0
    %1446 = vmatprep.subr.mxu0 0.0
    %1447 = vmatpush1.msra.mxu0 0.0
    %1448 = vmatprep.subr.mxu0 0.0
    %1449 = vmatpush1.msra.mxu0 0.0
    %1450 = vmatprep.subr.mxu0 0.0
    %1451 = vmatpush1.msra.mxu0 0.0
    %1452 = vmatprep.subr.mxu0 0.0
    %1453 = vmatpush1.msra.mxu0 0.0
    %1454 = vmatprep.subr.mxu0 0.0
    %1455 = vmatpush1.msra.mxu0 0.0
    %1456 = vmatprep.subr.mxu0 0.0
    %1457 = vmatpush1.msra.mxu0 0.0
    %1458 = vmatprep.subr.mxu0 0.0
    %1459 = vmatpush1.msra.mxu0 0.0
    %1460 = vmatprep.subr.mxu0 0.0
    %1461 = vmatpush1.msra.mxu0 0.0
    %1462 = vmatprep.subr.mxu0 0.0
    %1463 = vmatpush1.msra.mxu0 0.0
    %1464 = vmatprep.subr.mxu0 0.0
    %1465 = vmatpush1.msra.mxu0 0.0
    %1466 = vmatprep.subr.mxu0 0.0
    %1467 = vmatpush1.msra.mxu0 0.0
    %1468 = vmatprep.subr.mxu0 0.0
    %1469 = vmatpush1.msra.mxu0 %v1228
    %1470 = vmatprep.subr.mxu0 0.0
    %1471 = vmatpush1.msra.mxu0 %v1227
    %1472 = vmatprep.subr.mxu0 0.0
    %1473 = vmatpush1.msra.mxu0 %v1226
    %1474 = vmatprep.subr.mxu0 0.0
    %1475 = vmatpush1.msra.mxu0 %v1225
    %1476 = vmatprep.subr.mxu0 0.0
    %1477 = vmatpush2.msra.mxu0 0.0
    %1478 = vmatprep.subr.mxu0 0.0
    %1479 = vmatpush2.msra.mxu0 0.0
    %1480 = vmatprep.subr.mxu0 0.0
    %1481 = vmatpush2.msra.mxu0 0.0
    %1482 = vmatprep.subr.mxu0 0.0
    %1483 = vmatpush2.msra.mxu0 0.0
    %1484 = vmatprep.subr.mxu0 0.0
    %1485 = vmatpush2.msra.mxu0 0.0
    %1486 = vmatprep.subr.mxu0 0.0
    %1487 = vmatpush2.msra.mxu0 0.0
    %1488 = vmatprep.subr.mxu0 0.0
    %1489 = vmatpush2.msra.mxu0 0.0
    %1490 = vmatprep.subr.mxu0 0.0
    %1491 = vmatpush2.msra.mxu0 0.0
    %1492 = vmatprep.subr.mxu0 0.0
    %1493 = vmatpush2.msra.mxu0 0.0
    %1494 = vmatprep.subr.mxu0 0.0
    %1495 = vmatpush2.msra.mxu0 0.0
    %1496 = vmatprep.subr.mxu0 0.0
    %1497 = vmatpush2.msra.mxu0 0.0
    %1498 = vmatprep.subr.mxu0 0.0
    %1499 = vmatpush2.msra.mxu0 0.0
    %1500 = vmatprep.subr.mxu0 0.0
    %1501 = vmatpush2.msra.mxu0 0.0
    %1502 = vmatprep.subr.mxu0 0.0
    %1503 = vmatpush2.msra.mxu0 0.0
    %1504 = vmatprep.subr.mxu0 0.0
    %1505 = vmatpush2.msra.mxu0 0.0
    %1506 = vmatprep.subr.mxu0 0.0
    %1507 = vmatpush2.msra.mxu0 0.0
    %1508 = vmatprep.mubr.f32.mxu0 0.0
    %1509 = vmatmul.mubr.f32.gmra.mxu0 %v1442
    %v1510 = vpop.f32.mrf.mxu0
    %v1511 = vadd.f32 %v1234, %v1510
    %v1512 = vpop.f32.mrf.mxu0
    %1513 = vdwg.mxu0
    %v1514 = vld [vmem:[%s503] sm:$0xff]
    %v1515 = vadd.f32 %v1514, %v1511
    %v1516 = vxor.u32 %v1515, 2147483648
    %v1517 = vmul.f32 %v1516, 1.442695
    %v1518 = vpow.pop %v1517
    %v1519 = vadd.f32 %v1518, 1.0
    %v1520 = vrcp.pop %v1519
    %v1521 = vmul.f32 1.0, %v1520
    %1523 = vrot.lane.b32.xlu0 %v1511, 64
    %v1524 = vpop.permute.xlu0 %1523
    %v1526 = vmul.f32 %v1521, %v1524
    %1528 = vrot.lane.b32.xlu0 %v1526, 64
    %v1529 = vpop.permute.xlu0 %1528
    %v1531 = vadd.f32 %v1514, %v1529
    %v1532 = vtanh.pop %v1531
    %v1533 = vsub.f32 1.0, %v1521
    %1535 = vrot.lane.b32.xlu0 %v1532, 96
    %v1536 = vpop.permute.xlu0 %1535
    %v1538 = vmul.f32 %v1533, %v1536
    %v1539 = vmul.f32 %v1521, %v1436
    %v1540 = vadd.f32 %v1538, %v1539
    %1542 = vrot.lane.b32.xlu0 %v1540, 96
    %v1543 = vpop.permute.xlu0 %1542
    %1545 = vst.msk [vmem:[%s535] sm:$0xff] %vm219, %v1543
    %v1546 = vsel %vm219, %v1543, 0
    %1548 = vmatprep.subr.mxu0 0.0
    %1549 = vmatpush1.msra.mxu0 0.0
    %1550 = vmatprep.subr.mxu0 0.0
    %1551 = vmatpush1.msra.mxu0 0.0
    %1552 = vmatprep.subr.mxu0 0.0
    %1553 = vmatpush1.msra.mxu0 0.0
    %1554 = vmatprep.subr.mxu0 0.0
    %1555 = vmatpush1.msra.mxu0 0.0
    %1556 = vmatprep.subr.mxu0 0.0
    %1557 = vmatpush1.msra.mxu0 0.0
    %1558 = vmatprep.subr.mxu0 0.0
    %1559 = vmatpush1.msra.mxu0 0.0
    %1560 = vmatprep.subr.mxu0 0.0
    %1561 = vmatpush1.msra.mxu0 0.0
    %1562 = vmatprep.subr.mxu0 0.0
    %1563 = vmatpush1.msra.mxu0 0.0
    %1564 = vmatprep.subr.mxu0 0.0
    %1565 = vmatpush1.msra.mxu0 0.0
    %1566 = vmatprep.subr.mxu0 0.0
    %1567 = vmatpush1.msra.mxu0 0.0
    %1568 = vmatprep.subr.mxu0 0.0
    %1569 = vmatpush1.msra.mxu0 0.0
    %1570 = vmatprep.subr.mxu0 0.0
    %1571 = vmatpush1.msra.mxu0 0.0
    %1572 = vmatprep.subr.mxu0 0.0
    %1573 = vmatpush1.msra.mxu0 %v1228
    %1574 = vmatprep.subr.mxu0 0.0
    %1575 = vmatpush1.msra.mxu0 %v1227
    %1576 = vmatprep.subr.mxu0 0.0
    %1577 = vmatpush1.msra.mxu0 %v1226
    %1578 = vmatprep.subr.mxu0 0.0
    %1579 = vmatpush1.msra.mxu0 %v1225
    %1580 = vmatprep.subr.mxu0 0.0
    %1581 = vmatpush2.msra.mxu0 0.0
    %1582 = vmatprep.subr.mxu0 0.0
    %1583 = vmatpush2.msra.mxu0 0.0
    %1584 = vmatprep.subr.mxu0 0.0
    %1585 = vmatpush2.msra.mxu0 0.0
    %1586 = vmatprep.subr.mxu0 0.0
    %1587 = vmatpush2.msra.mxu0 0.0
    %1588 = vmatprep.subr.mxu0 0.0
    %1589 = vmatpush2.msra.mxu0 0.0
    %1590 = vmatprep.subr.mxu0 0.0
    %1591 = vmatpush2.msra.mxu0 0.0
    %1592 = vmatprep.subr.mxu0 0.0
    %1593 = vmatpush2.msra.mxu0 0.0
    %1594 = vmatprep.subr.mxu0 0.0
    %1595 = vmatpush2.msra.mxu0 0.0
    %1596 = vmatprep.subr.mxu0 0.0
    %1597 = vmatpush2.msra.mxu0 0.0
    %1598 = vmatprep.subr.mxu0 0.0
    %1599 = vmatpush2.msra.mxu0 0.0
    %1600 = vmatprep.subr.mxu0 0.0
    %1601 = vmatpush2.msra.mxu0 0.0
    %1602 = vmatprep.subr.mxu0 0.0
    %1603 = vmatpush2.msra.mxu0 0.0
    %1604 = vmatprep.subr.mxu0 0.0
    %1605 = vmatpush2.msra.mxu0 0.0
    %1606 = vmatprep.subr.mxu0 0.0
    %1607 = vmatpush2.msra.mxu0 0.0
    %1608 = vmatprep.subr.mxu0 0.0
    %1609 = vmatpush2.msra.mxu0 0.0
    %1610 = vmatprep.subr.mxu0 0.0
    %1611 = vmatpush2.msra.mxu0 0.0
    %1612 = vmatprep.mubr.f32.mxu0 0.0
    %1613 = vmatmul.mubr.f32.gmra.mxu0 %v1546
    %v1614 = vpop.f32.mrf.mxu0
    %v1615 = vadd.f32 %v1234, %v1614
    %v1616 = vpop.f32.mrf.mxu0
    %1617 = vdwg.mxu0
    %v1618 = vld [vmem:[%s609] sm:$0xff]
    %v1619 = vadd.f32 %v1618, %v1615
    %v1620 = vxor.u32 %v1619, 2147483648
    %v1621 = vmul.f32 %v1620, 1.442695
    %v1622 = vpow.pop %v1621
    %v1623 = vadd.f32 %v1622, 1.0
    %v1624 = vrcp.pop %v1623
    %v1625 = vmul.f32 1.0, %v1624
    %1627 = vrot.lane.b32.xlu0 %v1615, 64
    %v1628 = vpop.permute.xlu0 %1627
    %v1630 = vmul.f32 %v1625, %v1628
    %1632 = vrot.lane.b32.xlu0 %v1630, 64
    %v1633 = vpop.permute.xlu0 %1632
    %v1635 = vadd.f32 %v1618, %v1633
    %v1636 = vtanh.pop %v1635
    %v1637 = vsub.f32 1.0, %v1625
    %1639 = vrot.lane.b32.xlu0 %v1636, 96
    %v1640 = vpop.permute.xlu0 %1639
    %v1642 = vmul.f32 %v1637, %v1640
    %v1643 = vmul.f32 %v1625, %v1540
    %v1644 = vadd.f32 %v1642, %v1643
    %1646 = vrot.lane.b32.xlu0 %v1644, 96
    %v1647 = vpop.permute.xlu0 %1646
    %1649 = vst.msk [vmem:[%s641] sm:$0xff] %vm219, %v1647
    %v1650 = vsel %vm219, %v1647, 0
    %1652 = vmatprep.subr.mxu0 0.0
    %1653 = vmatpush1.msra.mxu0 0.0
    %1654 = vmatprep.subr.mxu0 0.0
    %1655 = vmatpush1.msra.mxu0 0.0
    %1656 = vmatprep.subr.mxu0 0.0
    %1657 = vmatpush1.msra.mxu0 0.0
    %1658 = vmatprep.subr.mxu0 0.0
    %1659 = vmatpush1.msra.mxu0 0.0
    %1660 = vmatprep.subr.mxu0 0.0
    %1661 = vmatpush1.msra.mxu0 0.0
    %1662 = vmatprep.subr.mxu0 0.0
    %1663 = vmatpush1.msra.mxu0 0.0
    %1664 = vmatprep.subr.mxu0 0.0
    %1665 = vmatpush1.msra.mxu0 0.0
    %1666 = vmatprep.subr.mxu0 0.0
    %1667 = vmatpush1.msra.mxu0 0.0
    %1668 = vmatprep.subr.mxu0 0.0
    %1669 = vmatpush1.msra.mxu0 0.0
    %1670 = vmatprep.subr.mxu0 0.0
    %1671 = vmatpush1.msra.mxu0 0.0
    %1672 = vmatprep.subr.mxu0 0.0
    %1673 = vmatpush1.msra.mxu0 0.0
    %1674 = vmatprep.subr.mxu0 0.0
    %1675 = vmatpush1.msra.mxu0 0.0
    %1676 = vmatprep.subr.mxu0 0.0
    %1677 = vmatpush1.msra.mxu0 %v1228
    %1678 = vmatprep.subr.mxu0 0.0
    %1679 = vmatpush1.msra.mxu0 %v1227
    %1680 = vmatprep.subr.mxu0 0.0
    %1681 = vmatpush1.msra.mxu0 %v1226
    %1682 = vmatprep.subr.mxu0 0.0
    %1683 = vmatpush1.msra.mxu0 %v1225
    %1684 = vmatprep.subr.mxu0 0.0
    %1685 = vmatpush2.msra.mxu0 0.0
    %1686 = vmatprep.subr.mxu0 0.0
    %1687 = vmatpush2.msra.mxu0 0.0
    %1688 = vmatprep.subr.mxu0 0.0
    %1689 = vmatpush2.msra.mxu0 0.0
    %1690 = vmatprep.subr.mxu0 0.0
    %1691 = vmatpush2.msra.mxu0 0.0
    %1692 = vmatprep.subr.mxu0 0.0
    %1693 = vmatpush2.msra.mxu0 0.0
    %1694 = vmatprep.subr.mxu0 0.0
    %1695 = vmatpush2.msra.mxu0 0.0
    %1696 = vmatprep.subr.mxu0 0.0
    %1697 = vmatpush2.msra.mxu0 0.0
    %1698 = vmatprep.subr.mxu0 0.0
    %1699 = vmatpush2.msra.mxu0 0.0
    %1700 = vmatprep.subr.mxu0 0.0
    %1701 = vmatpush2.msra.mxu0 0.0
    %1702 = vmatprep.subr.mxu0 0.0
    %1703 = vmatpush2.msra.mxu0 0.0
    %1704 = vmatprep.subr.mxu0 0.0
    %1705 = vmatpush2.msra.mxu0 0.0
    %1706 = vmatprep.subr.mxu0 0.0
    %1707 = vmatpush2.msra.mxu0 0.0
    %1708 = vmatprep.subr.mxu0 0.0
    %1709 = vmatpush2.msra.mxu0 0.0
    %1710 = vmatprep.subr.mxu0 0.0
    %1711 = vmatpush2.msra.mxu0 0.0
    %1712 = vmatprep.subr.mxu0 0.0
    %1713 = vmatpush2.msra.mxu0 0.0
    %1714 = vmatprep.subr.mxu0 0.0
    %1715 = vmatpush2.msra.mxu0 0.0
    %1716 = vmatprep.mubr.f32.mxu0 0.0
    %1717 = vmatmul.mubr.f32.gmra.mxu0 %v1650
    %v1718 = vpop.f32.mrf.mxu0
    %v1719 = vadd.f32 %v1234, %v1718
    %v1720 = vpop.f32.mrf.mxu0
    %1721 = vdwg.mxu0
    %v1722 = vld [vmem:[%s715] sm:$0xff]
    %v1723 = vadd.f32 %v1722, %v1719
    %v1724 = vxor.u32 %v1723, 2147483648
    %v1725 = vmul.f32 %v1724, 1.442695
    %v1726 = vpow.pop %v1725
    %v1727 = vadd.f32 %v1726, 1.0
    %v1728 = vrcp.pop %v1727
    %v1729 = vmul.f32 1.0, %v1728
    %1731 = vrot.lane.b32.xlu0 %v1719, 64
    %v1732 = vpop.permute.xlu0 %1731
    %v1734 = vmul.f32 %v1729, %v1732
    %1736 = vrot.lane.b32.xlu0 %v1734, 64
    %v1737 = vpop.permute.xlu0 %1736
    %v1739 = vadd.f32 %v1722, %v1737
    %v1740 = vtanh.pop %v1739
    %v1741 = vsub.f32 1.0, %v1729
    %1743 = vrot.lane.b32.xlu0 %v1740, 96
    %v1744 = vpop.permute.xlu0 %1743
    %v1746 = vmul.f32 %v1741, %v1744
    %v1747 = vmul.f32 %v1729, %v1644
    %v1748 = vadd.f32 %v1746, %v1747
    %1750 = vrot.lane.b32.xlu0 %v1748, 96
    %v1751 = vpop.permute.xlu0 %1750
    %1753 = vst.msk [vmem:[%s747] sm:$0xff] %vm219, %v1751
    %v1754 = vsel %vm219, %v1751, 0
    %1756 = vmatprep.subr.mxu0 0.0
    %1757 = vmatpush1.msra.mxu0 0.0
    %1758 = vmatprep.subr.mxu0 0.0
    %1759 = vmatpush1.msra.mxu0 0.0
    %1760 = vmatprep.subr.mxu0 0.0
    %1761 = vmatpush1.msra.mxu0 0.0
    %1762 = vmatprep.subr.mxu0 0.0
    %1763 = vmatpush1.msra.mxu0 0.0
    %1764 = vmatprep.subr.mxu0 0.0
    %1765 = vmatpush1.msra.mxu0 0.0
    %1766 = vmatprep.subr.mxu0 0.0
    %1767 = vmatpush1.msra.mxu0 0.0
    %1768 = vmatprep.subr.mxu0 0.0
    %1769 = vmatpush1.msra.mxu0 0.0
    %1770 = vmatprep.subr.mxu0 0.0
    %1771 = vmatpush1.msra.mxu0 0.0
    %1772 = vmatprep.subr.mxu0 0.0
    %1773 = vmatpush1.msra.mxu0 0.0
    %1774 = vmatprep.subr.mxu0 0.0
    %1775 = vmatpush1.msra.mxu0 0.0
    %1776 = vmatprep.subr.mxu0 0.0
    %1777 = vmatpush1.msra.mxu0 0.0
    %1778 = vmatprep.subr.mxu0 0.0
    %1779 = vmatpush1.msra.mxu0 0.0
    %1780 = vmatprep.subr.mxu0 0.0
    %1781 = vmatpush1.msra.mxu0 %v1228
    %1782 = vmatprep.subr.mxu0 0.0
    %1783 = vmatpush1.msra.mxu0 %v1227
    %1784 = vmatprep.subr.mxu0 0.0
    %1785 = vmatpush1.msra.mxu0 %v1226
    %1786 = vmatprep.subr.mxu0 0.0
    %1787 = vmatpush1.msra.mxu0 %v1225
    %1788 = vmatprep.subr.mxu0 0.0
    %1789 = vmatpush2.msra.mxu0 0.0
    %1790 = vmatprep.subr.mxu0 0.0
    %1791 = vmatpush2.msra.mxu0 0.0
    %1792 = vmatprep.subr.mxu0 0.0
    %1793 = vmatpush2.msra.mxu0 0.0
    %1794 = vmatprep.subr.mxu0 0.0
    %1795 = vmatpush2.msra.mxu0 0.0
    %1796 = vmatprep.subr.mxu0 0.0
    %1797 = vmatpush2.msra.mxu0 0.0
    %1798 = vmatprep.subr.mxu0 0.0
    %1799 = vmatpush2.msra.mxu0 0.0
    %1800 = vmatprep.subr.mxu0 0.0
    %1801 = vmatpush2.msra.mxu0 0.0
    %1802 = vmatprep.subr.mxu0 0.0
    %1803 = vmatpush2.msra.mxu0 0.0
    %1804 = vmatprep.subr.mxu0 0.0
    %1805 = vmatpush2.msra.mxu0 0.0
    %1806 = vmatprep.subr.mxu0 0.0
    %1807 = vmatpush2.msra.mxu0 0.0
    %1808 = vmatprep.subr.mxu0 0.0
    %1809 = vmatpush2.msra.mxu0 0.0
    %1810 = vmatprep.subr.mxu0 0.0
    %1811 = vmatpush2.msra.mxu0 0.0
    %1812 = vmatprep.subr.mxu0 0.0
    %1813 = vmatpush2.msra.mxu0 0.0
    %1814 = vmatprep.subr.mxu0 0.0
    %1815 = vmatpush2.msra.mxu0 0.0
    %1816 = vmatprep.subr.mxu0 0.0
    %1817 = vmatpush2.msra.mxu0 0.0
    %1818 = vmatprep.subr.mxu0 0.0
    %1819 = vmatpush2.msra.mxu0 0.0
    %1820 = vmatprep.mubr.f32.mxu0 0.0
    %1821 = vmatmul.mubr.f32.gmra.mxu0 %v1754
    %v1822 = vpop.f32.mrf.mxu0
    %v1823 = vadd.f32 %v1234, %v1822
    %v1824 = vpop.f32.mrf.mxu0
    %1825 = vdwg.mxu0
    %v1826 = vld [vmem:[%s821] sm:$0xff]
    %v1827 = vadd.f32 %v1826, %v1823
    %v1828 = vxor.u32 %v1827, 2147483648
    %v1829 = vmul.f32 %v1828, 1.442695
    %v1830 = vpow.pop %v1829
    %v1831 = vadd.f32 %v1830, 1.0
    %v1832 = vrcp.pop %v1831
    %v1833 = vmul.f32 1.0, %v1832
    %1835 = vrot.lane.b32.xlu0 %v1823, 64
    %v1836 = vpop.permute.xlu0 %1835
    %v1838 = vmul.f32 %v1833, %v1836
    %1840 = vrot.lane.b32.xlu0 %v1838, 64
    %v1841 = vpop.permute.xlu0 %1840
    %v1843 = vadd.f32 %v1826, %v1841
    %v1844 = vtanh.pop %v1843
    %v1845 = vsub.f32 1.0, %v1833
    %1847 = vrot.lane.b32.xlu0 %v1844, 96
    %v1848 = vpop.permute.xlu0 %1847
    %v1850 = vmul.f32 %v1845, %v1848
    %v1851 = vmul.f32 %v1833, %v1748
    %v1852 = vadd.f32 %v1850, %v1851
    %1854 = vrot.lane.b32.xlu0 %v1852, 96
    %v1855 = vpop.permute.xlu0 %1854
    %1857 = vst.msk [vmem:[%s853] sm:$0xff] %vm219, %v1855
    %v1858 = vsel %vm219, %v1855, 0
    %1860 = vmatprep.subr.mxu0 0.0
    %1861 = vmatpush1.msra.mxu0 0.0
    %1862 = vmatprep.subr.mxu0 0.0
    %1863 = vmatpush1.msra.mxu0 0.0
    %1864 = vmatprep.subr.mxu0 0.0
    %1865 = vmatpush1.msra.mxu0 0.0
    %1866 = vmatprep.subr.mxu0 0.0
    %1867 = vmatpush1.msra.mxu0 0.0
    %1868 = vmatprep.subr.mxu0 0.0
    %1869 = vmatpush1.msra.mxu0 0.0
    %1870 = vmatprep.subr.mxu0 0.0
    %1871 = vmatpush1.msra.mxu0 0.0
    %1872 = vmatprep.subr.mxu0 0.0
    %1873 = vmatpush1.msra.mxu0 0.0
    %1874 = vmatprep.subr.mxu0 0.0
    %1875 = vmatpush1.msra.mxu0 0.0
    %1876 = vmatprep.subr.mxu0 0.0
    %1877 = vmatpush1.msra.mxu0 0.0
    %1878 = vmatprep.subr.mxu0 0.0
    %1879 = vmatpush1.msra.mxu0 0.0
    %1880 = vmatprep.subr.mxu0 0.0
    %1881 = vmatpush1.msra.mxu0 0.0
    %1882 = vmatprep.subr.mxu0 0.0
    %1883 = vmatpush1.msra.mxu0 0.0
    %1884 = vmatprep.subr.mxu0 0.0
    %1885 = vmatpush1.msra.mxu0 %v1228
    %1886 = vmatprep.subr.mxu0 0.0
    %1887 = vmatpush1.msra.mxu0 %v1227
    %1888 = vmatprep.subr.mxu0 0.0
    %1889 = vmatpush1.msra.mxu0 %v1226
    %1890 = vmatprep.subr.mxu0 0.0
    %1891 = vmatpush1.msra.mxu0 %v1225
    %1892 = vmatprep.subr.mxu0 0.0
    %1893 = vmatpush2.msra.mxu0 0.0
    %1894 = vmatprep.subr.mxu0 0.0
    %1895 = vmatpush2.msra.mxu0 0.0
    %1896 = vmatprep.subr.mxu0 0.0
    %1897 = vmatpush2.msra.mxu0 0.0
    %1898 = vmatprep.subr.mxu0 0.0
    %1899 = vmatpush2.msra.mxu0 0.0
    %1900 = vmatprep.subr.mxu0 0.0
    %1901 = vmatpush2.msra.mxu0 0.0
    %1902 = vmatprep.subr.mxu0 0.0
    %1903 = vmatpush2.msra.mxu0 0.0
    %1904 = vmatprep.subr.mxu0 0.0
    %1905 = vmatpush2.msra.mxu0 0.0
    %1906 = vmatprep.subr.mxu0 0.0
    %1907 = vmatpush2.msra.mxu0 0.0
    %1908 = vmatprep.subr.mxu0 0.0
    %1909 = vmatpush2.msra.mxu0 0.0
    %1910 = vmatprep.subr.mxu0 0.0
    %1911 = vmatpush2.msra.mxu0 0.0
    %1912 = vmatprep.subr.mxu0 0.0
    %1913 = vmatpush2.msra.mxu0 0.0
    %1914 = vmatprep.subr.mxu0 0.0
    %1915 = vmatpush2.msra.mxu0 0.0
    %1916 = vmatprep.subr.mxu0 0.0
    %1917 = vmatpush2.msra.mxu0 0.0
    %1918 = vmatprep.subr.mxu0 0.0
    %1919 = vmatpush2.msra.mxu0 0.0
    %1920 = vmatprep.subr.mxu0 0.0
    %1921 = vmatpush2.msra.mxu0 0.0
    %1922 = vmatprep.subr.mxu0 0.0
    %1923 = vmatpush2.msra.mxu0 0.0
    %1924 = vmatprep.mubr.f32.mxu0 0.0
    %1925 = vmatmul.mubr.f32.gmra.mxu0 %v1858
    %v1926 = vpop.f32.mrf.mxu0
    %v1927 = vadd.f32 %v1234, %v1926
    %v1928 = vpop.f32.mrf.mxu0
    %1929 = vdwg.mxu0
    %v1930 = vld [vmem:[%s927] sm:$0xff]
    %v1931 = vadd.f32 %v1930, %v1927
    %v1932 = vxor.u32 %v1931, 2147483648
    %v1933 = vmul.f32 %v1932, 1.442695
    %v1934 = vpow.pop %v1933
    %v1935 = vadd.f32 %v1934, 1.0
    %v1936 = vrcp.pop %v1935
    %v1937 = vmul.f32 1.0, %v1936
    %1939 = vrot.lane.b32.xlu0 %v1927, 64
    %v1940 = vpop.permute.xlu0 %1939
    %v1942 = vmul.f32 %v1937, %v1940
    %1944 = vrot.lane.b32.xlu0 %v1942, 64
    %v1945 = vpop.permute.xlu0 %1944
    %v1947 = vadd.f32 %v1930, %v1945
    %v1948 = vtanh.pop %v1947
    %v1949 = vsub.f32 1.0, %v1937
    %1951 = vrot.lane.b32.xlu0 %v1948, 96
    %v1952 = vpop.permute.xlu0 %1951
    %v1954 = vmul.f32 %v1949, %v1952
    %v1955 = vmul.f32 %v1937, %v1852
    %v1956 = vadd.f32 %v1954, %v1955
    %1958 = vrot.lane.b32.xlu0 %v1956, 96
    %v1959 = vpop.permute.xlu0 %1958
    %1961 = vst.msk [vmem:[%s959] sm:$0xff] %vm219, %v1959
    %v1962 = vsel %vm219, %v1959, 0
    %1964 = vmatprep.subr.mxu0 0.0
    %1965 = vmatpush1.msra.mxu0 0.0
    %1966 = vmatprep.subr.mxu0 0.0
    %1967 = vmatpush1.msra.mxu0 0.0
    %1968 = vmatprep.subr.mxu0 0.0
    %1969 = vmatpush1.msra.mxu0 0.0
    %1970 = vmatprep.subr.mxu0 0.0
    %1971 = vmatpush1.msra.mxu0 0.0
    %1972 = vmatprep.subr.mxu0 0.0
    %1973 = vmatpush1.msra.mxu0 0.0
    %1974 = vmatprep.subr.mxu0 0.0
    %1975 = vmatpush1.msra.mxu0 0.0
    %1976 = vmatprep.subr.mxu0 0.0
    %1977 = vmatpush1.msra.mxu0 0.0
    %1978 = vmatprep.subr.mxu0 0.0
    %1979 = vmatpush1.msra.mxu0 0.0
    %1980 = vmatprep.subr.mxu0 0.0
    %1981 = vmatpush1.msra.mxu0 0.0
    %1982 = vmatprep.subr.mxu0 0.0
    %1983 = vmatpush1.msra.mxu0 0.0
    %1984 = vmatprep.subr.mxu0 0.0
    %1985 = vmatpush1.msra.mxu0 0.0
    %1986 = vmatprep.subr.mxu0 0.0
    %1987 = vmatpush1.msra.mxu0 0.0
    %1988 = vmatprep.subr.mxu0 0.0
    %1989 = vmatpush1.msra.mxu0 %v1228
    %1990 = vmatprep.subr.mxu0 0.0
    %1991 = vmatpush1.msra.mxu0 %v1227
    %1992 = vmatprep.subr.mxu0 0.0
    %1993 = vmatpush1.msra.mxu0 %v1226
    %1994 = vmatprep.subr.mxu0 0.0
    %1995 = vmatpush1.msra.mxu0 %v1225
    %1996 = vmatprep.subr.mxu0 0.0
    %1997 = vmatpush2.msra.mxu0 0.0
    %1998 = vmatprep.subr.mxu0 0.0
    %1999 = vmatpush2.msra.mxu0 0.0
    %2000 = vmatprep.subr.mxu0 0.0
    %2001 = vmatpush2.msra.mxu0 0.0
    %2002 = vmatprep.subr.mxu0 0.0
    %2003 = vmatpush2.msra.mxu0 0.0
    %2004 = vmatprep.subr.mxu0 0.0
    %2005 = vmatpush2.msra.mxu0 0.0
    %2006 = vmatprep.subr.mxu0 0.0
    %2007 = vmatpush2.msra.mxu0 0.0
    %2008 = vmatprep.subr.mxu0 0.0
    %2009 = vmatpush2.msra.mxu0 0.0
    %2010 = vmatprep.subr.mxu0 0.0
    %2011 = vmatpush2.msra.mxu0 0.0
    %2012 = vmatprep.subr.mxu0 0.0
    %2013 = vmatpush2.msra.mxu0 0.0
    %2014 = vmatprep.subr.mxu0 0.0
    %2015 = vmatpush2.msra.mxu0 0.0
    %2016 = vmatprep.subr.mxu0 0.0
    %2017 = vmatpush2.msra.mxu0 0.0
    %2018 = vmatprep.subr.mxu0 0.0
    %2019 = vmatpush2.msra.mxu0 0.0
    %2020 = vmatprep.subr.mxu0 0.0
    %2021 = vmatpush2.msra.mxu0 0.0
    %2022 = vmatprep.subr.mxu0 0.0
    %2023 = vmatpush2.msra.mxu0 0.0
    %2024 = vmatprep.subr.mxu0 0.0
    %2025 = vmatpush2.msra.mxu0 0.0
    %2026 = vmatprep.subr.mxu0 0.0
    %2027 = vmatpush2.msra.mxu0 0.0
    %2028 = vmatprep.mubr.f32.mxu0 0.0
    %2029 = vmatmul.mubr.f32.gmra.mxu0 %v1962
    %v2030 = vpop.f32.mrf.mxu0
    %v2031 = vadd.f32 %v1234, %v2030
    %v2032 = vpop.f32.mrf.mxu0
    %2033 = vdwg.mxu0
    %v2034 = vld [vmem:[%s1033] sm:$0xff]
    %v2035 = vadd.f32 %v2034, %v2031
    %v2036 = vxor.u32 %v2035, 2147483648
    %v2037 = vmul.f32 %v2036, 1.442695
    %v2038 = vpow.pop %v2037
    %v2039 = vadd.f32 %v2038, 1.0
    %v2040 = vrcp.pop %v2039
    %v2041 = vmul.f32 1.0, %v2040
    %2043 = vrot.lane.b32.xlu0 %v2031, 64
    %v2044 = vpop.permute.xlu0 %2043
    %v2046 = vmul.f32 %v2041, %v2044
    %2048 = vrot.lane.b32.xlu0 %v2046, 64
    %v2049 = vpop.permute.xlu0 %2048
    %v2051 = vadd.f32 %v2034, %v2049
    %v2052 = vtanh.pop %v2051
    %v2053 = vsub.f32 1.0, %v2041
    %2055 = vrot.lane.b32.xlu0 %v2052, 96
    %v2056 = vpop.permute.xlu0 %2055
    %v2058 = vmul.f32 %v2053, %v2056
    %v2059 = vmul.f32 %v2041, %v1956
    %v2060 = vadd.f32 %v2058, %v2059
    %2062 = vrot.lane.b32.xlu0 %v2060, 96
    %v2063 = vpop.permute.xlu0 %2062
    %2065 = vst.msk [vmem:[%s1065] sm:$0xff] %vm219, %v2063
    %s2066 = scalar_lea.vmem [#allocation6], 2
    %2067 = vst.msk [vmem:[%s2066] sm:$0x3] %vm1067, %v2063
    %v2068 = vld [vmem:[%s9] sm:$0xff]
    %v2069 = vld [vmem:[%s9 + $0x8] sm:$0xff]
    %v2070 = vld [vmem:[%s9 + $0x10] sm:$0xff]
    %v2071 = vld [vmem:[%s9 + $0x18] sm:$0xff]
    %v2072 = vld [vmem:[%s10] sm:$0x1]
    %v2073 = vld [vmem:[%s11] sm:$0xff]
    %v2074 = vld [vmem:[%s11 + $0x8] sm:$0xff]
    %v2075 = vld [vmem:[%s12] sm:$0x1]
    %v2076 = vld [vmem:[#allocation3] ss:$8 sm:$0xf]
    %v2077 = vld [vmem:[#allocation3] ss:$8 sm:$0xf0]
    %v2078 = vor.u32 %v2076, %v2077
    %2079 = vst.msk [vmem:[#allocation4] sm:$0xff] %vm219, %v2078
    %v2081 = vlaneseq
    %v2082 = vshrl.u32 %v2081, 7
    %v2083 = vsub.s32 0, %v2082
    %v2084 = vrot.slane %v2072, %v2083
    %v2087 = vsel %vm219, %v2078, 0
    %2089 = vmatprep.subr.mxu0 0.0
    %2090 = vmatpush1.msra.mxu0 0.0
    %2091 = vmatprep.subr.mxu0 0.0
    %2092 = vmatpush1.msra.mxu0 0.0
    %2093 = vmatprep.subr.mxu0 0.0
    %2094 = vmatpush1.msra.mxu0 0.0
    %2095 = vmatprep.subr.mxu0 0.0
    %2096 = vmatpush1.msra.mxu0 0.0
    %2097 = vmatprep.subr.mxu0 0.0
    %2098 = vmatpush1.msra.mxu0 0.0
    %2099 = vmatprep.subr.mxu0 0.0
    %2100 = vmatpush1.msra.mxu0 0.0
    %2101 = vmatprep.subr.mxu0 0.0
    %2102 = vmatpush1.msra.mxu0 0.0
    %2103 = vmatprep.subr.mxu0 0.0
    %2104 = vmatpush1.msra.mxu0 0.0
    %2105 = vmatprep.subr.mxu0 0.0
    %2106 = vmatpush1.msra.mxu0 0.0
    %2107 = vmatprep.subr.mxu0 0.0
    %2108 = vmatpush1.msra.mxu0 0.0
    %2109 = vmatprep.subr.mxu0 0.0
    %2110 = vmatpush1.msra.mxu0 0.0
    %2111 = vmatprep.subr.mxu0 0.0
    %2112 = vmatpush1.msra.mxu0 0.0
    %2113 = vmatprep.subr.mxu0 0.0
    %2114 = vmatpush1.msra.mxu0 %v2071
    %2115 = vmatprep.subr.mxu0 0.0
    %2116 = vmatpush1.msra.mxu0 %v2070
    %2117 = vmatprep.subr.mxu0 0.0
    %2118 = vmatpush1.msra.mxu0 %v2069
    %2119 = vmatprep.subr.mxu0 0.0
    %2120 = vmatpush1.msra.mxu0 %v2068
    %2121 = vmatprep.subr.mxu0 0.0
    %2122 = vmatpush2.msra.mxu0 0.0
    %2123 = vmatprep.subr.mxu0 0.0
    %2124 = vmatpush2.msra.mxu0 0.0
    %2125 = vmatprep.subr.mxu0 0.0
    %2126 = vmatpush2.msra.mxu0 0.0
    %2127 = vmatprep.subr.mxu0 0.0
    %2128 = vmatpush2.msra.mxu0 0.0
    %2129 = vmatprep.subr.mxu0 0.0
    %2130 = vmatpush2.msra.mxu0 0.0
    %2131 = vmatprep.subr.mxu0 0.0
    %2132 = vmatpush2.msra.mxu0 0.0
    %2133 = vmatprep.subr.mxu0 0.0
    %2134 = vmatpush2.msra.mxu0 0.0
    %2135 = vmatprep.subr.mxu0 0.0
    %2136 = vmatpush2.msra.mxu0 0.0
    %2137 = vmatprep.subr.mxu0 0.0
    %2138 = vmatpush2.msra.mxu0 0.0
    %2139 = vmatprep.subr.mxu0 0.0
    %2140 = vmatpush2.msra.mxu0 0.0
    %2141 = vmatprep.subr.mxu0 0.0
    %2142 = vmatpush2.msra.mxu0 0.0
    %2143 = vmatprep.subr.mxu0 0.0
    %2144 = vmatpush2.msra.mxu0 0.0
    %2145 = vmatprep.subr.mxu0 0.0
    %2146 = vmatpush2.msra.mxu0 0.0
    %2147 = vmatprep.subr.mxu0 0.0
    %2148 = vmatpush2.msra.mxu0 0.0
    %2149 = vmatprep.subr.mxu0 0.0
    %2150 = vmatpush2.msra.mxu0 0.0
    %2151 = vmatprep.subr.mxu0 0.0
    %2152 = vmatpush2.msra.mxu0 0.0
    %2153 = vmatprep.mubr.f32.mxu0 0.0
    %2154 = vmatmul.mubr.f32.gmra.mxu0 %v2087
    %v2155 = vpop.f32.mrf.mxu0
    %v2156 = vadd.f32 %v2084, %v2155
    %v2157 = vpop.f32.mrf.mxu0
    %2158 = vdwg.mxu0
    %v2159 = vmax.f32 %v2156, 0.0
    %v2160 = vmul.f32 %v2159, 256.0
    %v2161 = vround.ne.pseudo %v2160
    %v2162 = vmax.f32 %v2161, -32768.0
    %v2163 = vmin.f32 %v2162, 32767.0
    %v2164 = vrcp.pop 256.0
    %v2165 = vmul.f32 %v2163, %v2164
    %v2167 = vlaneseq
    %v2168 = vshrl.u32 %v2167, 7
    %v2169 = vsub.s32 0, %v2168
    %v2170 = vrot.slane %v2075, %v2169
    %vm2172 = vcmask 130048
    %v2174 = vsel %vm2172, %v2165, 0
    %2176 = vmatprep.subr.mxu0 0.0
    %2177 = vmatpush1.msra.mxu0 0.0
    %2178 = vmatprep.subr.mxu0 0.0
    %2179 = vmatpush1.msra.mxu0 0.0
    %2180 = vmatprep.subr.mxu0 0.0
    %2181 = vmatpush1.msra.mxu0 0.0
    %2182 = vmatprep.subr.mxu0 0.0
    %2183 = vmatpush1.msra.mxu0 0.0
    %2184 = vmatprep.subr.mxu0 0.0
    %2185 = vmatpush1.msra.mxu0 0.0
    %2186 = vmatprep.subr.mxu0 0.0
    %2187 = vmatpush1.msra.mxu0 0.0
    %2188 = vmatprep.subr.mxu0 0.0
    %2189 = vmatpush1.msra.mxu0 0.0
    %2190 = vmatprep.subr.mxu0 0.0
    %2191 = vmatpush1.msra.mxu0 0.0
    %2192 = vmatprep.subr.mxu0 0.0
    %2193 = vmatpush1.msra.mxu0 0.0
    %2194 = vmatprep.subr.mxu0 0.0
    %2195 = vmatpush1.msra.mxu0 0.0
    %2196 = vmatprep.subr.mxu0 0.0
    %2197 = vmatpush1.msra.mxu0 0.0
    %2198 = vmatprep.subr.mxu0 0.0
    %2199 = vmatpush1.msra.mxu0 0.0
    %2200 = vmatprep.subr.mxu0 0.0
    %2201 = vmatpush1.msra.mxu0 0.0
    %2202 = vmatprep.subr.mxu0 0.0
    %2203 = vmatpush1.msra.mxu0 0.0
    %2204 = vmatprep.subr.mxu0 0.0
    %2205 = vmatpush1.msra.mxu0 %v2074
    %2206 = vmatprep.subr.mxu0 0.0
    %2207 = vmatpush1.msra.mxu0 %v2073
    %2208 = vmatprep.subr.mxu0 0.0
    %2209 = vmatpush2.msra.mxu0 0.0
    %2210 = vmatprep.subr.mxu0 0.0
    %2211 = vmatpush2.msra.mxu0 0.0
    %2212 = vmatprep.subr.mxu0 0.0
    %2213 = vmatpush2.msra.mxu0 0.0
    %2214 = vmatprep.subr.mxu0 0.0
    %2215 = vmatpush2.msra.mxu0 0.0
    %2216 = vmatprep.subr.mxu0 0.0
    %2217 = vmatpush2.msra.mxu0 0.0
    %2218 = vmatprep.subr.mxu0 0.0
    %2219 = vmatpush2.msra.mxu0 0.0
    %2220 = vmatprep.subr.mxu0 0.0
    %2221 = vmatpush2.msra.mxu0 0.0
    %2222 = vmatprep.subr.mxu0 0.0
    %2223 = vmatpush2.msra.mxu0 0.0
    %2224 = vmatprep.subr.mxu0 0.0
    %2225 = vmatpush2.msra.mxu0 0.0
    %2226 = vmatprep.subr.mxu0 0.0
    %2227 = vmatpush2.msra.mxu0 0.0
    %2228 = vmatprep.subr.mxu0 0.0
    %2229 = vmatpush2.msra.mxu0 0.0
    %2230 = vmatprep.subr.mxu0 0.0
    %2231 = vmatpush2.msra.mxu0 0.0
    %2232 = vmatprep.subr.mxu0 0.0
    %2233 = vmatpush2.msra.mxu0 0.0
    %2234 = vmatprep.subr.mxu0 0.0
    %2235 = vmatpush2.msra.mxu0 0.0
    %2236 = vmatprep.subr.mxu0 0.0
    %2237 = vmatpush2.msra.mxu0 0.0
    %2238 = vmatprep.subr.mxu0 0.0
    %2239 = vmatpush2.msra.mxu0 0.0
    %2240 = vmatprep.mubr.f32.mxu0 0.0
    %2241 = vmatmul.mubr.f32.gmra.mxu0 %v2174
    %v2242 = vpop.f32.mrf.mxu0
    %v2243 = vadd.f32 %v2170, %v2242
    %v2244 = vpop.f32.mrf.mxu0
    %2245 = vdwg.mxu0
    %v2246 = vmul.f32 %v2243, 256.0
    %v2247 = vround.ne.pseudo %v2246
    %v2248 = vmax.f32 %v2247, -32768.0
    %v2249 = vmin.f32 %v2248, 32767.0
    %v2250 = vmul.f32 %v2249, %v2164
    %vm2251 = vcmask 39936
    %2252 = vst.msk [vmem:[%s14] sm:$0xff] %vm2251, %v2250
    %s2253 = scalar_lea.vmem [#allocation3], 1
    %v2254 = vld [vmem:[%s2253] ss:$8 sm:$0xf]
    %v2255 = vld [vmem:[%s2253] ss:$8 sm:$0xf0]
    %v2256 = vor.u32 %v2254, %v2255
    %s2257 = scalar_lea.vmem [#allocation4], 8
    %2258 = vst.msk [vmem:[%s2257] sm:$0xff] %vm219, %v2256
    %v2260 = vsel %vm219, %v2256, 0
    %2262 = vmatprep.subr.mxu0 0.0
    %2263 = vmatpush1.msra.mxu0 0.0
    %2264 = vmatprep.subr.mxu0 0.0
    %2265 = vmatpush1.msra.mxu0 0.0
    %2266 = vmatprep.subr.mxu0 0.0
    %2267 = vmatpush1.msra.mxu0 0.0
    %2268 = vmatprep.subr.mxu0 0.0
    %2269 = vmatpush1.msra.mxu0 0.0
    %2270 = vmatprep.subr.mxu0 0.0
    %2271 = vmatpush1.msra.mxu0 0.0
    %2272 = vmatprep.subr.mxu0 0.0
    %2273 = vmatpush1.msra.mxu0 0.0
    %2274 = vmatprep.subr.mxu0 0.0
    %2275 = vmatpush1.msra.mxu0 0.0
    %2276 = vmatprep.subr.mxu0 0.0
    %2277 = vmatpush1.msra.mxu0 0.0
    %2278 = vmatprep.subr.mxu0 0.0
    %2279 = vmatpush1.msra.mxu0 0.0
    %2280 = vmatprep.subr.mxu0 0.0
    %2281 = vmatpush1.msra.mxu0 0.0
    %2282 = vmatprep.subr.mxu0 0.0
    %2283 = vmatpush1.msra.mxu0 0.0
    %2284 = vmatprep.subr.mxu0 0.0
    %2285 = vmatpush1.msra.mxu0 0.0
    %2286 = vmatprep.subr.mxu0 0.0
    %2287 = vmatpush1.msra.mxu0 %v2071
    %2288 = vmatprep.subr.mxu0 0.0
    %2289 = vmatpush1.msra.mxu0 %v2070
    %2290 = vmatprep.subr.mxu0 0.0
    %2291 = vmatpush1.msra.mxu0 %v2069
    %2292 = vmatprep.subr.mxu0 0.0
    %2293 = vmatpush1.msra.mxu0 %v2068
    %2294 = vmatprep.subr.mxu0 0.0
    %2295 = vmatpush2.msra.mxu0 0.0
    %2296 = vmatprep.subr.mxu0 0.0
    %2297 = vmatpush2.msra.mxu0 0.0
    %2298 = vmatprep.subr.mxu0 0.0
    %2299 = vmatpush2.msra.mxu0 0.0
    %2300 = vmatprep.subr.mxu0 0.0
    %2301 = vmatpush2.msra.mxu0 0.0
    %2302 = vmatprep.subr.mxu0 0.0
    %2303 = vmatpush2.msra.mxu0 0.0
    %2304 = vmatprep.subr.mxu0 0.0
    %2305 = vmatpush2.msra.mxu0 0.0
    %2306 = vmatprep.subr.mxu0 0.0
    %2307 = vmatpush2.msra.mxu0 0.0
    %2308 = vmatprep.subr.mxu0 0.0
    %2309 = vmatpush2.msra.mxu0 0.0
    %2310 = vmatprep.subr.mxu0 0.0
    %2311 = vmatpush2.msra.mxu0 0.0
    %2312 = vmatprep.subr.mxu0 0.0
    %2313 = vmatpush2.msra.mxu0 0.0
    %2314 = vmatprep.subr.mxu0 0.0
    %2315 = vmatpush2.msra.mxu0 0.0
    %2316 = vmatprep.subr.mxu0 0.0
    %2317 = vmatpush2.msra.mxu0 0.0
    %2318 = vmatprep.subr.mxu0 0.0
    %2319 = vmatpush2.msra.mxu0 0.0
    %2320 = vmatprep.subr.mxu0 0.0
    %2321 = vmatpush2.msra.mxu0 0.0
    %2322 = vmatprep.subr.mxu0 0.0
    %2323 = vmatpush2.msra.mxu0 0.0
    %2324 = vmatprep.subr.mxu0 0.0
    %2325 = vmatpush2.msra.mxu0 0.0
    %2326 = vmatprep.mubr.f32.mxu0 0.0
    %2327 = vmatmul.mubr.f32.gmra.mxu0 %v2260
    %v2328 = vpop.f32.mrf.mxu0
    %v2329 = vadd.f32 %v2084, %v2328
    %v2330 = vpop.f32.mrf.mxu0
    %2331 = vdwg.mxu0
    %v2332 = vmax.f32 %v2329, 0.0
    %v2333 = vmul.f32 %v2332, 256.0
    %v2334 = vround.ne.pseudo %v2333
    %v2335 = vmax.f32 %v2334, -32768.0
    %v2336 = vmin.f32 %v2335, 32767.0
    %v2337 = vmul.f32 %v2336, %v2164
    %v2339 = vsel %vm2172, %v2337, 0
    %2341 = vmatprep.subr.mxu0 0.0
    %2342 = vmatpush1.msra.mxu0 0.0
    %2343 = vmatprep.subr.mxu0 0.0
    %2344 = vmatpush1.msra.mxu0 0.0
    %2345 = vmatprep.subr.mxu0 0.0
    %2346 = vmatpush1.msra.mxu0 0.0
    %2347 = vmatprep.subr.mxu0 0.0
    %2348 = vmatpush1.msra.mxu0 0.0
    %2349 = vmatprep.subr.mxu0 0.0
    %2350 = vmatpush1.msra.mxu0 0.0
    %2351 = vmatprep.subr.mxu0 0.0
    %2352 = vmatpush1.msra.mxu0 0.0
    %2353 = vmatprep.subr.mxu0 0.0
    %2354 = vmatpush1.msra.mxu0 0.0
    %2355 = vmatprep.subr.mxu0 0.0
    %2356 = vmatpush1.msra.mxu0 0.0
    %2357 = vmatprep.subr.mxu0 0.0
    %2358 = vmatpush1.msra.mxu0 0.0
    %2359 = vmatprep.subr.mxu0 0.0
    %2360 = vmatpush1.msra.mxu0 0.0
    %2361 = vmatprep.subr.mxu0 0.0
    %2362 = vmatpush1.msra.mxu0 0.0
    %2363 = vmatprep.subr.mxu0 0.0
    %2364 = vmatpush1.msra.mxu0 0.0
    %2365 = vmatprep.subr.mxu0 0.0
    %2366 = vmatpush1.msra.mxu0 0.0
    %2367 = vmatprep.subr.mxu0 0.0
    %2368 = vmatpush1.msra.mxu0 0.0
    %2369 = vmatprep.subr.mxu0 0.0
    %2370 = vmatpush1.msra.mxu0 %v2074
    %2371 = vmatprep.subr.mxu0 0.0
    %2372 = vmatpush1.msra.mxu0 %v2073
    %2373 = vmatprep.subr.mxu0 0.0
    %2374 = vmatpush2.msra.mxu0 0.0
    %2375 = vmatprep.subr.mxu0 0.0
    %2376 = vmatpush2.msra.mxu0 0.0
    %2377 = vmatprep.subr.mxu0 0.0
    %2378 = vmatpush2.msra.mxu0 0.0
    %2379 = vmatprep.subr.mxu0 0.0
    %2380 = vmatpush2.msra.mxu0 0.0
    %2381 = vmatprep.subr.mxu0 0.0
    %2382 = vmatpush2.msra.mxu0 0.0
    %2383 = vmatprep.subr.mxu0 0.0
    %2384 = vmatpush2.msra.mxu0 0.0
    %2385 = vmatprep.subr.mxu0 0.0
    %2386 = vmatpush2.msra.mxu0 0.0
    %2387 = vmatprep.subr.mxu0 0.0
    %2388 = vmatpush2.msra.mxu0 0.0
    %2389 = vmatprep.subr.mxu0 0.0
    %2390 = vmatpush2.msra.mxu0 0.0
    %2391 = vmatprep.subr.mxu0 0.0
    %2392 = vmatpush2.msra.mxu0 0.0
    %2393 = vmatprep.subr.mxu0 0.0
    %2394 = vmatpush2.msra.mxu0 0.0
    %2395 = vmatprep.subr.mxu0 0.0
    %2396 = vmatpush2.msra.mxu0 0.0
    %2397 = vmatprep.subr.mxu0 0.0
    %2398 = vmatpush2.msra.mxu0 0.0
    %2399 = vmatprep.subr.mxu0 0.0
    %2400 = vmatpush2.msra.mxu0 0.0
    %2401 = vmatprep.subr.mxu0 0.0
    %2402 = vmatpush2.msra.mxu0 0.0
    %2403 = vmatprep.subr.mxu0 0.0
    %2404 = vmatpush2.msra.mxu0 0.0
    %2405 = vmatprep.mubr.f32.mxu0 0.0
    %2406 = vmatmul.mubr.f32.gmra.mxu0 %v2339
    %v2407 = vpop.f32.mrf.mxu0
    %v2408 = vadd.f32 %v2170, %v2407
    %v2409 = vpop.f32.mrf.mxu0
    %2410 = vdwg.mxu0
    %v2411 = vmul.f32 %v2408, 256.0
    %v2412 = vround.ne.pseudo %v2411
    %v2413 = vmax.f32 %v2412, -32768.0
    %v2414 = vmin.f32 %v2413, 32767.0
    %v2415 = vmul.f32 %v2414, %v2164
    %s2416 = scalar_lea.vmem %s14, 8
    %2417 = vst.msk [vmem:[%s2416] sm:$0xff] %vm2251, %v2415
    // Predicated region
    $region54: #{model_forward.1} parent=1 // pred_check
      _
    $region55: #{model_forward.1} parent=1 // pred_check_branch
      %2419 = sbr.rel (0) target = $region57
    $region56: #{model_forward.1} parent=1 // pred_region
      %s2421 = ssub.s32 256, 256
      %2422 = vsyncadd [#allocation5], %s2421
      %s2423 = sshll.u32 [#allocation4], 4
      %s2424 = int_to_ptr.vmem [resolvable:$true] %s2423
      %2429 = dma.vmem_to_hbm [thread:$0]  %s2424, 256, %s13, [#allocation5], 128, 128, 8
    $region57: #{model_forward.1} parent=1 // pred_fallthru
      _
    // Predicated region
    $region58: #{model_forward.1} parent=1 // pred_check
      _
    $region59: #{model_forward.1} parent=1 // pred_check_branch
      %2431 = sbr.rel (0) target = $region61
    $region60: #{model_forward.1} parent=1 // pred_region
      _
    $region61: #{model_forward.1} parent=1 // pred_fallthru
      _
    // Predicated region
    $region62: #{model_forward.1} parent=1 // pred_check
      _
    $region63: #{model_forward.1} parent=1 // pred_check_branch
      %2433 = sbr.rel (0) target = $region65
    $region64: #{model_forward.1} parent=1 // pred_region
      %s2435 = ssub.s32 64, 64
      %2436 = vsyncadd [#allocation7], %s2435
      %s2437 = sshll.u32 [#allocation6], 4
      %s2438 = int_to_ptr.vmem [resolvable:$true] %s2437
      %2443 = dma.vmem_to_hbm [thread:$0]  %s2438, 64, %s15, [#allocation7], 32, 32, 2
    $region65: #{model_forward.1} parent=1 // pred_fallthru
      _
    // Predicated region
    $region66: #{model_forward.1} parent=1 // pred_check
      _
    $region67: #{model_forward.1} parent=1 // pred_check_branch
      %2445 = sbr.rel (0) target = $region69
    $region68: #{model_forward.1} parent=1 // pred_region
      %2446 = dma.done [#allocation5], 256
    $region69: #{model_forward.1} parent=1 // pred_fallthru
      _
    // Predicated region
    $region70: #{model_forward.1} parent=1 // pred_check
      _
    $region71: #{model_forward.1} parent=1 // pred_check_branch
      %2448 = sbr.rel (0) target = $region73
    $region72: #{model_forward.1} parent=1 // pred_region
      _
    $region73: #{model_forward.1} parent=1 // pred_fallthru
      _
    // Predicated region
    $region74: #{model_forward.1} parent=1 // pred_check
      _
    $region75: #{model_forward.1} parent=1 // pred_check_branch
      %2450 = sbr.rel (0) target = $region77
    $region76: #{model_forward.1} parent=1 // pred_region
      %2451 = dma.done [#allocation7], 64
    $region77: #{model_forward.1} parent=1 // pred_fallthru
      _
    %2452 = vsyncpa [#allocation5], 1
    %2453 = vsyncpa [#allocation7], 1

</llo_original>
